<compile_context>
chip_gen: v7x
topology: tpu7x:2x2x1
jax: 0.10.0
libtpu: 0.0.40
codegen_flags: <defaults>
</compile_context>

<pallas_src>
import math

import numpy as np
import jax
import jax.numpy as jnp
from jax.experimental import pallas as pl
from jax.experimental.pallas import tpu as pltpu

_INV_SQRT2 = 0.7071067811865476


def _gelu(x):
    # exact (erf-based) GELU, matching torch.nn.GELU(approximate='none')
    return 0.5 * x * (1.0 + jax.lax.erf(x * _INV_SQRT2))


# ---------------------------------------------------------------------------
# Constant gather / selection matrices (numpy, built once at param-prep time)
# ---------------------------------------------------------------------------
def _conv_gather_mats(batch, h_in, w_in, k=3, stride=2, pad=1):
    """G[k] has shape (B*Ho*Wo, B*Hi*Wi); row-gathers the input pixel feeding kernel
    tap k = kh*3+kw of every output position.  All-zero rows encode the zero padding."""
    h_out = (h_in + 2 * pad - k) // stride + 1
    w_out = (w_in + 2 * pad - k) // stride + 1
    g = np.zeros((k * k, batch * h_out * w_out, batch * h_in * w_in), np.float32)
    for b in range(batch):
        for oh in range(h_out):
            for ow in range(w_out):
                mo = (b * h_out + oh) * w_out + ow
                for kh in range(k):
                    for kw in range(k):
                        ih = stride * oh - pad + kh
                        iw = stride * ow - pad + kw
                        if 0 <= ih < h_in and 0 <= iw < w_in:
                            g[kh * k + kw, mo, (b * h_in + ih) * w_in + iw] = 1.0
    return jnp.asarray(g)


def _flatten_select_mats(batch, n_spatial):
    """Sel[s] has shape (B, B*S); picks activation row (b, s) — used to emulate the
    PyTorch NCHW flatten (channel-major) in front of the fc layer."""
    sel = np.zeros((n_spatial, batch, batch * n_spatial), np.float32)
    for s in range(n_spatial):
        for b in range(batch):
            sel[s, b, b * n_spatial + s] = 1.0
    return jnp.asarray(sel)


# ---------------------------------------------------------------------------
# Fused Pallas kernel: both encoders + projection, one grid step per encoder
# ---------------------------------------------------------------------------
def _vicreg_fused_kernel(p1_ref, g2_ref, g3_ref, sel_ref,
                         c1w_ref, c1b_ref, c2w_ref, c2b_ref, c3w_ref, c3b_ref,
                         fcw_ref, fcb_ref,
                         pj1w_ref, pj1b_ref, pj2w_ref, pj2b_ref,
                         out_ref):
    i = pl.program_id(0)          # 0 = learned encoder (+ projection), 1 = target

    def mm(a, b):
        return jnp.dot(a, b, preferred_element_type=jnp.float32)

    # conv1: GEMM on the pre-staged im2col patches of the shared input
    a = _gelu(mm(p1_ref[...], c1w_ref[0]) + c1b_ref[0])          # (B*Ho1*Wo1, 32)

    # conv2 / conv3:  sum_k (G_k @ A) @ W_k + b, then GELU
    def conv(a_prev, g_ref, w_ref, b_ref):
        acc = None
        for k in range(g_ref.shape[0]):
            t = mm(mm(g_ref[k], a_prev), w_ref[0, k])
            acc = t if acc is None else acc + t
        return _gelu(acc + b_ref[0])

    a = conv(a, g2_ref, c2w_ref, c2b_ref)                        # (B*Ho2*Wo2, 64)
    a = conv(a, g3_ref, c3w_ref, c3b_ref)                        # (B*Ho3*Wo3, 128)

    # fc over the NCHW flatten:  z = sum_s (Sel_s @ A) @ fcW_s + b
    z = None
    for s in range(sel_ref.shape[0]):
        t = mm(mm(sel_ref[s], a), fcw_ref[0, s])
        z = t if z is None else z + t
    z = z + fcb_ref[0]                                           # (B, feature_dim)

    @pl.when(i == 0)
    def _():
        # learned_projection = Sequential(GELU, Linear, GELU, Linear)
        h = mm(_gelu(z), pj1w_ref[...]) + pj1b_ref[...]
        h = mm(_gelu(h), pj2w_ref[...]) + pj2b_ref[...]
        out_ref[0] = h.astype(out_ref.dtype)

    @pl.when(i != 0)
    def _():
        out_ref[0] = z.astype(out_ref.dtype)


def _shared_spec(shape):
    zeros = (0,) * len(shape)
    return pl.BlockSpec(tuple(shape), lambda i, _z=zeros: _z)


def _stacked_spec(shape):
    tail = (0,) * (len(shape) - 1)
    return pl.BlockSpec((1,) + tuple(shape[1:]), lambda i, _t=tail: (i,) + _t)


def vicreg_forward(state, prep):
    """VICRegModelAtari.forward: returns (predicted_code, target_code)."""
    B = state.shape[0]
    fd = prep["pj1_w"].shape[1]

    # preprocess: state[:, 0, :, :].unsqueeze(1); conv1 im2col staged once, shared by
    # both encoders (the only XLA glue on the hot path).
    x = state[:, :1, :, :]
    patches = jax.lax.conv_general_dilated_patches(
        x, (3, 3), (2, 2), ((1, 1), (1, 1)),
        precision=jax.lax.Precision.HIGHEST)                     # (B, 9, H/2, W/2)
    _, kk, ho, wo = patches.shape
    p1 = patches.transpose(0, 2, 3, 1).reshape(B * ho * wo, kk)  # (B*Ho1*Wo1, 9)

    st = prep["stacked"]
    shared = (p1, prep["g2"], prep["g3"], prep["sel"])
    stacked = (st["c1_w"], st["c1_b"], st["c2_w"], st["c2_b"],
               st["c3_w"], st["c3_b"], st["fc_w"], st["fc_b"])
    proj = (prep["pj1_w"], prep["pj1_b"], prep["pj2_w"], prep["pj2_b"])

    out = pl.pallas_call(
        _vicreg_fused_kernel,
        out_shape=jax.ShapeDtypeStruct((2, B, fd), jnp.float32),
        grid_spec=pltpu.PrefetchScalarGridSpec(
            num_scalar_prefetch=0,
            grid=(2,),
            in_specs=[_shared_spec(a.shape) for a in shared]
                     + [_stacked_spec(a.shape) for a in stacked]
                     + [_shared_spec(a.shape) for a in proj],
            out_specs=pl.BlockSpec((1, B, fd), lambda i: (i, 0, 0)),
        ),
        compiler_params=pltpu.CompilerParams(
            dimension_semantics=("parallel",)),
    )(*shared, *stacked, *proj)

    return out[0], out[1]


# ---------------------------------------------------------------------------
# Parameter init (torch-like layout) + host-side repack into kernel layout
# ---------------------------------------------------------------------------
def _init_conv(key, cout, cin, k, gain):
    fan_in = cin * k * k
    w = jax.random.normal(key, (cout, cin, k, k), jnp.float32) * (gain / math.sqrt(fan_in))
    return w, jnp.zeros((cout,), jnp.float32)


def _init_linear(key, fan_in, fan_out, gain):
    w = jax.random.normal(key, (fan_in, fan_out), jnp.float32) * (gain / math.sqrt(fan_in))
    return w, jnp.zeros((fan_out,), jnp.float32)


def init_encoder(key, H, W, feature_dim, gain):
    k1, k2, k3, k4 = jax.random.split(key, 4)
    c1_w, c1_b = _init_conv(k1, 32, 1, 3, gain)
    c2_w, c2_b = _init_conv(k2, 64, 32, 3, gain)
    c3_w, c3_b = _init_conv(k3, 128, 64, 3, gain)
    fc_w, fc_b = _init_linear(k4, 128 * (H // 8) * (W // 8), feature_dim, gain)
    return dict(c1_w=c1_w, c1_b=c1_b, c2_w=c2_w, c2_b=c2_b,
                c3_w=c3_w, c3_b=c3_b, fc_w=fc_w, fc_b=fc_b)


def init_projection(key, feature_dim, gain):
    k1, k2 = jax.random.split(key)
    p1_w, p1_b = _init_linear(k1, feature_dim, feature_dim, gain)
    p2_w, p2_b = _init_linear(k2, feature_dim, feature_dim, gain)
    return dict(p1_w=p1_w, p1_b=p1_b, p2_w=p2_w, p2_b=p2_b)


def _prep_conv_w(w):                       # (Cout, Cin, 3, 3) -> (9, Cin, Cout)
    cout, cin, kh, kw = w.shape
    return jnp.transpose(w, (2, 3, 1, 0)).reshape(kh * kw, cin, cout)


def _prep_encoder(p, n_spatial):
    return dict(
        c1_w=p["c1_w"].reshape(p["c1_w"].shape[0], -1).T,                     # (9, 32)
        c1_b=p["c1_b"].reshape(1, -1),
        c2_w=_prep_conv_w(p["c2_w"]), c2_b=p["c2_b"].reshape(1, -1),
        c3_w=_prep_conv_w(p["c3_w"]), c3_b=p["c3_b"].reshape(1, -1),
        fc_w=jnp.stack([p["fc_w"][s::n_spatial] for s in range(n_spatial)]),  # (S, 128, fd)
        fc_b=p["fc_b"].reshape(1, -1),
    )


def prepare_params(params, batch, H, W):
    """Repack torch-layout params into the fused-kernel layout and build the constant
    gather matrices.  Done once, host-side (depends on batch via the gather rows)."""
    n_sp3 = (H // 8) * (W // 8)
    learned = _prep_encoder(params["learned"], n_sp3)
    target = _prep_encoder(params["target"], n_sp3)
    stacked = {k: jnp.stack([learned[k], target[k]]) for k in learned}   # leading 2 = grid axis
    pj = params["proj"]
    return dict(
        stacked=stacked,
        g2=_conv_gather_mats(batch, H // 2, W // 2),
        g3=_conv_gather_mats(batch, H // 4, W // 4),
        sel=_flatten_select_mats(batch, n_sp3),
        pj1_w=pj["p1_w"], pj1_b=pj["p1_b"].reshape(1, -1),
        pj2_w=pj["p2_w"], pj2_b=pj["p2_b"].reshape(1, -1),
    )


# ---------------------------------------------------------------------------
# Pure-XLA fp32 reference of the same (reconstructed) module, for validation
# ---------------------------------------------------------------------------
def _ref_encoder(x, p):
    h = x
    for wn, bn in (("c1_w", "c1_b"), ("c2_w", "c2_b"), ("c3_w", "c3_b")):
        h = jax.lax.conv_general_dilated(
            h, p[wn], (2, 2), ((1, 1), (1, 1)),
            dimension_numbers=("NCHW", "OIHW", "NCHW"),
            precision=jax.lax.Precision.HIGHEST)
        h = _gelu(h + p[bn][None, :, None, None])
    flat = h.reshape(h.shape[0], -1)
    return jnp.dot(flat, p["fc_w"], precision=jax.lax.Precision.HIGHEST) + p["fc_b"]


def _ref_forward(state, params):
    x = state[:, :1, :, :]
    z = _ref_encoder(x, params["learned"])
    pj = params["proj"]
    h = jnp.dot(_gelu(z), pj["p1_w"], precision=jax.lax.Precision.HIGHEST) + pj["p1_b"]
    pred = jnp.dot(_gelu(h), pj["p2_w"], precision=jax.lax.Precision.HIGHEST) + pj["p2_b"]
    targ = _ref_encoder(x, params["target"])
    return pred, targ


if __name__ == "__main__":
    B, C, H, W = 2, 4, 16, 16          # config.input_shape = (4, 16, 16)
    feature_dim = 64                   # config.feature_dim

    key = jax.random.PRNGKey(0)
    k_state, k_learn, k_targ, k_proj = jax.random.split(key, 4)

    state = jax.random.normal(k_state, (B, C, H, W), jnp.float32)
    params = {
        "learned": init_encoder(k_learn, H, W, feature_dim, gain=math.sqrt(2.0)),
        "target": init_encoder(k_targ, H, W, feature_dim, gain=math.sqrt(2.0)),
        "proj": init_projection(k_proj, feature_dim, gain=math.sqrt(2.0)),
    }
    prep = prepare_params(params, B, H, W)

    fwd = jax.jit(vicreg_forward)
    predicted_code, target_code = fwd(state, prep)
    jax.block_until_ready((predicted_code, target_code))

    assert predicted_code.shape == (B, feature_dim), predicted_code.shape
    assert target_code.shape == (B, feature_dim), target_code.shape
    assert predicted_code.dtype == jnp.float32 and target_code.dtype == jnp.float32
    assert bool(jnp.all(jnp.isfinite(predicted_code)))
    assert bool(jnp.all(jnp.isfinite(target_code)))

    # Validate against a pure-XLA fp32 reference of the same reconstructed module.
    ref_pred, ref_targ = _ref_forward(state, params)
    err = max(float(jnp.max(jnp.abs(predicted_code - ref_pred))),
              float(jnp.max(jnp.abs(target_code - ref_targ))))
    assert err < 5e-2, f"mismatch vs reference: max abs err {err}"

    print("KERNEL_OK")
</pallas_src>

<mosaic_0001>
module attributes {stable_mosaic.version = 11 : i64} {
  func.func @_vicreg_fused_kernel(%arg0: i32, %arg1: memref<128x9xf32, #tpu.memory_space<vmem>>, %arg2: memref<9x32x128xf32, #tpu.memory_space<vmem>>, %arg3: memref<9x8x32xf32, #tpu.memory_space<vmem>>, %arg4: memref<4x2x8xf32, #tpu.memory_space<vmem>>, %arg5: memref<1x9x32xf32, #tpu.memory_space<vmem>>, %arg6: memref<1x1x32xf32, #tpu.memory_space<vmem>>, %arg7: memref<1x9x32x64xf32, #tpu.memory_space<vmem>>, %arg8: memref<1x1x64xf32, #tpu.memory_space<vmem>>, %arg9: memref<1x9x64x128xf32, #tpu.memory_space<vmem>>, %arg10: memref<1x1x128xf32, #tpu.memory_space<vmem>>, %arg11: memref<1x4x128x64xf32, #tpu.memory_space<vmem>>, %arg12: memref<1x1x64xf32, #tpu.memory_space<vmem>>, %arg13: memref<64x64xf32, #tpu.memory_space<vmem>>, %arg14: memref<1x64xf32, #tpu.memory_space<vmem>>, %arg15: memref<64x64xf32, #tpu.memory_space<vmem>>, %arg16: memref<1x64xf32, #tpu.memory_space<vmem>>, %arg17: memref<1x2x64xf32, #tpu.memory_space<vmem>>) attributes {dimension_semantics = [#tpu.dimension_semantics<parallel>], iteration_bounds = array<i64: 2>, scalar_prefetch = 0 : i64, scratch_operands = 0 : i64, tpu.core_type = #tpu.core_type<tc>, window_params = [{pipeline_mode = #tpu.pipeline_mode<synchronous>, transform_indices = @transform_0, window_bounds = array<i64: 128, 9>}, {pipeline_mode = #tpu.pipeline_mode<synchronous>, transform_indices = @transform_1, window_bounds = array<i64: 9, 32, 128>}, {pipeline_mode = #tpu.pipeline_mode<synchronous>, transform_indices = @transform_2, window_bounds = array<i64: 9, 8, 32>}, {pipeline_mode = #tpu.pipeline_mode<synchronous>, transform_indices = @transform_3, window_bounds = array<i64: 4, 2, 8>}, {transform_indices = @transform_4, window_bounds = array<i64: 1, 9, 32>}, {transform_indices = @transform_5, window_bounds = array<i64: 1, 1, 32>}, {transform_indices = @transform_6, window_bounds = array<i64: 1, 9, 32, 64>}, {transform_indices = @transform_7, window_bounds = array<i64: 1, 1, 64>}, {transform_indices = @transform_8, window_bounds = array<i64: 1, 9, 64, 128>}, {transform_indices = @transform_9, window_bounds = array<i64: 1, 1, 128>}, {transform_indices = @transform_10, window_bounds = array<i64: 1, 4, 128, 64>}, {transform_indices = @transform_11, window_bounds = array<i64: 1, 1, 64>}, {pipeline_mode = #tpu.pipeline_mode<synchronous>, transform_indices = @transform_12, window_bounds = array<i64: 64, 64>}, {pipeline_mode = #tpu.pipeline_mode<synchronous>, transform_indices = @transform_13, window_bounds = array<i64: 1, 64>}, {pipeline_mode = #tpu.pipeline_mode<synchronous>, transform_indices = @transform_14, window_bounds = array<i64: 64, 64>}, {pipeline_mode = #tpu.pipeline_mode<synchronous>, transform_indices = @transform_15, window_bounds = array<i64: 1, 64>}, {transform_indices = @transform_16, window_bounds = array<i64: 1, 2, 64>}]} {
    %c0 = arith.constant 0 : index
    %c0_0 = arith.constant 0 : index
    %0 = vector.load %arg1[%c0, %c0_0] : memref<128x9xf32, #tpu.memory_space<vmem>>, vector<128x9xf32>
    %c0_1 = arith.constant 0 : index
    %c0_2 = arith.constant 0 : index
    %c0_3 = arith.constant 0 : index
    %1 = vector.load %arg5[%c0_1, %c0_2, %c0_3] : memref<1x9x32xf32, #tpu.memory_space<vmem>>, vector<1x9x32xf32>
    %2 = vector.shape_cast %1 : vector<1x9x32xf32> to vector<9x32xf32>
    %cst = arith.constant dense<0.000000e+00> : vector<128x32xf32>
    %3 = tpu.matmul %0, %2, %cst {dimension_numbers = #tpu.dot_dimension_numbers<[1], [0], [0], [1], [0, 0, 1, 1], [], []>} : vector<128x9xf32>, vector<9x32xf32>, vector<128x32xf32> -> vector<128x32xf32>
    %c0_4 = arith.constant 0 : index
    %c0_5 = arith.constant 0 : index
    %c0_6 = arith.constant 0 : index
    %4 = vector.load %arg6[%c0_4, %c0_5, %c0_6] : memref<1x1x32xf32, #tpu.memory_space<vmem>>, vector<1x1x32xf32>
    %5 = vector.shape_cast %4 : vector<1x1x32xf32> to vector<1x32xf32>
    %6 = vector.broadcast %5 : vector<1x32xf32> to vector<128x32xf32>
    %7 = arith.addf %3, %6 : vector<128x32xf32>
    %cst_7 = arith.constant 5.000000e-01 : f32
    %8 = vector.broadcast %cst_7 : f32 to vector<128x32xf32>
    %9 = arith.mulf %8, %7 : vector<128x32xf32>
    %cst_8 = arith.constant 0.707106769 : f32
    %10 = vector.broadcast %cst_8 : f32 to vector<128x32xf32>
    %11 = arith.mulf %7, %10 : vector<128x32xf32>
    %12 = math.erf %11 : vector<128x32xf32>
    %cst_9 = arith.constant 1.000000e+00 : f32
    %13 = vector.broadcast %cst_9 : f32 to vector<128x32xf32>
    %14 = arith.addf %13, %12 : vector<128x32xf32>
    %15 = arith.mulf %9, %14 : vector<128x32xf32>
    %c0_10 = arith.constant 0 : index
    %c0_11 = arith.constant 0 : index
    %c0_12 = arith.constant 0 : index
    %16 = vector.load %arg2[%c0_10, %c0_11, %c0_12] : memref<9x32x128xf32, #tpu.memory_space<vmem>>, vector<1x32x128xf32>
    %17 = vector.shape_cast %16 : vector<1x32x128xf32> to vector<32x128xf32>
    %cst_13 = arith.constant dense<0.000000e+00> : vector<32x32xf32>
    %18 = tpu.matmul %17, %15, %cst_13 {dimension_numbers = #tpu.dot_dimension_numbers<[1], [0], [0], [1], [0, 0, 1, 1], [], []>} : vector<32x128xf32>, vector<128x32xf32>, vector<32x32xf32> -> vector<32x32xf32>
    %c0_14 = arith.constant 0 : index
    %c0_15 = arith.constant 0 : index
    %c0_16 = arith.constant 0 : index
    %c0_17 = arith.constant 0 : index
    %19 = vector.load %arg7[%c0_14, %c0_15, %c0_16, %c0_17] : memref<1x9x32x64xf32, #tpu.memory_space<vmem>>, vector<1x1x32x64xf32>
    %20 = vector.shape_cast %19 : vector<1x1x32x64xf32> to vector<32x64xf32>
    %cst_18 = arith.constant dense<0.000000e+00> : vector<32x64xf32>
    %21 = tpu.matmul %18, %20, %cst_18 {dimension_numbers = #tpu.dot_dimension_numbers<[1], [0], [0], [1], [0, 0, 1, 1], [], []>} : vector<32x32xf32>, vector<32x64xf32>, vector<32x64xf32> -> vector<32x64xf32>
    %c1 = arith.constant 1 : index
    %c0_19 = arith.constant 0 : index
    %c0_20 = arith.constant 0 : index
    %22 = vector.load %arg2[%c1, %c0_19, %c0_20] : memref<9x32x128xf32, #tpu.memory_space<vmem>>, vector<1x32x128xf32>
    %23 = vector.shape_cast %22 : vector<1x32x128xf32> to vector<32x128xf32>
    %cst_21 = arith.constant dense<0.000000e+00> : vector<32x32xf32>
    %24 = tpu.matmul %23, %15, %cst_21 {dimension_numbers = #tpu.dot_dimension_numbers<[1], [0], [0], [1], [0, 0, 1, 1], [], []>} : vector<32x128xf32>, vector<128x32xf32>, vector<32x32xf32> -> vector<32x32xf32>
    %c0_22 = arith.constant 0 : index
    %c1_23 = arith.constant 1 : index
    %c0_24 = arith.constant 0 : index
    %c0_25 = arith.constant 0 : index
    %25 = vector.load %arg7[%c0_22, %c1_23, %c0_24, %c0_25] : memref<1x9x32x64xf32, #tpu.memory_space<vmem>>, vector<1x1x32x64xf32>
    %26 = vector.shape_cast %25 : vector<1x1x32x64xf32> to vector<32x64xf32>
    %cst_26 = arith.constant dense<0.000000e+00> : vector<32x64xf32>
    %27 = tpu.matmul %24, %26, %cst_26 {dimension_numbers = #tpu.dot_dimension_numbers<[1], [0], [0], [1], [0, 0, 1, 1], [], []>} : vector<32x32xf32>, vector<32x64xf32>, vector<32x64xf32> -> vector<32x64xf32>
    %28 = arith.addf %21, %27 : vector<32x64xf32>
    %c2 = arith.constant 2 : index
    %c0_27 = arith.constant 0 : index
    %c0_28 = arith.constant 0 : index
    %29 = vector.load %arg2[%c2, %c0_27, %c0_28] : memref<9x32x128xf32, #tpu.memory_space<vmem>>, vector<1x32x128xf32>
    %30 = vector.shape_cast %29 : vector<1x32x128xf32> to vector<32x128xf32>
    %cst_29 = arith.constant dense<0.000000e+00> : vector<32x32xf32>
    %31 = tpu.matmul %30, %15, %cst_29 {dimension_numbers = #tpu.dot_dimension_numbers<[1], [0], [0], [1], [0, 0, 1, 1], [], []>} : vector<32x128xf32>, vector<128x32xf32>, vector<32x32xf32> -> vector<32x32xf32>
    %c0_30 = arith.constant 0 : index
    %c2_31 = arith.constant 2 : index
    %c0_32 = arith.constant 0 : index
    %c0_33 = arith.constant 0 : index
    %32 = vector.load %arg7[%c0_30, %c2_31, %c0_32, %c0_33] : memref<1x9x32x64xf32, #tpu.memory_space<vmem>>, vector<1x1x32x64xf32>
    %33 = vector.shape_cast %32 : vector<1x1x32x64xf32> to vector<32x64xf32>
    %cst_34 = arith.constant dense<0.000000e+00> : vector<32x64xf32>
    %34 = tpu.matmul %31, %33, %cst_34 {dimension_numbers = #tpu.dot_dimension_numbers<[1], [0], [0], [1], [0, 0, 1, 1], [], []>} : vector<32x32xf32>, vector<32x64xf32>, vector<32x64xf32> -> vector<32x64xf32>
    %35 = arith.addf %28, %34 : vector<32x64xf32>
    %c3 = arith.constant 3 : index
    %c0_35 = arith.constant 0 : index
    %c0_36 = arith.constant 0 : index
    %36 = vector.load %arg2[%c3, %c0_35, %c0_36] : memref<9x32x128xf32, #tpu.memory_space<vmem>>, vector<1x32x128xf32>
    %37 = vector.shape_cast %36 : vector<1x32x128xf32> to vector<32x128xf32>
    %cst_37 = arith.constant dense<0.000000e+00> : vector<32x32xf32>
    %38 = tpu.matmul %37, %15, %cst_37 {dimension_numbers = #tpu.dot_dimension_numbers<[1], [0], [0], [1], [0, 0, 1, 1], [], []>} : vector<32x128xf32>, vector<128x32xf32>, vector<32x32xf32> -> vector<32x32xf32>
    %c0_38 = arith.constant 0 : index
    %c3_39 = arith.constant 3 : index
    %c0_40 = arith.constant 0 : index
    %c0_41 = arith.constant 0 : index
    %39 = vector.load %arg7[%c0_38, %c3_39, %c0_40, %c0_41] : memref<1x9x32x64xf32, #tpu.memory_space<vmem>>, vector<1x1x32x64xf32>
    %40 = vector.shape_cast %39 : vector<1x1x32x64xf32> to vector<32x64xf32>
    %cst_42 = arith.constant dense<0.000000e+00> : vector<32x64xf32>
    %41 = tpu.matmul %38, %40, %cst_42 {dimension_numbers = #tpu.dot_dimension_numbers<[1], [0], [0], [1], [0, 0, 1, 1], [], []>} : vector<32x32xf32>, vector<32x64xf32>, vector<32x64xf32> -> vector<32x64xf32>
    %42 = arith.addf %35, %41 : vector<32x64xf32>
    %c4 = arith.constant 4 : index
    %c0_43 = arith.constant 0 : index
    %c0_44 = arith.constant 0 : index
    %43 = vector.load %arg2[%c4, %c0_43, %c0_44] : memref<9x32x128xf32, #tpu.memory_space<vmem>>, vector<1x32x128xf32>
    %44 = vector.shape_cast %43 : vector<1x32x128xf32> to vector<32x128xf32>
    %cst_45 = arith.constant dense<0.000000e+00> : vector<32x32xf32>
    %45 = tpu.matmul %44, %15, %cst_45 {dimension_numbers = #tpu.dot_dimension_numbers<[1], [0], [0], [1], [0, 0, 1, 1], [], []>} : vector<32x128xf32>, vector<128x32xf32>, vector<32x32xf32> -> vector<32x32xf32>
    %c0_46 = arith.constant 0 : index
    %c4_47 = arith.constant 4 : index
    %c0_48 = arith.constant 0 : index
    %c0_49 = arith.constant 0 : index
    %46 = vector.load %arg7[%c0_46, %c4_47, %c0_48, %c0_49] : memref<1x9x32x64xf32, #tpu.memory_space<vmem>>, vector<1x1x32x64xf32>
    %47 = vector.shape_cast %46 : vector<1x1x32x64xf32> to vector<32x64xf32>
    %cst_50 = arith.constant dense<0.000000e+00> : vector<32x64xf32>
    %48 = tpu.matmul %45, %47, %cst_50 {dimension_numbers = #tpu.dot_dimension_numbers<[1], [0], [0], [1], [0, 0, 1, 1], [], []>} : vector<32x32xf32>, vector<32x64xf32>, vector<32x64xf32> -> vector<32x64xf32>
    %49 = arith.addf %42, %48 : vector<32x64xf32>
    %c5 = arith.constant 5 : index
    %c0_51 = arith.constant 0 : index
    %c0_52 = arith.constant 0 : index
    %50 = vector.load %arg2[%c5, %c0_51, %c0_52] : memref<9x32x128xf32, #tpu.memory_space<vmem>>, vector<1x32x128xf32>
    %51 = vector.shape_cast %50 : vector<1x32x128xf32> to vector<32x128xf32>
    %cst_53 = arith.constant dense<0.000000e+00> : vector<32x32xf32>
    %52 = tpu.matmul %51, %15, %cst_53 {dimension_numbers = #tpu.dot_dimension_numbers<[1], [0], [0], [1], [0, 0, 1, 1], [], []>} : vector<32x128xf32>, vector<128x32xf32>, vector<32x32xf32> -> vector<32x32xf32>
    %c0_54 = arith.constant 0 : index
    %c5_55 = arith.constant 5 : index
    %c0_56 = arith.constant 0 : index
    %c0_57 = arith.constant 0 : index
    %53 = vector.load %arg7[%c0_54, %c5_55, %c0_56, %c0_57] : memref<1x9x32x64xf32, #tpu.memory_space<vmem>>, vector<1x1x32x64xf32>
    %54 = vector.shape_cast %53 : vector<1x1x32x64xf32> to vector<32x64xf32>
    %cst_58 = arith.constant dense<0.000000e+00> : vector<32x64xf32>
    %55 = tpu.matmul %52, %54, %cst_58 {dimension_numbers = #tpu.dot_dimension_numbers<[1], [0], [0], [1], [0, 0, 1, 1], [], []>} : vector<32x32xf32>, vector<32x64xf32>, vector<32x64xf32> -> vector<32x64xf32>
    %56 = arith.addf %49, %55 : vector<32x64xf32>
    %c6 = arith.constant 6 : index
    %c0_59 = arith.constant 0 : index
    %c0_60 = arith.constant 0 : index
    %57 = vector.load %arg2[%c6, %c0_59, %c0_60] : memref<9x32x128xf32, #tpu.memory_space<vmem>>, vector<1x32x128xf32>
    %58 = vector.shape_cast %57 : vector<1x32x128xf32> to vector<32x128xf32>
    %cst_61 = arith.constant dense<0.000000e+00> : vector<32x32xf32>
    %59 = tpu.matmul %58, %15, %cst_61 {dimension_numbers = #tpu.dot_dimension_numbers<[1], [0], [0], [1], [0, 0, 1, 1], [], []>} : vector<32x128xf32>, vector<128x32xf32>, vector<32x32xf32> -> vector<32x32xf32>
    %c0_62 = arith.constant 0 : index
    %c6_63 = arith.constant 6 : index
    %c0_64 = arith.constant 0 : index
    %c0_65 = arith.constant 0 : index
    %60 = vector.load %arg7[%c0_62, %c6_63, %c0_64, %c0_65] : memref<1x9x32x64xf32, #tpu.memory_space<vmem>>, vector<1x1x32x64xf32>
    %61 = vector.shape_cast %60 : vector<1x1x32x64xf32> to vector<32x64xf32>
    %cst_66 = arith.constant dense<0.000000e+00> : vector<32x64xf32>
    %62 = tpu.matmul %59, %61, %cst_66 {dimension_numbers = #tpu.dot_dimension_numbers<[1], [0], [0], [1], [0, 0, 1, 1], [], []>} : vector<32x32xf32>, vector<32x64xf32>, vector<32x64xf32> -> vector<32x64xf32>
    %63 = arith.addf %56, %62 : vector<32x64xf32>
    %c7 = arith.constant 7 : index
    %c0_67 = arith.constant 0 : index
    %c0_68 = arith.constant 0 : index
    %64 = vector.load %arg2[%c7, %c0_67, %c0_68] : memref<9x32x128xf32, #tpu.memory_space<vmem>>, vector<1x32x128xf32>
    %65 = vector.shape_cast %64 : vector<1x32x128xf32> to vector<32x128xf32>
    %cst_69 = arith.constant dense<0.000000e+00> : vector<32x32xf32>
    %66 = tpu.matmul %65, %15, %cst_69 {dimension_numbers = #tpu.dot_dimension_numbers<[1], [0], [0], [1], [0, 0, 1, 1], [], []>} : vector<32x128xf32>, vector<128x32xf32>, vector<32x32xf32> -> vector<32x32xf32>
    %c0_70 = arith.constant 0 : index
    %c7_71 = arith.constant 7 : index
    %c0_72 = arith.constant 0 : index
    %c0_73 = arith.constant 0 : index
    %67 = vector.load %arg7[%c0_70, %c7_71, %c0_72, %c0_73] : memref<1x9x32x64xf32, #tpu.memory_space<vmem>>, vector<1x1x32x64xf32>
    %68 = vector.shape_cast %67 : vector<1x1x32x64xf32> to vector<32x64xf32>
    %cst_74 = arith.constant dense<0.000000e+00> : vector<32x64xf32>
    %69 = tpu.matmul %66, %68, %cst_74 {dimension_numbers = #tpu.dot_dimension_numbers<[1], [0], [0], [1], [0, 0, 1, 1], [], []>} : vector<32x32xf32>, vector<32x64xf32>, vector<32x64xf32> -> vector<32x64xf32>
    %70 = arith.addf %63, %69 : vector<32x64xf32>
    %c8 = arith.constant 8 : index
    %c0_75 = arith.constant 0 : index
    %c0_76 = arith.constant 0 : index
    %71 = vector.load %arg2[%c8, %c0_75, %c0_76] : memref<9x32x128xf32, #tpu.memory_space<vmem>>, vector<1x32x128xf32>
    %72 = vector.shape_cast %71 : vector<1x32x128xf32> to vector<32x128xf32>
    %cst_77 = arith.constant dense<0.000000e+00> : vector<32x32xf32>
    %73 = tpu.matmul %72, %15, %cst_77 {dimension_numbers = #tpu.dot_dimension_numbers<[1], [0], [0], [1], [0, 0, 1, 1], [], []>} : vector<32x128xf32>, vector<128x32xf32>, vector<32x32xf32> -> vector<32x32xf32>
    %c0_78 = arith.constant 0 : index
    %c8_79 = arith.constant 8 : index
    %c0_80 = arith.constant 0 : index
    %c0_81 = arith.constant 0 : index
    %74 = vector.load %arg7[%c0_78, %c8_79, %c0_80, %c0_81] : memref<1x9x32x64xf32, #tpu.memory_space<vmem>>, vector<1x1x32x64xf32>
    %75 = vector.shape_cast %74 : vector<1x1x32x64xf32> to vector<32x64xf32>
    %cst_82 = arith.constant dense<0.000000e+00> : vector<32x64xf32>
    %76 = tpu.matmul %73, %75, %cst_82 {dimension_numbers = #tpu.dot_dimension_numbers<[1], [0], [0], [1], [0, 0, 1, 1], [], []>} : vector<32x32xf32>, vector<32x64xf32>, vector<32x64xf32> -> vector<32x64xf32>
    %77 = arith.addf %70, %76 : vector<32x64xf32>
    %c0_83 = arith.constant 0 : index
    %c0_84 = arith.constant 0 : index
    %c0_85 = arith.constant 0 : index
    %78 = vector.load %arg8[%c0_83, %c0_84, %c0_85] : memref<1x1x64xf32, #tpu.memory_space<vmem>>, vector<1x1x64xf32>
    %79 = vector.shape_cast %78 : vector<1x1x64xf32> to vector<1x64xf32>
    %80 = vector.broadcast %79 : vector<1x64xf32> to vector<32x64xf32>
    %81 = arith.addf %77, %80 : vector<32x64xf32>
    %cst_86 = arith.constant 5.000000e-01 : f32
    %82 = vector.broadcast %cst_86 : f32 to vector<32x64xf32>
    %83 = arith.mulf %82, %81 : vector<32x64xf32>
    %cst_87 = arith.constant 0.707106769 : f32
    %84 = vector.broadcast %cst_87 : f32 to vector<32x64xf32>
    %85 = arith.mulf %81, %84 : vector<32x64xf32>
    %86 = math.erf %85 : vector<32x64xf32>
    %cst_88 = arith.constant 1.000000e+00 : f32
    %87 = vector.broadcast %cst_88 : f32 to vector<32x64xf32>
    %88 = arith.addf %87, %86 : vector<32x64xf32>
    %89 = arith.mulf %83, %88 : vector<32x64xf32>
    %c0_89 = arith.constant 0 : index
    %c0_90 = arith.constant 0 : index
    %c0_91 = arith.constant 0 : index
    %90 = vector.load %arg3[%c0_89, %c0_90, %c0_91] : memref<9x8x32xf32, #tpu.memory_space<vmem>>, vector<1x8x32xf32>
    %91 = vector.shape_cast %90 : vector<1x8x32xf32> to vector<8x32xf32>
    %cst_92 = arith.constant dense<0.000000e+00> : vector<8x64xf32>
    %92 = tpu.matmul %91, %89, %cst_92 {dimension_numbers = #tpu.dot_dimension_numbers<[1], [0], [0], [1], [0, 0, 1, 1], [], []>} : vector<8x32xf32>, vector<32x64xf32>, vector<8x64xf32> -> vector<8x64xf32>
    %c0_93 = arith.constant 0 : index
    %c0_94 = arith.constant 0 : index
    %c0_95 = arith.constant 0 : index
    %c0_96 = arith.constant 0 : index
    %93 = vector.load %arg9[%c0_93, %c0_94, %c0_95, %c0_96] : memref<1x9x64x128xf32, #tpu.memory_space<vmem>>, vector<1x1x64x128xf32>
    %94 = vector.shape_cast %93 : vector<1x1x64x128xf32> to vector<64x128xf32>
    %cst_97 = arith.constant dense<0.000000e+00> : vector<8x128xf32>
    %95 = tpu.matmul %92, %94, %cst_97 {dimension_numbers = #tpu.dot_dimension_numbers<[1], [0], [0], [1], [0, 0, 1, 1], [], []>} : vector<8x64xf32>, vector<64x128xf32>, vector<8x128xf32> -> vector<8x128xf32>
    %c1_98 = arith.constant 1 : index
    %c0_99 = arith.constant 0 : index
    %c0_100 = arith.constant 0 : index
    %96 = vector.load %arg3[%c1_98, %c0_99, %c0_100] : memref<9x8x32xf32, #tpu.memory_space<vmem>>, vector<1x8x32xf32>
    %97 = vector.shape_cast %96 : vector<1x8x32xf32> to vector<8x32xf32>
    %cst_101 = arith.constant dense<0.000000e+00> : vector<8x64xf32>
    %98 = tpu.matmul %97, %89, %cst_101 {dimension_numbers = #tpu.dot_dimension_numbers<[1], [0], [0], [1], [0, 0, 1, 1], [], []>} : vector<8x32xf32>, vector<32x64xf32>, vector<8x64xf32> -> vector<8x64xf32>
    %c0_102 = arith.constant 0 : index
    %c1_103 = arith.constant 1 : index
    %c0_104 = arith.constant 0 : index
    %c0_105 = arith.constant 0 : index
    %99 = vector.load %arg9[%c0_102, %c1_103, %c0_104, %c0_105] : memref<1x9x64x128xf32, #tpu.memory_space<vmem>>, vector<1x1x64x128xf32>
    %100 = vector.shape_cast %99 : vector<1x1x64x128xf32> to vector<64x128xf32>
    %cst_106 = arith.constant dense<0.000000e+00> : vector<8x128xf32>
    %101 = tpu.matmul %98, %100, %cst_106 {dimension_numbers = #tpu.dot_dimension_numbers<[1], [0], [0], [1], [0, 0, 1, 1], [], []>} : vector<8x64xf32>, vector<64x128xf32>, vector<8x128xf32> -> vector<8x128xf32>
    %102 = arith.addf %95, %101 : vector<8x128xf32>
    %c2_107 = arith.constant 2 : index
    %c0_108 = arith.constant 0 : index
    %c0_109 = arith.constant 0 : index
    %103 = vector.load %arg3[%c2_107, %c0_108, %c0_109] : memref<9x8x32xf32, #tpu.memory_space<vmem>>, vector<1x8x32xf32>
    %104 = vector.shape_cast %103 : vector<1x8x32xf32> to vector<8x32xf32>
    %cst_110 = arith.constant dense<0.000000e+00> : vector<8x64xf32>
    %105 = tpu.matmul %104, %89, %cst_110 {dimension_numbers = #tpu.dot_dimension_numbers<[1], [0], [0], [1], [0, 0, 1, 1], [], []>} : vector<8x32xf32>, vector<32x64xf32>, vector<8x64xf32> -> vector<8x64xf32>
    %c0_111 = arith.constant 0 : index
    %c2_112 = arith.constant 2 : index
    %c0_113 = arith.constant 0 : index
    %c0_114 = arith.constant 0 : index
    %106 = vector.load %arg9[%c0_111, %c2_112, %c0_113, %c0_114] : memref<1x9x64x128xf32, #tpu.memory_space<vmem>>, vector<1x1x64x128xf32>
    %107 = vector.shape_cast %106 : vector<1x1x64x128xf32> to vector<64x128xf32>
    %cst_115 = arith.constant dense<0.000000e+00> : vector<8x128xf32>
    %108 = tpu.matmul %105, %107, %cst_115 {dimension_numbers = #tpu.dot_dimension_numbers<[1], [0], [0], [1], [0, 0, 1, 1], [], []>} : vector<8x64xf32>, vector<64x128xf32>, vector<8x128xf32> -> vector<8x128xf32>
    %109 = arith.addf %102, %108 : vector<8x128xf32>
    %c3_116 = arith.constant 3 : index
    %c0_117 = arith.constant 0 : index
    %c0_118 = arith.constant 0 : index
    %110 = vector.load %arg3[%c3_116, %c0_117, %c0_118] : memref<9x8x32xf32, #tpu.memory_space<vmem>>, vector<1x8x32xf32>
    %111 = vector.shape_cast %110 : vector<1x8x32xf32> to vector<8x32xf32>
    %cst_119 = arith.constant dense<0.000000e+00> : vector<8x64xf32>
    %112 = tpu.matmul %111, %89, %cst_119 {dimension_numbers = #tpu.dot_dimension_numbers<[1], [0], [0], [1], [0, 0, 1, 1], [], []>} : vector<8x32xf32>, vector<32x64xf32>, vector<8x64xf32> -> vector<8x64xf32>
    %c0_120 = arith.constant 0 : index
    %c3_121 = arith.constant 3 : index
    %c0_122 = arith.constant 0 : index
    %c0_123 = arith.constant 0 : index
    %113 = vector.load %arg9[%c0_120, %c3_121, %c0_122, %c0_123] : memref<1x9x64x128xf32, #tpu.memory_space<vmem>>, vector<1x1x64x128xf32>
    %114 = vector.shape_cast %113 : vector<1x1x64x128xf32> to vector<64x128xf32>
    %cst_124 = arith.constant dense<0.000000e+00> : vector<8x128xf32>
    %115 = tpu.matmul %112, %114, %cst_124 {dimension_numbers = #tpu.dot_dimension_numbers<[1], [0], [0], [1], [0, 0, 1, 1], [], []>} : vector<8x64xf32>, vector<64x128xf32>, vector<8x128xf32> -> vector<8x128xf32>
    %116 = arith.addf %109, %115 : vector<8x128xf32>
    %c4_125 = arith.constant 4 : index
    %c0_126 = arith.constant 0 : index
    %c0_127 = arith.constant 0 : index
    %117 = vector.load %arg3[%c4_125, %c0_126, %c0_127] : memref<9x8x32xf32, #tpu.memory_space<vmem>>, vector<1x8x32xf32>
    %118 = vector.shape_cast %117 : vector<1x8x32xf32> to vector<8x32xf32>
    %cst_128 = arith.constant dense<0.000000e+00> : vector<8x64xf32>
    %119 = tpu.matmul %118, %89, %cst_128 {dimension_numbers = #tpu.dot_dimension_numbers<[1], [0], [0], [1], [0, 0, 1, 1], [], []>} : vector<8x32xf32>, vector<32x64xf32>, vector<8x64xf32> -> vector<8x64xf32>
    %c0_129 = arith.constant 0 : index
    %c4_130 = arith.constant 4 : index
    %c0_131 = arith.constant 0 : index
    %c0_132 = arith.constant 0 : index
    %120 = vector.load %arg9[%c0_129, %c4_130, %c0_131, %c0_132] : memref<1x9x64x128xf32, #tpu.memory_space<vmem>>, vector<1x1x64x128xf32>
    %121 = vector.shape_cast %120 : vector<1x1x64x128xf32> to vector<64x128xf32>
    %cst_133 = arith.constant dense<0.000000e+00> : vector<8x128xf32>
    %122 = tpu.matmul %119, %121, %cst_133 {dimension_numbers = #tpu.dot_dimension_numbers<[1], [0], [0], [1], [0, 0, 1, 1], [], []>} : vector<8x64xf32>, vector<64x128xf32>, vector<8x128xf32> -> vector<8x128xf32>
    %123 = arith.addf %116, %122 : vector<8x128xf32>
    %c5_134 = arith.constant 5 : index
    %c0_135 = arith.constant 0 : index
    %c0_136 = arith.constant 0 : index
    %124 = vector.load %arg3[%c5_134, %c0_135, %c0_136] : memref<9x8x32xf32, #tpu.memory_space<vmem>>, vector<1x8x32xf32>
    %125 = vector.shape_cast %124 : vector<1x8x32xf32> to vector<8x32xf32>
    %cst_137 = arith.constant dense<0.000000e+00> : vector<8x64xf32>
    %126 = tpu.matmul %125, %89, %cst_137 {dimension_numbers = #tpu.dot_dimension_numbers<[1], [0], [0], [1], [0, 0, 1, 1], [], []>} : vector<8x32xf32>, vector<32x64xf32>, vector<8x64xf32> -> vector<8x64xf32>
    %c0_138 = arith.constant 0 : index
    %c5_139 = arith.constant 5 : index
    %c0_140 = arith.constant 0 : index
    %c0_141 = arith.constant 0 : index
    %127 = vector.load %arg9[%c0_138, %c5_139, %c0_140, %c0_141] : memref<1x9x64x128xf32, #tpu.memory_space<vmem>>, vector<1x1x64x128xf32>
    %128 = vector.shape_cast %127 : vector<1x1x64x128xf32> to vector<64x128xf32>
    %cst_142 = arith.constant dense<0.000000e+00> : vector<8x128xf32>
    %129 = tpu.matmul %126, %128, %cst_142 {dimension_numbers = #tpu.dot_dimension_numbers<[1], [0], [0], [1], [0, 0, 1, 1], [], []>} : vector<8x64xf32>, vector<64x128xf32>, vector<8x128xf32> -> vector<8x128xf32>
    %130 = arith.addf %123, %129 : vector<8x128xf32>
    %c6_143 = arith.constant 6 : index
    %c0_144 = arith.constant 0 : index
    %c0_145 = arith.constant 0 : index
    %131 = vector.load %arg3[%c6_143, %c0_144, %c0_145] : memref<9x8x32xf32, #tpu.memory_space<vmem>>, vector<1x8x32xf32>
    %132 = vector.shape_cast %131 : vector<1x8x32xf32> to vector<8x32xf32>
    %cst_146 = arith.constant dense<0.000000e+00> : vector<8x64xf32>
    %133 = tpu.matmul %132, %89, %cst_146 {dimension_numbers = #tpu.dot_dimension_numbers<[1], [0], [0], [1], [0, 0, 1, 1], [], []>} : vector<8x32xf32>, vector<32x64xf32>, vector<8x64xf32> -> vector<8x64xf32>
    %c0_147 = arith.constant 0 : index
    %c6_148 = arith.constant 6 : index
    %c0_149 = arith.constant 0 : index
    %c0_150 = arith.constant 0 : index
    %134 = vector.load %arg9[%c0_147, %c6_148, %c0_149, %c0_150] : memref<1x9x64x128xf32, #tpu.memory_space<vmem>>, vector<1x1x64x128xf32>
    %135 = vector.shape_cast %134 : vector<1x1x64x128xf32> to vector<64x128xf32>
    %cst_151 = arith.constant dense<0.000000e+00> : vector<8x128xf32>
    %136 = tpu.matmul %133, %135, %cst_151 {dimension_numbers = #tpu.dot_dimension_numbers<[1], [0], [0], [1], [0, 0, 1, 1], [], []>} : vector<8x64xf32>, vector<64x128xf32>, vector<8x128xf32> -> vector<8x128xf32>
    %137 = arith.addf %130, %136 : vector<8x128xf32>
    %c7_152 = arith.constant 7 : index
    %c0_153 = arith.constant 0 : index
    %c0_154 = arith.constant 0 : index
    %138 = vector.load %arg3[%c7_152, %c0_153, %c0_154] : memref<9x8x32xf32, #tpu.memory_space<vmem>>, vector<1x8x32xf32>
    %139 = vector.shape_cast %138 : vector<1x8x32xf32> to vector<8x32xf32>
    %cst_155 = arith.constant dense<0.000000e+00> : vector<8x64xf32>
    %140 = tpu.matmul %139, %89, %cst_155 {dimension_numbers = #tpu.dot_dimension_numbers<[1], [0], [0], [1], [0, 0, 1, 1], [], []>} : vector<8x32xf32>, vector<32x64xf32>, vector<8x64xf32> -> vector<8x64xf32>
    %c0_156 = arith.constant 0 : index
    %c7_157 = arith.constant 7 : index
    %c0_158 = arith.constant 0 : index
    %c0_159 = arith.constant 0 : index
    %141 = vector.load %arg9[%c0_156, %c7_157, %c0_158, %c0_159] : memref<1x9x64x128xf32, #tpu.memory_space<vmem>>, vector<1x1x64x128xf32>
    %142 = vector.shape_cast %141 : vector<1x1x64x128xf32> to vector<64x128xf32>
    %cst_160 = arith.constant dense<0.000000e+00> : vector<8x128xf32>
    %143 = tpu.matmul %140, %142, %cst_160 {dimension_numbers = #tpu.dot_dimension_numbers<[1], [0], [0], [1], [0, 0, 1, 1], [], []>} : vector<8x64xf32>, vector<64x128xf32>, vector<8x128xf32> -> vector<8x128xf32>
    %144 = arith.addf %137, %143 : vector<8x128xf32>
    %c8_161 = arith.constant 8 : index
    %c0_162 = arith.constant 0 : index
    %c0_163 = arith.constant 0 : index
    %145 = vector.load %arg3[%c8_161, %c0_162, %c0_163] : memref<9x8x32xf32, #tpu.memory_space<vmem>>, vector<1x8x32xf32>
    %146 = vector.shape_cast %145 : vector<1x8x32xf32> to vector<8x32xf32>
    %cst_164 = arith.constant dense<0.000000e+00> : vector<8x64xf32>
    %147 = tpu.matmul %146, %89, %cst_164 {dimension_numbers = #tpu.dot_dimension_numbers<[1], [0], [0], [1], [0, 0, 1, 1], [], []>} : vector<8x32xf32>, vector<32x64xf32>, vector<8x64xf32> -> vector<8x64xf32>
    %c0_165 = arith.constant 0 : index
    %c8_166 = arith.constant 8 : index
    %c0_167 = arith.constant 0 : index
    %c0_168 = arith.constant 0 : index
    %148 = vector.load %arg9[%c0_165, %c8_166, %c0_167, %c0_168] : memref<1x9x64x128xf32, #tpu.memory_space<vmem>>, vector<1x1x64x128xf32>
    %149 = vector.shape_cast %148 : vector<1x1x64x128xf32> to vector<64x128xf32>
    %cst_169 = arith.constant dense<0.000000e+00> : vector<8x128xf32>
    %150 = tpu.matmul %147, %149, %cst_169 {dimension_numbers = #tpu.dot_dimension_numbers<[1], [0], [0], [1], [0, 0, 1, 1], [], []>} : vector<8x64xf32>, vector<64x128xf32>, vector<8x128xf32> -> vector<8x128xf32>
    %151 = arith.addf %144, %150 : vector<8x128xf32>
    %c0_170 = arith.constant 0 : index
    %c0_171 = arith.constant 0 : index
    %c0_172 = arith.constant 0 : index
    %152 = vector.load %arg10[%c0_170, %c0_171, %c0_172] : memref<1x1x128xf32, #tpu.memory_space<vmem>>, vector<1x1x128xf32>
    %153 = vector.shape_cast %152 : vector<1x1x128xf32> to vector<1x128xf32>
    %154 = vector.broadcast %153 : vector<1x128xf32> to vector<8x128xf32>
    %155 = arith.addf %151, %154 : vector<8x128xf32>
    %cst_173 = arith.constant 5.000000e-01 : f32
    %156 = vector.broadcast %cst_173 : f32 to vector<8x128xf32>
    %157 = arith.mulf %156, %155 : vector<8x128xf32>
    %cst_174 = arith.constant 0.707106769 : f32
    %158 = vector.broadcast %cst_174 : f32 to vector<8x128xf32>
    %159 = arith.mulf %155, %158 : vector<8x128xf32>
    %160 = math.erf %159 : vector<8x128xf32>
    %cst_175 = arith.constant 1.000000e+00 : f32
    %161 = vector.broadcast %cst_175 : f32 to vector<8x128xf32>
    %162 = arith.addf %161, %160 : vector<8x128xf32>
    %163 = arith.mulf %157, %162 : vector<8x128xf32>
    %c0_176 = arith.constant 0 : index
    %c0_177 = arith.constant 0 : index
    %c0_178 = arith.constant 0 : index
    %164 = vector.load %arg4[%c0_176, %c0_177, %c0_178] : memref<4x2x8xf32, #tpu.memory_space<vmem>>, vector<1x2x8xf32>
    %165 = vector.shape_cast %164 : vector<1x2x8xf32> to vector<2x8xf32>
    %cst_179 = arith.constant dense<0.000000e+00> : vector<2x128xf32>
    %166 = tpu.matmul %165, %163, %cst_179 {dimension_numbers = #tpu.dot_dimension_numbers<[1], [0], [0], [1], [0, 0, 1, 1], [], []>} : vector<2x8xf32>, vector<8x128xf32>, vector<2x128xf32> -> vector<2x128xf32>
    %c0_180 = arith.constant 0 : index
    %c0_181 = arith.constant 0 : index
    %c0_182 = arith.constant 0 : index
    %c0_183 = arith.constant 0 : index
    %167 = vector.load %arg11[%c0_180, %c0_181, %c0_182, %c0_183] : memref<1x4x128x64xf32, #tpu.memory_space<vmem>>, vector<1x1x128x64xf32>
    %168 = vector.shape_cast %167 : vector<1x1x128x64xf32> to vector<128x64xf32>
    %cst_184 = arith.constant dense<0.000000e+00> : vector<2x64xf32>
    %169 = tpu.matmul %166, %168, %cst_184 {dimension_numbers = #tpu.dot_dimension_numbers<[1], [0], [0], [1], [0, 0, 1, 1], [], []>} : vector<2x128xf32>, vector<128x64xf32>, vector<2x64xf32> -> vector<2x64xf32>
    %c1_185 = arith.constant 1 : index
    %c0_186 = arith.constant 0 : index
    %c0_187 = arith.constant 0 : index
    %170 = vector.load %arg4[%c1_185, %c0_186, %c0_187] : memref<4x2x8xf32, #tpu.memory_space<vmem>>, vector<1x2x8xf32>
    %171 = vector.shape_cast %170 : vector<1x2x8xf32> to vector<2x8xf32>
    %cst_188 = arith.constant dense<0.000000e+00> : vector<2x128xf32>
    %172 = tpu.matmul %171, %163, %cst_188 {dimension_numbers = #tpu.dot_dimension_numbers<[1], [0], [0], [1], [0, 0, 1, 1], [], []>} : vector<2x8xf32>, vector<8x128xf32>, vector<2x128xf32> -> vector<2x128xf32>
    %c0_189 = arith.constant 0 : index
    %c1_190 = arith.constant 1 : index
    %c0_191 = arith.constant 0 : index
    %c0_192 = arith.constant 0 : index
    %173 = vector.load %arg11[%c0_189, %c1_190, %c0_191, %c0_192] : memref<1x4x128x64xf32, #tpu.memory_space<vmem>>, vector<1x1x128x64xf32>
    %174 = vector.shape_cast %173 : vector<1x1x128x64xf32> to vector<128x64xf32>
    %cst_193 = arith.constant dense<0.000000e+00> : vector<2x64xf32>
    %175 = tpu.matmul %172, %174, %cst_193 {dimension_numbers = #tpu.dot_dimension_numbers<[1], [0], [0], [1], [0, 0, 1, 1], [], []>} : vector<2x128xf32>, vector<128x64xf32>, vector<2x64xf32> -> vector<2x64xf32>
    %176 = arith.addf %169, %175 : vector<2x64xf32>
    %c2_194 = arith.constant 2 : index
    %c0_195 = arith.constant 0 : index
    %c0_196 = arith.constant 0 : index
    %177 = vector.load %arg4[%c2_194, %c0_195, %c0_196] : memref<4x2x8xf32, #tpu.memory_space<vmem>>, vector<1x2x8xf32>
    %178 = vector.shape_cast %177 : vector<1x2x8xf32> to vector<2x8xf32>
    %cst_197 = arith.constant dense<0.000000e+00> : vector<2x128xf32>
    %179 = tpu.matmul %178, %163, %cst_197 {dimension_numbers = #tpu.dot_dimension_numbers<[1], [0], [0], [1], [0, 0, 1, 1], [], []>} : vector<2x8xf32>, vector<8x128xf32>, vector<2x128xf32> -> vector<2x128xf32>
    %c0_198 = arith.constant 0 : index
    %c2_199 = arith.constant 2 : index
    %c0_200 = arith.constant 0 : index
    %c0_201 = arith.constant 0 : index
    %180 = vector.load %arg11[%c0_198, %c2_199, %c0_200, %c0_201] : memref<1x4x128x64xf32, #tpu.memory_space<vmem>>, vector<1x1x128x64xf32>
    %181 = vector.shape_cast %180 : vector<1x1x128x64xf32> to vector<128x64xf32>
    %cst_202 = arith.constant dense<0.000000e+00> : vector<2x64xf32>
    %182 = tpu.matmul %179, %181, %cst_202 {dimension_numbers = #tpu.dot_dimension_numbers<[1], [0], [0], [1], [0, 0, 1, 1], [], []>} : vector<2x128xf32>, vector<128x64xf32>, vector<2x64xf32> -> vector<2x64xf32>
    %183 = arith.addf %176, %182 : vector<2x64xf32>
    %c3_203 = arith.constant 3 : index
    %c0_204 = arith.constant 0 : index
    %c0_205 = arith.constant 0 : index
    %184 = vector.load %arg4[%c3_203, %c0_204, %c0_205] : memref<4x2x8xf32, #tpu.memory_space<vmem>>, vector<1x2x8xf32>
    %185 = vector.shape_cast %184 : vector<1x2x8xf32> to vector<2x8xf32>
    %cst_206 = arith.constant dense<0.000000e+00> : vector<2x128xf32>
    %186 = tpu.matmul %185, %163, %cst_206 {dimension_numbers = #tpu.dot_dimension_numbers<[1], [0], [0], [1], [0, 0, 1, 1], [], []>} : vector<2x8xf32>, vector<8x128xf32>, vector<2x128xf32> -> vector<2x128xf32>
    %c0_207 = arith.constant 0 : index
    %c3_208 = arith.constant 3 : index
    %c0_209 = arith.constant 0 : index
    %c0_210 = arith.constant 0 : index
    %187 = vector.load %arg11[%c0_207, %c3_208, %c0_209, %c0_210] : memref<1x4x128x64xf32, #tpu.memory_space<vmem>>, vector<1x1x128x64xf32>
    %188 = vector.shape_cast %187 : vector<1x1x128x64xf32> to vector<128x64xf32>
    %cst_211 = arith.constant dense<0.000000e+00> : vector<2x64xf32>
    %189 = tpu.matmul %186, %188, %cst_211 {dimension_numbers = #tpu.dot_dimension_numbers<[1], [0], [0], [1], [0, 0, 1, 1], [], []>} : vector<2x128xf32>, vector<128x64xf32>, vector<2x64xf32> -> vector<2x64xf32>
    %190 = arith.addf %183, %189 : vector<2x64xf32>
    %c0_212 = arith.constant 0 : index
    %c0_213 = arith.constant 0 : index
    %c0_214 = arith.constant 0 : index
    %191 = vector.load %arg12[%c0_212, %c0_213, %c0_214] : memref<1x1x64xf32, #tpu.memory_space<vmem>>, vector<1x1x64xf32>
    %192 = vector.shape_cast %191 : vector<1x1x64xf32> to vector<1x64xf32>
    %193 = vector.broadcast %192 : vector<1x64xf32> to vector<2x64xf32>
    %194 = arith.addf %190, %193 : vector<2x64xf32>
    %c0_i32 = arith.constant 0 : i32
    %195 = arith.cmpi eq, %arg0, %c0_i32 : i32
    %196 = arith.extui %195 : i1 to i32
    %c0_i32_215 = arith.constant 0 : i32
    %197 = arith.cmpi ne, %196, %c0_i32_215 : i32
    scf.if %197 {
      %cst_218 = arith.constant 5.000000e-01 : f32
      %201 = vector.broadcast %cst_218 : f32 to vector<2x64xf32>
      %202 = arith.mulf %201, %194 : vector<2x64xf32>
      %cst_219 = arith.constant 0.707106769 : f32
      %203 = vector.broadcast %cst_219 : f32 to vector<2x64xf32>
      %204 = arith.mulf %194, %203 : vector<2x64xf32>
      %205 = math.erf %204 : vector<2x64xf32>
      %cst_220 = arith.constant 1.000000e+00 : f32
      %206 = vector.broadcast %cst_220 : f32 to vector<2x64xf32>
      %207 = arith.addf %206, %205 : vector<2x64xf32>
      %208 = arith.mulf %202, %207 : vector<2x64xf32>
      %c0_221 = arith.constant 0 : index
      %c0_222 = arith.constant 0 : index
      %209 = vector.load %arg13[%c0_221, %c0_222] : memref<64x64xf32, #tpu.memory_space<vmem>>, vector<64x64xf32>
      %cst_223 = arith.constant dense<0.000000e+00> : vector<2x64xf32>
      %210 = tpu.matmul %208, %209, %cst_223 {dimension_numbers = #tpu.dot_dimension_numbers<[1], [0], [0], [1], [0, 0, 1, 1], [], []>} : vector<2x64xf32>, vector<64x64xf32>, vector<2x64xf32> -> vector<2x64xf32>
      %c0_224 = arith.constant 0 : index
      %c0_225 = arith.constant 0 : index
      %211 = vector.load %arg14[%c0_224, %c0_225] : memref<1x64xf32, #tpu.memory_space<vmem>>, vector<1x64xf32>
      %212 = vector.broadcast %211 : vector<1x64xf32> to vector<2x64xf32>
      %213 = arith.addf %210, %212 : vector<2x64xf32>
      %cst_226 = arith.constant 5.000000e-01 : f32
      %214 = vector.broadcast %cst_226 : f32 to vector<2x64xf32>
      %215 = arith.mulf %214, %213 : vector<2x64xf32>
      %cst_227 = arith.constant 0.707106769 : f32
      %216 = vector.broadcast %cst_227 : f32 to vector<2x64xf32>
      %217 = arith.mulf %213, %216 : vector<2x64xf32>
      %218 = math.erf %217 : vector<2x64xf32>
      %cst_228 = arith.constant 1.000000e+00 : f32
      %219 = vector.broadcast %cst_228 : f32 to vector<2x64xf32>
      %220 = arith.addf %219, %218 : vector<2x64xf32>
      %221 = arith.mulf %215, %220 : vector<2x64xf32>
      %c0_229 = arith.constant 0 : index
      %c0_230 = arith.constant 0 : index
      %222 = vector.load %arg15[%c0_229, %c0_230] : memref<64x64xf32, #tpu.memory_space<vmem>>, vector<64x64xf32>
      %cst_231 = arith.constant dense<0.000000e+00> : vector<2x64xf32>
      %223 = tpu.matmul %221, %222, %cst_231 {dimension_numbers = #tpu.dot_dimension_numbers<[1], [0], [0], [1], [0, 0, 1, 1], [], []>} : vector<2x64xf32>, vector<64x64xf32>, vector<2x64xf32> -> vector<2x64xf32>
      %c0_232 = arith.constant 0 : index
      %c0_233 = arith.constant 0 : index
      %224 = vector.load %arg16[%c0_232, %c0_233] : memref<1x64xf32, #tpu.memory_space<vmem>>, vector<1x64xf32>
      %225 = vector.broadcast %224 : vector<1x64xf32> to vector<2x64xf32>
      %226 = arith.addf %223, %225 : vector<2x64xf32>
      %c0_234 = arith.constant 0 : index
      %c0_235 = arith.constant 0 : index
      %c0_236 = arith.constant 0 : index
      %227 = vector.load %arg17[%c0_234, %c0_235, %c0_236] : memref<1x2x64xf32, #tpu.memory_space<vmem>>, vector<1x2x64xf32>
      %228 = vector.shape_cast %227 : vector<1x2x64xf32> to vector<2x64xf32>
      %229 = vector.shape_cast %226 : vector<2x64xf32> to vector<1x2x64xf32>
      tpu.vector_store %arg17[%c0_234, %c0_235, %c0_236], %229 {strides = array<i32>} : memref<1x2x64xf32, #tpu.memory_space<vmem>>, vector<1x2x64xf32>,
    } else {
    }
    %c0_i32_216 = arith.constant 0 : i32
    %198 = arith.cmpi ne, %arg0, %c0_i32_216 : i32
    %199 = arith.extui %198 : i1 to i32
    %c0_i32_217 = arith.constant 0 : i32
    %200 = arith.cmpi ne, %199, %c0_i32_217 : i32
    scf.if %200 {
      %c0_218 = arith.constant 0 : index
      %c0_219 = arith.constant 0 : index
      %c0_220 = arith.constant 0 : index
      %201 = vector.load %arg17[%c0_218, %c0_219, %c0_220] : memref<1x2x64xf32, #tpu.memory_space<vmem>>, vector<1x2x64xf32>
      %202 = vector.shape_cast %201 : vector<1x2x64xf32> to vector<2x64xf32>
      %203 = vector.shape_cast %194 : vector<2x64xf32> to vector<1x2x64xf32>
      tpu.vector_store %arg17[%c0_218, %c0_219, %c0_220], %203 {strides = array<i32>} : memref<1x2x64xf32, #tpu.memory_space<vmem>>, vector<1x2x64xf32>,
    } else {
    }
    return
  }
  func.func @transform_0(%arg0: i32) -> (i32, i32) {
    %c0_i32 = arith.constant 0 : i32
    %c0_i32_0 = arith.constant 0 : i32
    %c0_i32_1 = arith.constant 0 : i32
    return %c0_i32, %c0_i32_0 : i32, i32
  }
  func.func @transform_1(%arg0: i32) -> (i32, i32, i32) {
    %c0_i32 = arith.constant 0 : i32
    %c0_i32_0 = arith.constant 0 : i32
    %c0_i32_1 = arith.constant 0 : i32
    %c0_i32_2 = arith.constant 0 : i32
    return %c0_i32, %c0_i32_0, %c0_i32_1 : i32, i32, i32
  }
  func.func @transform_2(%arg0: i32) -> (i32, i32, i32) {
    %c0_i32 = arith.constant 0 : i32
    %c0_i32_0 = arith.constant 0 : i32
    %c0_i32_1 = arith.constant 0 : i32
    %c0_i32_2 = arith.constant 0 : i32
    return %c0_i32, %c0_i32_0, %c0_i32_1 : i32, i32, i32
  }
  func.func @transform_3(%arg0: i32) -> (i32, i32, i32) {
    %c0_i32 = arith.constant 0 : i32
    %c0_i32_0 = arith.constant 0 : i32
    %c0_i32_1 = arith.constant 0 : i32
    %c0_i32_2 = arith.constant 0 : i32
    return %c0_i32, %c0_i32_0, %c0_i32_1 : i32, i32, i32
  }
  func.func @transform_4(%arg0: i32) -> (i32, i32, i32) {
    %c0_i32 = arith.constant 0 : i32
    %c0_i32_0 = arith.constant 0 : i32
    %c0_i32_1 = arith.constant 0 : i32
    return %arg0, %c0_i32, %c0_i32_0 : i32, i32, i32
  }
  func.func @transform_5(%arg0: i32) -> (i32, i32, i32) {
    %c0_i32 = arith.constant 0 : i32
    %c0_i32_0 = arith.constant 0 : i32
    %c0_i32_1 = arith.constant 0 : i32
    return %arg0, %c0_i32, %c0_i32_0 : i32, i32, i32
  }
  func.func @transform_6(%arg0: i32) -> (i32, i32, i32, i32) {
    %c0_i32 = arith.constant 0 : i32
    %c0_i32_0 = arith.constant 0 : i32
    %c0_i32_1 = arith.constant 0 : i32
    %c0_i32_2 = arith.constant 0 : i32
    return %arg0, %c0_i32, %c0_i32_0, %c0_i32_1 : i32, i32, i32, i32
  }
  func.func @transform_7(%arg0: i32) -> (i32, i32, i32) {
    %c0_i32 = arith.constant 0 : i32
    %c0_i32_0 = arith.constant 0 : i32
    %c0_i32_1 = arith.constant 0 : i32
    return %arg0, %c0_i32, %c0_i32_0 : i32, i32, i32
  }
  func.func @transform_8(%arg0: i32) -> (i32, i32, i32, i32) {
    %c0_i32 = arith.constant 0 : i32
    %c0_i32_0 = arith.constant 0 : i32
    %c0_i32_1 = arith.constant 0 : i32
    %c0_i32_2 = arith.constant 0 : i32
    return %arg0, %c0_i32, %c0_i32_0, %c0_i32_1 : i32, i32, i32, i32
  }
  func.func @transform_9(%arg0: i32) -> (i32, i32, i32) {
    %c0_i32 = arith.constant 0 : i32
    %c0_i32_0 = arith.constant 0 : i32
    %c0_i32_1 = arith.constant 0 : i32
    return %arg0, %c0_i32, %c0_i32_0 : i32, i32, i32
  }
  func.func @transform_10(%arg0: i32) -> (i32, i32, i32, i32) {
    %c0_i32 = arith.constant 0 : i32
    %c0_i32_0 = arith.constant 0 : i32
    %c0_i32_1 = arith.constant 0 : i32
    %c0_i32_2 = arith.constant 0 : i32
    return %arg0, %c0_i32, %c0_i32_0, %c0_i32_1 : i32, i32, i32, i32
  }
  func.func @transform_11(%arg0: i32) -> (i32, i32, i32) {
    %c0_i32 = arith.constant 0 : i32
    %c0_i32_0 = arith.constant 0 : i32
    %c0_i32_1 = arith.constant 0 : i32
    return %arg0, %c0_i32, %c0_i32_0 : i32, i32, i32
  }
  func.func @transform_12(%arg0: i32) -> (i32, i32) {
    %c0_i32 = arith.constant 0 : i32
    %c0_i32_0 = arith.constant 0 : i32
    %c0_i32_1 = arith.constant 0 : i32
    return %c0_i32, %c0_i32_0 : i32, i32
  }
  func.func @transform_13(%arg0: i32) -> (i32, i32) {
    %c0_i32 = arith.constant 0 : i32
    %c0_i32_0 = arith.constant 0 : i32
    %c0_i32_1 = arith.constant 0 : i32
    return %c0_i32, %c0_i32_0 : i32, i32
  }
  func.func @transform_14(%arg0: i32) -> (i32, i32) {
    %c0_i32 = arith.constant 0 : i32
    %c0_i32_0 = arith.constant 0 : i32
    %c0_i32_1 = arith.constant 0 : i32
    return %c0_i32, %c0_i32_0 : i32, i32
  }
  func.func @transform_15(%arg0: i32) -> (i32, i32) {
    %c0_i32 = arith.constant 0 : i32
    %c0_i32_0 = arith.constant 0 : i32
    %c0_i32_1 = arith.constant 0 : i32
    return %c0_i32, %c0_i32_0 : i32, i32
  }
  func.func @transform_16(%arg0: i32) -> (i32, i32, i32) {
    %c0_i32 = arith.constant 0 : i32
    %c0_i32_0 = arith.constant 0 : i32
    %c0_i32_1 = arith.constant 0 : i32
    return %arg0, %c0_i32, %c0_i32_0 : i32, i32, i32
  }
}

</mosaic_0001>

<llo_original>
// kernel: vicreg_forward.1
$region0: #{vicreg_forward.1}
  #allocation0 [shape = 'u32[]', space=smem, size = 0x4, offset = 0x4, fixed_abs, tag = 'smem constant byte address 0x4 - core index']
  #allocation1 [shape = 'u32[144,128]{1,0:T(1,128)}', space=vmem, size = 0x12000, scoped, tag = 'internal scratch']
  %s0 = inlined_call_operand.vmem [shape: f32[128,9], index: 0, kind: input, shape index: {}]
  %s1 = inlined_call_operand.vmem [shape: f32[9,32,128], index: 1, kind: input, shape index: {}]
  %s2 = inlined_call_operand.vmem [shape: f32[9,8,32], index: 2, kind: input, shape index: {}]
  %s3 = inlined_call_operand.vmem [shape: f32[4,2,8], index: 3, kind: input, shape index: {}]
  %s4 = inlined_call_operand.vmem [shape: f32[2,9,32], index: 4, kind: input, shape index: {}]
  %s5 = inlined_call_operand.vmem [shape: f32[2,1,32], index: 5, kind: input, shape index: {}]
  %s6 = inlined_call_operand.vmem [shape: f32[2,9,32,64], index: 6, kind: input, shape index: {}]
  %s7 = inlined_call_operand.vmem [shape: f32[2,1,64], index: 7, kind: input, shape index: {}]
  %s8 = inlined_call_operand.vmem [shape: f32[2,9,64,128], index: 8, kind: input, shape index: {}]
  %s9 = inlined_call_operand.vmem [shape: f32[2,1,128], index: 9, kind: input, shape index: {}]
  %s10 = inlined_call_operand.vmem [shape: f32[2,4,128,64], index: 10, kind: input, shape index: {}]
  %s11 = inlined_call_operand.vmem [shape: f32[2,1,64], index: 11, kind: input, shape index: {}]
  %s12 = inlined_call_operand.vmem [shape: f32[64,64], index: 12, kind: input, shape index: {}]
  %s13 = inlined_call_operand.vmem [shape: f32[1,64], index: 13, kind: input, shape index: {}]
  %s14 = inlined_call_operand.vmem [shape: f32[64,64], index: 14, kind: input, shape index: {}]
  %s15 = inlined_call_operand.vmem [shape: f32[1,64], index: 15, kind: input, shape index: {}]
  %s16 = inlined_call_operand.vmem [shape: f32[2,2,64], index: 16, kind: output, shape index: {}]
  %s17 = sld [smem:[#allocation0]]
  $region105: #{vicreg_forward.1} parent=0
    _
  %s19 = ssub.s32 1, %s17
  %s20 = scalar_select 0, %s19, %s17
  loop: start=0, step=1, limit=4
  $region2: #{vicreg_forward.1} parent=0 // loop_pre_header
    _
  $region3: #{vicreg_forward.1} parent=0 // loop_header
    %s22 = sphi 0, %s26
    %p23 = scmp.ge.s32.totalorder %s22, 4
    %s30 = sphi 0, %s30
    %s32 = sphi 0, %s30
    %s33 = sphi 0, %s32
    %s47 = sphi 0, %s33
    %s51 = sphi 0, %s51
    %s53 = sphi 0, %s51
    %s54 = sphi 0, %s53
    %s68 = sphi 0, %s54
    %s72 = sphi 0, %s72
    %s74 = sphi 0, %s72
    %s75 = sphi 0, %s74
    %s89 = sphi 0, %s75
    %s93 = sphi 0, %s93
    %s95 = sphi 0, %s93
    %s96 = sphi 0, %s95
    %s110 = sphi 0, %s96
    %s116 = sphi 0, %s118
    %s119 = sphi 0, %s116
    %s120 = sphi 0, %s119
    %s136 = sphi 0, %s120
    %s142 = sphi 0, %s144
    %s145 = sphi 0, %s142
    %s146 = sphi 0, %s145
    %s162 = sphi 0, %s146
    %s168 = sphi 0, %s170
    %s171 = sphi 0, %s168
    %s172 = sphi 0, %s171
    %s188 = sphi 0, %s172
    %s194 = sphi 0, %s196
    %s197 = sphi 0, %s194
    %s198 = sphi 0, %s197
    %s214 = sphi 0, %s198
    %s220 = sphi 0, %s222
    %s223 = sphi 0, %s220
    %s224 = sphi 0, %s223
    %s240 = sphi 0, %s224
    %s246 = sphi 0, %s248
    %s249 = sphi 0, %s246
    %s250 = sphi 0, %s249
    %s266 = sphi 0, %s250
    %s272 = sphi 0, %s274
    %s275 = sphi 0, %s272
    %s276 = sphi 0, %s275
    %s292 = sphi 0, %s276
    %s298 = sphi 0, %s300
    %s301 = sphi 0, %s298
    %s302 = sphi 0, %s301
    %s318 = sphi 0, %s302
    %s322 = sphi 0, %s322
    %s324 = sphi 0, %s322
    %s325 = sphi 0, %s324
    %s339 = sphi 0, %s325
    %s343 = sphi 0, %s343
    %s345 = sphi 0, %s343
    %s346 = sphi 0, %s345
    %s360 = sphi 0, %s346
    %s364 = sphi 0, %s364
    %s366 = sphi 0, %s364
    %s367 = sphi 0, %s366
    %s381 = sphi 0, %s367
    %s385 = sphi 0, %s385
    %s387 = sphi 0, %s385
    %s388 = sphi 0, %s387
    %s402 = sphi 0, %s388
    %s408 = sphi 0, %s410
    %s411 = sphi 0, %s408
    %s412 = sphi 0, %s411
    %s428 = sphi 0, %s412
  $region4: #{vicreg_forward.1} parent=0 // loop_header_branch
    %25 = sbr.rel (%p23) target = $region8
  $region5: #{vicreg_forward.1} parent=0 // loop_body
    %s27 = ssub.s32 %s22, 1
    %s28 = ssub.s32 %s22, 2
    %s29 = sadd.s32 %s22, 1
    %s31 = sadd.s32 %s30, 1
    %p34 = scmp.eq.s32.totalorder %s22, 1
    %p35 = scmp.ne.s32.totalorder %s30, %s32
    %p36 = scmp.eq.s32.totalorder %s22, 0
    %p37 = por %p35, %p36
    %p38 = scmp.ne.s32.totalorder %s30, %s32
    %p39 = scmp.eq.s32.totalorder %s27, 1
    %p40 = por %p38, %p39
    %p41 = scmp.ne.s32.totalorder %s32, %s33
    %p42 = scmp.eq.s32.totalorder %s27, 0
    %p43 = por %p41, %p42
    %p44 = scmp.ne.s32.totalorder %s32, %s33
    %p45 = scmp.eq.s32.totalorder %s28, 1
    %p46 = por %p44, %p45
    %p48 = scmp.ne.s32.totalorder %s33, %s47
    %p49 = scmp.eq.s32.totalorder %s28, 0
    %p50 = por %p48, %p49
    %s52 = sadd.s32 %s51, 1
    %p55 = scmp.eq.s32.totalorder %s22, 1
    %p56 = scmp.ne.s32.totalorder %s51, %s53
    %p57 = scmp.eq.s32.totalorder %s22, 0
    %p58 = por %p56, %p57
    %p59 = scmp.ne.s32.totalorder %s51, %s53
    %p60 = scmp.eq.s32.totalorder %s27, 1
    %p61 = por %p59, %p60
    %p62 = scmp.ne.s32.totalorder %s53, %s54
    %p63 = scmp.eq.s32.totalorder %s27, 0
    %p64 = por %p62, %p63
    %p65 = scmp.ne.s32.totalorder %s53, %s54
    %p66 = scmp.eq.s32.totalorder %s28, 1
    %p67 = por %p65, %p66
    %p69 = scmp.ne.s32.totalorder %s54, %s68
    %p70 = scmp.eq.s32.totalorder %s28, 0
    %p71 = por %p69, %p70
    %s73 = sadd.s32 %s72, 1
    %p76 = scmp.eq.s32.totalorder %s22, 1
    %p77 = scmp.ne.s32.totalorder %s72, %s74
    %p78 = scmp.eq.s32.totalorder %s22, 0
    %p79 = por %p77, %p78
    %p80 = scmp.ne.s32.totalorder %s72, %s74
    %p81 = scmp.eq.s32.totalorder %s27, 1
    %p82 = por %p80, %p81
    %p83 = scmp.ne.s32.totalorder %s74, %s75
    %p84 = scmp.eq.s32.totalorder %s27, 0
    %p85 = por %p83, %p84
    %p86 = scmp.ne.s32.totalorder %s74, %s75
    %p87 = scmp.eq.s32.totalorder %s28, 1
    %p88 = por %p86, %p87
    %p90 = scmp.ne.s32.totalorder %s75, %s89
    %p91 = scmp.eq.s32.totalorder %s28, 0
    %p92 = por %p90, %p91
    %s94 = sadd.s32 %s93, 1
    %p97 = scmp.eq.s32.totalorder %s22, 1
    %p98 = scmp.ne.s32.totalorder %s93, %s95
    %p99 = scmp.eq.s32.totalorder %s22, 0
    %p100 = por %p98, %p99
    %p101 = scmp.ne.s32.totalorder %s93, %s95
    %p102 = scmp.eq.s32.totalorder %s27, 1
    %p103 = por %p101, %p102
    %p104 = scmp.ne.s32.totalorder %s95, %s96
    %p105 = scmp.eq.s32.totalorder %s27, 0
    %p106 = por %p104, %p105
    %p107 = scmp.ne.s32.totalorder %s95, %s96
    %p108 = scmp.eq.s32.totalorder %s28, 1
    %p109 = por %p107, %p108
    %p111 = scmp.ne.s32.totalorder %s96, %s110
    %p112 = scmp.eq.s32.totalorder %s28, 0
    %p113 = por %p111, %p112
    %s114 = ssub.s32 %s22, %s29
    %p115 = scmp.eq.s32.totalorder %s114, 0
    %s117 = sadd.s32 %s116, 1
    %s118 = scalar_select %p115, %s116, %s117
    %p121 = pneg %p115
    %p122 = scmp.eq.s32.totalorder %s22, 1
    %p123 = por %p121, %p122
    %p124 = scmp.ne.s32.totalorder %s116, %s119
    %p125 = scmp.eq.s32.totalorder %s22, 0
    %p126 = por %p124, %p125
    %p127 = scmp.ne.s32.totalorder %s116, %s119
    %p128 = scmp.eq.s32.totalorder %s27, 1
    %p129 = por %p127, %p128
    %p130 = scmp.ne.s32.totalorder %s119, %s120
    %p131 = scmp.eq.s32.totalorder %s27, 0
    %p132 = por %p130, %p131
    %p133 = scmp.ne.s32.totalorder %s119, %s120
    %p134 = scmp.eq.s32.totalorder %s28, 1
    %p135 = por %p133, %p134
    %p137 = scmp.ne.s32.totalorder %s120, %s136
    %p138 = scmp.eq.s32.totalorder %s28, 0
    %p139 = por %p137, %p138
    %s140 = ssub.s32 %s22, %s29
    %p141 = scmp.eq.s32.totalorder %s140, 0
    %s143 = sadd.s32 %s142, 1
    %s144 = scalar_select %p141, %s142, %s143
    %p147 = pneg %p141
    %p148 = scmp.eq.s32.totalorder %s22, 1
    %p149 = por %p147, %p148
    %p150 = scmp.ne.s32.totalorder %s142, %s145
    %p151 = scmp.eq.s32.totalorder %s22, 0
    %p152 = por %p150, %p151
    %p153 = scmp.ne.s32.totalorder %s142, %s145
    %p154 = scmp.eq.s32.totalorder %s27, 1
    %p155 = por %p153, %p154
    %p156 = scmp.ne.s32.totalorder %s145, %s146
    %p157 = scmp.eq.s32.totalorder %s27, 0
    %p158 = por %p156, %p157
    %p159 = scmp.ne.s32.totalorder %s145, %s146
    %p160 = scmp.eq.s32.totalorder %s28, 1
    %p161 = por %p159, %p160
    %p163 = scmp.ne.s32.totalorder %s146, %s162
    %p164 = scmp.eq.s32.totalorder %s28, 0
    %p165 = por %p163, %p164
    %s166 = ssub.s32 %s22, %s29
    %p167 = scmp.eq.s32.totalorder %s166, 0
    %s169 = sadd.s32 %s168, 1
    %s170 = scalar_select %p167, %s168, %s169
    %p173 = pneg %p167
    %p174 = scmp.eq.s32.totalorder %s22, 1
    %p175 = por %p173, %p174
    %p176 = scmp.ne.s32.totalorder %s168, %s171
    %p177 = scmp.eq.s32.totalorder %s22, 0
    %p178 = por %p176, %p177
    %p179 = scmp.ne.s32.totalorder %s168, %s171
    %p180 = scmp.eq.s32.totalorder %s27, 1
    %p181 = por %p179, %p180
    %p182 = scmp.ne.s32.totalorder %s171, %s172
    %p183 = scmp.eq.s32.totalorder %s27, 0
    %p184 = por %p182, %p183
    %p185 = scmp.ne.s32.totalorder %s171, %s172
    %p186 = scmp.eq.s32.totalorder %s28, 1
    %p187 = por %p185, %p186
    %p189 = scmp.ne.s32.totalorder %s172, %s188
    %p190 = scmp.eq.s32.totalorder %s28, 0
    %p191 = por %p189, %p190
    %s192 = ssub.s32 %s22, %s29
    %p193 = scmp.eq.s32.totalorder %s192, 0
    %s195 = sadd.s32 %s194, 1
    %s196 = scalar_select %p193, %s194, %s195
    %p199 = pneg %p193
    %p200 = scmp.eq.s32.totalorder %s22, 1
    %p201 = por %p199, %p200
    %p202 = scmp.ne.s32.totalorder %s194, %s197
    %p203 = scmp.eq.s32.totalorder %s22, 0
    %p204 = por %p202, %p203
    %p205 = scmp.ne.s32.totalorder %s194, %s197
    %p206 = scmp.eq.s32.totalorder %s27, 1
    %p207 = por %p205, %p206
    %p208 = scmp.ne.s32.totalorder %s197, %s198
    %p209 = scmp.eq.s32.totalorder %s27, 0
    %p210 = por %p208, %p209
    %p211 = scmp.ne.s32.totalorder %s197, %s198
    %p212 = scmp.eq.s32.totalorder %s28, 1
    %p213 = por %p211, %p212
    %p215 = scmp.ne.s32.totalorder %s198, %s214
    %p216 = scmp.eq.s32.totalorder %s28, 0
    %p217 = por %p215, %p216
    %s218 = ssub.s32 %s22, %s29
    %p219 = scmp.eq.s32.totalorder %s218, 0
    %s221 = sadd.s32 %s220, 1
    %s222 = scalar_select %p219, %s220, %s221
    %p225 = pneg %p219
    %p226 = scmp.eq.s32.totalorder %s22, 1
    %p227 = por %p225, %p226
    %p228 = scmp.ne.s32.totalorder %s220, %s223
    %p229 = scmp.eq.s32.totalorder %s22, 0
    %p230 = por %p228, %p229
    %p231 = scmp.ne.s32.totalorder %s220, %s223
    %p232 = scmp.eq.s32.totalorder %s27, 1
    %p233 = por %p231, %p232
    %p234 = scmp.ne.s32.totalorder %s223, %s224
    %p235 = scmp.eq.s32.totalorder %s27, 0
    %p236 = por %p234, %p235
    %p237 = scmp.ne.s32.totalorder %s223, %s224
    %p238 = scmp.eq.s32.totalorder %s28, 1
    %p239 = por %p237, %p238
    %p241 = scmp.ne.s32.totalorder %s224, %s240
    %p242 = scmp.eq.s32.totalorder %s28, 0
    %p243 = por %p241, %p242
    %s244 = ssub.s32 %s22, %s29
    %p245 = scmp.eq.s32.totalorder %s244, 0
    %s247 = sadd.s32 %s246, 1
    %s248 = scalar_select %p245, %s246, %s247
    %p251 = pneg %p245
    %p252 = scmp.eq.s32.totalorder %s22, 1
    %p253 = por %p251, %p252
    %p254 = scmp.ne.s32.totalorder %s246, %s249
    %p255 = scmp.eq.s32.totalorder %s22, 0
    %p256 = por %p254, %p255
    %p257 = scmp.ne.s32.totalorder %s246, %s249
    %p258 = scmp.eq.s32.totalorder %s27, 1
    %p259 = por %p257, %p258
    %p260 = scmp.ne.s32.totalorder %s249, %s250
    %p261 = scmp.eq.s32.totalorder %s27, 0
    %p262 = por %p260, %p261
    %p263 = scmp.ne.s32.totalorder %s249, %s250
    %p264 = scmp.eq.s32.totalorder %s28, 1
    %p265 = por %p263, %p264
    %p267 = scmp.ne.s32.totalorder %s250, %s266
    %p268 = scmp.eq.s32.totalorder %s28, 0
    %p269 = por %p267, %p268
    %s270 = ssub.s32 %s22, %s29
    %p271 = scmp.eq.s32.totalorder %s270, 0
    %s273 = sadd.s32 %s272, 1
    %s274 = scalar_select %p271, %s272, %s273
    %p277 = pneg %p271
    %p278 = scmp.eq.s32.totalorder %s22, 1
    %p279 = por %p277, %p278
    %p280 = scmp.ne.s32.totalorder %s272, %s275
    %p281 = scmp.eq.s32.totalorder %s22, 0
    %p282 = por %p280, %p281
    %p283 = scmp.ne.s32.totalorder %s272, %s275
    %p284 = scmp.eq.s32.totalorder %s27, 1
    %p285 = por %p283, %p284
    %p286 = scmp.ne.s32.totalorder %s275, %s276
    %p287 = scmp.eq.s32.totalorder %s27, 0
    %p288 = por %p286, %p287
    %p289 = scmp.ne.s32.totalorder %s275, %s276
    %p290 = scmp.eq.s32.totalorder %s28, 1
    %p291 = por %p289, %p290
    %p293 = scmp.ne.s32.totalorder %s276, %s292
    %p294 = scmp.eq.s32.totalorder %s28, 0
    %p295 = por %p293, %p294
    %s296 = ssub.s32 %s22, %s29
    %p297 = scmp.eq.s32.totalorder %s296, 0
    %s299 = sadd.s32 %s298, 1
    %s300 = scalar_select %p297, %s298, %s299
    %p303 = pneg %p297
    %p304 = scmp.eq.s32.totalorder %s22, 1
    %p305 = por %p303, %p304
    %p306 = scmp.ne.s32.totalorder %s298, %s301
    %p307 = scmp.eq.s32.totalorder %s22, 0
    %p308 = por %p306, %p307
    %p309 = scmp.ne.s32.totalorder %s298, %s301
    %p310 = scmp.eq.s32.totalorder %s27, 1
    %p311 = por %p309, %p310
    %p312 = scmp.ne.s32.totalorder %s301, %s302
    %p313 = scmp.eq.s32.totalorder %s27, 0
    %p314 = por %p312, %p313
    %p315 = scmp.ne.s32.totalorder %s301, %s302
    %p316 = scmp.eq.s32.totalorder %s28, 1
    %p317 = por %p315, %p316
    %p319 = scmp.ne.s32.totalorder %s302, %s318
    %p320 = scmp.eq.s32.totalorder %s28, 0
    %p321 = por %p319, %p320
    %s323 = sadd.s32 %s322, 1
    %p326 = scmp.eq.s32.totalorder %s22, 1
    %p327 = scmp.ne.s32.totalorder %s322, %s324
    %p328 = scmp.eq.s32.totalorder %s22, 0
    %p329 = por %p327, %p328
    %p330 = scmp.ne.s32.totalorder %s322, %s324
    %p331 = scmp.eq.s32.totalorder %s27, 1
    %p332 = por %p330, %p331
    %p333 = scmp.ne.s32.totalorder %s324, %s325
    %p334 = scmp.eq.s32.totalorder %s27, 0
    %p335 = por %p333, %p334
    %p336 = scmp.ne.s32.totalorder %s324, %s325
    %p337 = scmp.eq.s32.totalorder %s28, 1
    %p338 = por %p336, %p337
    %p340 = scmp.ne.s32.totalorder %s325, %s339
    %p341 = scmp.eq.s32.totalorder %s28, 0
    %p342 = por %p340, %p341
    %s344 = sadd.s32 %s343, 1
    %p347 = scmp.eq.s32.totalorder %s22, 1
    %p348 = scmp.ne.s32.totalorder %s343, %s345
    %p349 = scmp.eq.s32.totalorder %s22, 0
    %p350 = por %p348, %p349
    %p351 = scmp.ne.s32.totalorder %s343, %s345
    %p352 = scmp.eq.s32.totalorder %s27, 1
    %p353 = por %p351, %p352
    %p354 = scmp.ne.s32.totalorder %s345, %s346
    %p355 = scmp.eq.s32.totalorder %s27, 0
    %p356 = por %p354, %p355
    %p357 = scmp.ne.s32.totalorder %s345, %s346
    %p358 = scmp.eq.s32.totalorder %s28, 1
    %p359 = por %p357, %p358
    %p361 = scmp.ne.s32.totalorder %s346, %s360
    %p362 = scmp.eq.s32.totalorder %s28, 0
    %p363 = por %p361, %p362
    %s365 = sadd.s32 %s364, 1
    %p368 = scmp.eq.s32.totalorder %s22, 1
    %p369 = scmp.ne.s32.totalorder %s364, %s366
    %p370 = scmp.eq.s32.totalorder %s22, 0
    %p371 = por %p369, %p370
    %p372 = scmp.ne.s32.totalorder %s364, %s366
    %p373 = scmp.eq.s32.totalorder %s27, 1
    %p374 = por %p372, %p373
    %p375 = scmp.ne.s32.totalorder %s366, %s367
    %p376 = scmp.eq.s32.totalorder %s27, 0
    %p377 = por %p375, %p376
    %p378 = scmp.ne.s32.totalorder %s366, %s367
    %p379 = scmp.eq.s32.totalorder %s28, 1
    %p380 = por %p378, %p379
    %p382 = scmp.ne.s32.totalorder %s367, %s381
    %p383 = scmp.eq.s32.totalorder %s28, 0
    %p384 = por %p382, %p383
    %s386 = sadd.s32 %s385, 1
    %p389 = scmp.eq.s32.totalorder %s22, 1
    %p390 = scmp.ne.s32.totalorder %s385, %s387
    %p391 = scmp.eq.s32.totalorder %s22, 0
    %p392 = por %p390, %p391
    %p393 = scmp.ne.s32.totalorder %s385, %s387
    %p394 = scmp.eq.s32.totalorder %s27, 1
    %p395 = por %p393, %p394
    %p396 = scmp.ne.s32.totalorder %s387, %s388
    %p397 = scmp.eq.s32.totalorder %s27, 0
    %p398 = por %p396, %p397
    %p399 = scmp.ne.s32.totalorder %s387, %s388
    %p400 = scmp.eq.s32.totalorder %s28, 1
    %p401 = por %p399, %p400
    %p403 = scmp.ne.s32.totalorder %s388, %s402
    %p404 = scmp.eq.s32.totalorder %s28, 0
    %p405 = por %p403, %p404
    %s406 = ssub.s32 %s22, %s29
    %p407 = scmp.eq.s32.totalorder %s406, 0
    %s409 = sadd.s32 %s408, 1
    %s410 = scalar_select %p407, %s408, %s409
    %p413 = pneg %p407
    %p414 = scmp.eq.s32.totalorder %s22, 1
    %p415 = por %p413, %p414
    %p416 = scmp.ne.s32.totalorder %s408, %s411
    %p417 = scmp.eq.s32.totalorder %s22, 0
    %p418 = por %p416, %p417
    %p419 = scmp.ne.s32.totalorder %s408, %s411
    %p420 = scmp.eq.s32.totalorder %s27, 1
    %p421 = por %p419, %p420
    %p422 = scmp.ne.s32.totalorder %s411, %s412
    %p423 = scmp.eq.s32.totalorder %s27, 0
    %p424 = por %p422, %p423
    %p425 = scmp.ne.s32.totalorder %s411, %s412
    %p426 = scmp.eq.s32.totalorder %s28, 1
    %p427 = por %p425, %p426
    %p429 = scmp.ne.s32.totalorder %s412, %s428
    %p430 = scmp.eq.s32.totalorder %s28, 0
    %p431 = por %p429, %p430
    %p432 = scmp.le.s32.totalorder 1, %s22
    %p433 = scmp.lt.s32.totalorder %s22, 3
    %p434 = pnand %p432, %p433
    %p435 = pneg %p434
    // Predicated region
    $region9: #{vicreg_forward.1} parent=5 // pred_check
      _
    $region10: #{vicreg_forward.1} parent=5 // pred_check_branch
      %437 = sbr.rel (%p434) target = $region12
    $region11: #{vicreg_forward.1} parent=5 // pred_region
      %s438 = ssub.s32 %s22, 1
      // Predicated region
      $region13: #{vicreg_forward.1} parent=11 // pred_check
        %p439 = pneg %p43
      $region14: #{vicreg_forward.1} parent=11 // pred_check_branch
        %441 = sbr.rel (%p439) target = $region16
      $region15: #{vicreg_forward.1} parent=11 // pred_region
        _
      $region16: #{vicreg_forward.1} parent=11 // pred_fallthru
        _
      // Predicated region
      $region17: #{vicreg_forward.1} parent=11 // pred_check
        %p442 = pneg %p64
      $region18: #{vicreg_forward.1} parent=11 // pred_check_branch
        %444 = sbr.rel (%p442) target = $region20
      $region19: #{vicreg_forward.1} parent=11 // pred_region
        _
      $region20: #{vicreg_forward.1} parent=11 // pred_fallthru
        _
      // Predicated region
      $region21: #{vicreg_forward.1} parent=11 // pred_check
        %p445 = pneg %p85
      $region22: #{vicreg_forward.1} parent=11 // pred_check_branch
        %447 = sbr.rel (%p445) target = $region24
      $region23: #{vicreg_forward.1} parent=11 // pred_region
        _
      $region24: #{vicreg_forward.1} parent=11 // pred_fallthru
        _
      // Predicated region
      $region25: #{vicreg_forward.1} parent=11 // pred_check
        %p448 = pneg %p106
      $region26: #{vicreg_forward.1} parent=11 // pred_check_branch
        %450 = sbr.rel (%p448) target = $region28
      $region27: #{vicreg_forward.1} parent=11 // pred_region
        _
      $region28: #{vicreg_forward.1} parent=11 // pred_fallthru
        _
      // Predicated region
      $region29: #{vicreg_forward.1} parent=11 // pred_check
        %p451 = pneg %p335
      $region30: #{vicreg_forward.1} parent=11 // pred_check_branch
        %453 = sbr.rel (%p451) target = $region32
      $region31: #{vicreg_forward.1} parent=11 // pred_region
        _
      $region32: #{vicreg_forward.1} parent=11 // pred_fallthru
        _
      // Predicated region
      $region33: #{vicreg_forward.1} parent=11 // pred_check
        %p454 = pneg %p356
      $region34: #{vicreg_forward.1} parent=11 // pred_check_branch
        %456 = sbr.rel (%p454) target = $region36
      $region35: #{vicreg_forward.1} parent=11 // pred_region
        _
      $region36: #{vicreg_forward.1} parent=11 // pred_fallthru
        _
      // Predicated region
      $region37: #{vicreg_forward.1} parent=11 // pred_check
        %p457 = pneg %p377
      $region38: #{vicreg_forward.1} parent=11 // pred_check_branch
        %459 = sbr.rel (%p457) target = $region40
      $region39: #{vicreg_forward.1} parent=11 // pred_region
        _
      $region40: #{vicreg_forward.1} parent=11 // pred_fallthru
        _
      // Predicated region
      $region41: #{vicreg_forward.1} parent=11 // pred_check
        %p460 = pneg %p398
      $region42: #{vicreg_forward.1} parent=11 // pred_check_branch
        %462 = sbr.rel (%p460) target = $region44
      $region43: #{vicreg_forward.1} parent=11 // pred_region
        _
      $region44: #{vicreg_forward.1} parent=11 // pred_fallthru
        _
    $region12: #{vicreg_forward.1} parent=5 // pred_fallthru
      _
    %p463 = scmp.lt.s32.totalorder %s22, 2
    // Predicated region
    $region45: #{vicreg_forward.1} parent=5 // pred_check
      %p464 = pneg %p463
    $region46: #{vicreg_forward.1} parent=5 // pred_check_branch
      %466 = sbr.rel (%p464) target = $region48
    $region47: #{vicreg_forward.1} parent=5 // pred_region
      // Predicated region
      $region49: #{vicreg_forward.1} parent=47 // pred_check
        %p467 = pneg %p126
      $region50: #{vicreg_forward.1} parent=47 // pred_check_branch
        %469 = sbr.rel (%p467) target = $region52
      $region51: #{vicreg_forward.1} parent=47 // pred_region
        %p470 = scmp.lt.s32.totalorder %s22, 1
        %s471 = scalar_select %p470, %s22, 1
        %s472 = smul.addr %s471, 2
        %s473 = smul.addr %s472, 8
        %s474 = scalar_lea.vmem %s4, %s473
      $region52: #{vicreg_forward.1} parent=47 // pred_fallthru
        _
      // Predicated region
      $region53: #{vicreg_forward.1} parent=47 // pred_check
        %p475 = pneg %p152
      $region54: #{vicreg_forward.1} parent=47 // pred_check_branch
        %477 = sbr.rel (%p475) target = $region56
      $region55: #{vicreg_forward.1} parent=47 // pred_region
        %p478 = scmp.lt.s32.totalorder %s22, 1
        %s479 = scalar_select %p478, %s22, 1
        %s480 = scalar_lea.vmem %s5, %s479
      $region56: #{vicreg_forward.1} parent=47 // pred_fallthru
        _
      // Predicated region
      $region57: #{vicreg_forward.1} parent=47 // pred_check
        %p481 = pneg %p178
      $region58: #{vicreg_forward.1} parent=47 // pred_check_branch
        %483 = sbr.rel (%p481) target = $region60
      $region59: #{vicreg_forward.1} parent=47 // pred_region
        %p484 = scmp.lt.s32.totalorder %s22, 1
        %s485 = scalar_select %p484, %s22, 1
        %s486 = smul.addr %s485, 36
        %s487 = smul.addr %s486, 8
        %s488 = scalar_lea.vmem %s6, %s487
      $region60: #{vicreg_forward.1} parent=47 // pred_fallthru
        _
      // Predicated region
      $region61: #{vicreg_forward.1} parent=47 // pred_check
        %p489 = pneg %p204
      $region62: #{vicreg_forward.1} parent=47 // pred_check_branch
        %491 = sbr.rel (%p489) target = $region64
      $region63: #{vicreg_forward.1} parent=47 // pred_region
        %p492 = scmp.lt.s32.totalorder %s22, 1
        %s493 = scalar_select %p492, %s22, 1
        %s494 = scalar_lea.vmem %s7, %s493
      $region64: #{vicreg_forward.1} parent=47 // pred_fallthru
        _
      // Predicated region
      $region65: #{vicreg_forward.1} parent=47 // pred_check
        %p495 = pneg %p230
      $region66: #{vicreg_forward.1} parent=47 // pred_check_branch
        %497 = sbr.rel (%p495) target = $region68
      $region67: #{vicreg_forward.1} parent=47 // pred_region
        %p498 = scmp.lt.s32.totalorder %s22, 1
        %s499 = scalar_select %p498, %s22, 1
        %s500 = smul.addr %s499, 72
        %s501 = smul.addr %s500, 8
        %s502 = scalar_lea.vmem %s8, %s501
      $region68: #{vicreg_forward.1} parent=47 // pred_fallthru
        _
      // Predicated region
      $region69: #{vicreg_forward.1} parent=47 // pred_check
        %p503 = pneg %p256
      $region70: #{vicreg_forward.1} parent=47 // pred_check_branch
        %505 = sbr.rel (%p503) target = $region72
      $region71: #{vicreg_forward.1} parent=47 // pred_region
        %p506 = scmp.lt.s32.totalorder %s22, 1
        %s507 = scalar_select %p506, %s22, 1
        %s508 = scalar_lea.vmem %s9, %s507
      $region72: #{vicreg_forward.1} parent=47 // pred_fallthru
        _
      // Predicated region
      $region73: #{vicreg_forward.1} parent=47 // pred_check
        %p509 = pneg %p282
      $region74: #{vicreg_forward.1} parent=47 // pred_check_branch
        %511 = sbr.rel (%p509) target = $region76
      $region75: #{vicreg_forward.1} parent=47 // pred_region
        %p512 = scmp.lt.s32.totalorder %s22, 1
        %s513 = scalar_select %p512, %s22, 1
        %s514 = smul.addr %s513, 64
        %s515 = smul.addr %s514, 8
        %s516 = scalar_lea.vmem %s10, %s515
      $region76: #{vicreg_forward.1} parent=47 // pred_fallthru
        _
      // Predicated region
      $region77: #{vicreg_forward.1} parent=47 // pred_check
        %p517 = pneg %p308
      $region78: #{vicreg_forward.1} parent=47 // pred_check_branch
        %519 = sbr.rel (%p517) target = $region80
      $region79: #{vicreg_forward.1} parent=47 // pred_region
        %p520 = scmp.lt.s32.totalorder %s22, 1
        %s521 = scalar_select %p520, %s22, 1
        %s522 = scalar_lea.vmem %s11, %s521
      $region80: #{vicreg_forward.1} parent=47 // pred_fallthru
        _
    $region48: #{vicreg_forward.1} parent=5 // pred_fallthru
      _
    %p523 = scmp.le.s32.totalorder 1, %s22
    %p524 = scmp.lt.s32.totalorder %s22, 3
    %p525 = pnand %p523, %p524
    %p526 = pneg %p525
    // Predicated region
    $region81: #{vicreg_forward.1} parent=5 // pred_check
      _
    $region82: #{vicreg_forward.1} parent=5 // pred_check_branch
      %528 = sbr.rel (%p525) target = $region84
    $region83: #{vicreg_forward.1} parent=5 // pred_region
      %s529 = ssub.s32 %s22, 1
      %p530 = pneg %p43
      %p531 = pneg %p40
      %p532 = pneg %p64
      %p533 = pneg %p61
      %p534 = pneg %p85
      %p535 = pneg %p82
      %p536 = pneg %p106
      %p537 = pneg %p103
      %p538 = scmp.lt.s32.totalorder %s27, 1
      %s539 = scalar_select %p538, %s27, 1
      %s540 = smul.addr %s539, 2
      %s541 = smul.addr %s540, 8
      %s542 = scalar_lea.vmem %s4, %s541
      %p543 = pneg %p132
      %p544 = pneg %p129
      %p545 = scmp.lt.s32.totalorder %s27, 1
      %s546 = scalar_select %p545, %s27, 1
      %s547 = scalar_lea.vmem %s5, %s546
      %p548 = pneg %p158
      %p549 = pneg %p155
      %p550 = scmp.lt.s32.totalorder %s27, 1
      %s551 = scalar_select %p550, %s27, 1
      %s552 = smul.addr %s551, 36
      %s553 = smul.addr %s552, 8
      %s554 = scalar_lea.vmem %s6, %s553
      %p555 = pneg %p184
      %p556 = pneg %p181
      %p557 = scmp.lt.s32.totalorder %s27, 1
      %s558 = scalar_select %p557, %s27, 1
      %s559 = scalar_lea.vmem %s7, %s558
      %p560 = pneg %p210
      %p561 = pneg %p207
      %p562 = scmp.lt.s32.totalorder %s27, 1
      %s563 = scalar_select %p562, %s27, 1
      %s564 = smul.addr %s563, 72
      %s565 = smul.addr %s564, 8
      %s566 = scalar_lea.vmem %s8, %s565
      %p567 = pneg %p236
      %p568 = pneg %p233
      %p569 = scmp.lt.s32.totalorder %s27, 1
      %s570 = scalar_select %p569, %s27, 1
      %s571 = scalar_lea.vmem %s9, %s570
      %p572 = pneg %p262
      %p573 = pneg %p259
      %p574 = scmp.lt.s32.totalorder %s27, 1
      %s575 = scalar_select %p574, %s27, 1
      %s576 = smul.addr %s575, 64
      %s577 = smul.addr %s576, 8
      %s578 = scalar_lea.vmem %s10, %s577
      %p579 = pneg %p288
      %p580 = pneg %p285
      %p581 = scmp.lt.s32.totalorder %s27, 1
      %s582 = scalar_select %p581, %s27, 1
      %s583 = scalar_lea.vmem %s11, %s582
      %p584 = pneg %p314
      %p585 = pneg %p311
      %p586 = pneg %p335
      %p587 = pneg %p332
      %p588 = pneg %p356
      %p589 = pneg %p353
      %p590 = pneg %p377
      %p591 = pneg %p374
      %p592 = pneg %p398
      %p593 = pneg %p395
      %p594 = pneg %p424
      %p595 = pneg %p421
      %p596 = scmp.lt.s32.totalorder %s27, 1
      %s597 = scalar_select %p596, %s27, 1
      %s598 = smul.addr %s597, 2
      %s599 = scalar_lea.vmem %s16, %s598
      %p600 = scmp.lt.s32.totalorder %s27, 1
      %s601 = scalar_select %p600, %s27, 1
      %s602 = smul.addr %s601, 2
      %s603 = smul.addr %s602, 8
      %s604 = scalar_lea.vmem %s4, %s603
      %p605 = scmp.lt.s32.totalorder %s27, 1
      %s606 = scalar_select %p605, %s27, 1
      %s607 = scalar_lea.vmem %s5, %s606
      %p608 = scmp.lt.s32.totalorder %s27, 1
      %s609 = scalar_select %p608, %s27, 1
      %s610 = smul.addr %s609, 36
      %s611 = smul.addr %s610, 8
      %s612 = scalar_lea.vmem %s6, %s611
      %p613 = scmp.lt.s32.totalorder %s27, 1
      %s614 = scalar_select %p613, %s27, 1
      %s615 = scalar_lea.vmem %s7, %s614
      %p616 = scmp.lt.s32.totalorder %s27, 1
      %s617 = scalar_select %p616, %s27, 1
      %s618 = smul.addr %s617, 72
      %s619 = smul.addr %s618, 8
      %s620 = scalar_lea.vmem %s8, %s619
      %p621 = scmp.lt.s32.totalorder %s27, 1
      %s622 = scalar_select %p621, %s27, 1
      %s623 = scalar_lea.vmem %s9, %s622
      %p624 = scmp.lt.s32.totalorder %s27, 1
      %s625 = scalar_select %p624, %s27, 1
      %s626 = smul.addr %s625, 64
      %s627 = smul.addr %s626, 8
      %s628 = scalar_lea.vmem %s10, %s627
      %p629 = scmp.lt.s32.totalorder %s27, 1
      %s630 = scalar_select %p629, %s27, 1
      %s631 = scalar_lea.vmem %s11, %s630
      %p632 = scmp.lt.s32.totalorder %s27, 1
      %s633 = scalar_select %p632, %s27, 1
      %s634 = smul.addr %s633, 2
      %s635 = scalar_lea.vmem %s16, %s634
      %v636 = vld [vmem:[%s0] sm:$0xff]
      %v637 = vld [vmem:[%s0 + $0x8] sm:$0xff]
      %v638 = vld [vmem:[%s0 + $0x10] sm:$0xff]
      %v639 = vld [vmem:[%s0 + $0x18] sm:$0xff]
      %v640 = vld [vmem:[%s0 + $0x20] sm:$0xff]
      %v641 = vld [vmem:[%s0 + $0x28] sm:$0xff]
      %v642 = vld [vmem:[%s0 + $0x30] sm:$0xff]
      %v643 = vld [vmem:[%s0 + $0x38] sm:$0xff]
      %v644 = vld [vmem:[%s0 + $0x40] sm:$0xff]
      %v645 = vld [vmem:[%s0 + $0x48] sm:$0xff]
      %v646 = vld [vmem:[%s0 + $0x50] sm:$0xff]
      %v647 = vld [vmem:[%s0 + $0x58] sm:$0xff]
      %v648 = vld [vmem:[%s0 + $0x60] sm:$0xff]
      %v649 = vld [vmem:[%s0 + $0x68] sm:$0xff]
      %v650 = vld [vmem:[%s0 + $0x70] sm:$0xff]
      %v651 = vld [vmem:[%s0 + $0x78] sm:$0xff]
      %v652 = vld [vmem:[%s604] sm:$0xff]
      %v653 = vld [vmem:[%s604 + $0x8] sm:$0x1]
      %v654 = vld [vmem:[%s607] sm:$0x1]
      %v656 = vlaneseq
      %v657 = vshrl.u32 %v656, 7
      %v658 = vsub.s32 0, %v657
      %v659 = vrot.slane %v654, %v658
      %vm661 = vcmask 72704
      %v663 = vsel %vm661, %v636, 0
      %v666 = vsel %vm661, %v637, 0
      %v669 = vsel %vm661, %v638, 0
      %v672 = vsel %vm661, %v639, 0
      %v675 = vsel %vm661, %v640, 0
      %v678 = vsel %vm661, %v641, 0
      %v681 = vsel %vm661, %v642, 0
      %v684 = vsel %vm661, %v643, 0
      %v687 = vsel %vm661, %v644, 0
      %v690 = vsel %vm661, %v645, 0
      %v693 = vsel %vm661, %v646, 0
      %v696 = vsel %vm661, %v647, 0
      %v699 = vsel %vm661, %v648, 0
      %v702 = vsel %vm661, %v649, 0
      %v705 = vsel %vm661, %v650, 0
      %v708 = vsel %vm661, %v651, 0
      %vm710 = vcmask 1040384
      %v712 = vsel %vm710, %v653, 0
      %714 = vmatprep.subr.mxu0 0.0
      %715 = vmatpush1.msra.mxu0 %v652
      %716 = vmatprep.subr.mxu0 0.0
      %717 = vmatpush1.msra.mxu0 %v712
      %718 = vmatprep.subr.mxu0 0.0
      %719 = vmatpush1.msra.mxu0 0.0
      %720 = vmatprep.subr.mxu0 0.0
      %721 = vmatpush1.msra.mxu0 0.0
      %722 = vmatprep.subr.mxu0 0.0
      %723 = vmatpush1.msra.mxu0 0.0
      %724 = vmatprep.subr.mxu0 0.0
      %725 = vmatpush1.msra.mxu0 0.0
      %726 = vmatprep.subr.mxu0 0.0
      %727 = vmatpush1.msra.mxu0 0.0
      %728 = vmatprep.subr.mxu0 0.0
      %729 = vmatpush1.msra.mxu0 0.0
      %730 = vmatprep.subr.mxu0 0.0
      %731 = vmatpush1.msra.mxu0 0.0
      %732 = vmatprep.subr.mxu0 0.0
      %733 = vmatpush1.msra.mxu0 0.0
      %734 = vmatprep.subr.mxu0 0.0
      %735 = vmatpush1.msra.mxu0 0.0
      %736 = vmatprep.subr.mxu0 0.0
      %737 = vmatpush1.msra.mxu0 0.0
      %738 = vmatprep.subr.mxu0 0.0
      %739 = vmatpush1.msra.mxu0 0.0
      %740 = vmatprep.subr.mxu0 0.0
      %741 = vmatpush1.msra.mxu0 0.0
      %742 = vmatprep.subr.mxu0 0.0
      %743 = vmatpush1.msra.mxu0 0.0
      %744 = vmatprep.subr.mxu0 0.0
      %745 = vmatpush1.msra.mxu0 0.0
      %746 = vmatprep.subr.mxu0 0.0
      %747 = vmatpush1.msra.mxu0 0.0
      %748 = vmatprep.subr.mxu0 0.0
      %749 = vmatpush1.msra.mxu0 0.0
      %750 = vmatprep.subr.mxu0 0.0
      %751 = vmatpush1.msra.mxu0 0.0
      %752 = vmatprep.subr.mxu0 0.0
      %753 = vmatpush1.msra.mxu0 0.0
      %754 = vmatprep.subr.mxu0 0.0
      %755 = vmatpush1.msra.mxu0 0.0
      %756 = vmatprep.subr.mxu0 0.0
      %757 = vmatpush1.msra.mxu0 0.0
      %758 = vmatprep.subr.mxu0 0.0
      %759 = vmatpush1.msra.mxu0 0.0
      %760 = vmatprep.subr.mxu0 0.0
      %761 = vmatpush1.msra.mxu0 0.0
      %762 = vmatprep.subr.mxu0 0.0
      %763 = vmatpush1.msra.mxu0 0.0
      %764 = vmatprep.subr.mxu0 0.0
      %765 = vmatpush1.msra.mxu0 0.0
      %766 = vmatprep.subr.mxu0 0.0
      %767 = vmatpush1.msra.mxu0 0.0
      %768 = vmatprep.subr.mxu0 0.0
      %769 = vmatpush1.msra.mxu0 0.0
      %770 = vmatprep.subr.mxu0 0.0
      %771 = vmatpush1.msra.mxu0 0.0
      %772 = vmatprep.subr.mxu0 0.0
      %773 = vmatpush1.msra.mxu0 0.0
      %774 = vmatprep.subr.mxu0 0.0
      %775 = vmatpush1.msra.mxu0 0.0
      %776 = vmatprep.subr.mxu0 0.0
      %777 = vmatpush1.msra.mxu0 0.0
      %778 = vmatprep.mubr.f32.mxu0 0.0
      %779 = vmatmul.mubr.f32.gmra.mrb[0].mxu0 %v663
      %v780 = vpop.f32.mrb[0].mxu0
      %v781 = vadd.f32 %v659, %v780
      %v782 = vpop.f32.mrb[0].mxu0
      %783 = vmatprep.mubr.f32.mxu0 0.0
      %784 = vmatmul.mubr.f32.gmra.mrb[0].mxu0 %v666
      %v785 = vpop.f32.mrb[0].mxu0
      %v786 = vadd.f32 %v659, %v785
      %v787 = vpop.f32.mrb[0].mxu0
      %788 = vmatprep.mubr.f32.mxu0 0.0
      %789 = vmatmul.mubr.f32.gmra.mrb[0].mxu0 %v669
      %v790 = vpop.f32.mrb[0].mxu0
      %v791 = vadd.f32 %v659, %v790
      %v792 = vpop.f32.mrb[0].mxu0
      %793 = vmatprep.mubr.f32.mxu0 0.0
      %794 = vmatmul.mubr.f32.gmra.mrb[0].mxu0 %v672
      %v795 = vpop.f32.mrb[0].mxu0
      %v796 = vadd.f32 %v659, %v795
      %v797 = vpop.f32.mrb[0].mxu0
      %798 = vmatprep.mubr.f32.mxu0 0.0
      %799 = vmatmul.mubr.f32.gmra.mrb[0].mxu0 %v675
      %v800 = vpop.f32.mrb[0].mxu0
      %v801 = vadd.f32 %v659, %v800
      %v802 = vpop.f32.mrb[0].mxu0
      %803 = vmatprep.mubr.f32.mxu0 0.0
      %804 = vmatmul.mubr.f32.gmra.mrb[0].mxu0 %v678
      %v805 = vpop.f32.mrb[0].mxu0
      %v806 = vadd.f32 %v659, %v805
      %v807 = vpop.f32.mrb[0].mxu0
      %808 = vmatprep.mubr.f32.mxu0 0.0
      %809 = vmatmul.mubr.f32.gmra.mrb[0].mxu0 %v681
      %v810 = vpop.f32.mrb[0].mxu0
      %v811 = vadd.f32 %v659, %v810
      %v812 = vpop.f32.mrb[0].mxu0
      %813 = vmatprep.mubr.f32.mxu0 0.0
      %814 = vmatmul.mubr.f32.gmra.mrb[0].mxu0 %v684
      %v815 = vpop.f32.mrb[0].mxu0
      %v816 = vadd.f32 %v659, %v815
      %v817 = vpop.f32.mrb[0].mxu0
      %818 = vmatprep.mubr.f32.mxu0 0.0
      %819 = vmatmul.mubr.f32.gmra.mrb[0].mxu0 %v687
      %v820 = vpop.f32.mrb[0].mxu0
      %v821 = vadd.f32 %v659, %v820
      %v822 = vpop.f32.mrb[0].mxu0
      %823 = vmatprep.mubr.f32.mxu0 0.0
      %824 = vmatmul.mubr.f32.gmra.mrb[0].mxu0 %v690
      %v825 = vpop.f32.mrb[0].mxu0
      %v826 = vadd.f32 %v659, %v825
      %v827 = vpop.f32.mrb[0].mxu0
      %828 = vmatprep.mubr.f32.mxu0 0.0
      %829 = vmatmul.mubr.f32.gmra.mrb[0].mxu0 %v693
      %v830 = vpop.f32.mrb[0].mxu0
      %v831 = vadd.f32 %v659, %v830
      %v832 = vpop.f32.mrb[0].mxu0
      %833 = vmatprep.mubr.f32.mxu0 0.0
      %834 = vmatmul.mubr.f32.gmra.mrb[0].mxu0 %v696
      %v835 = vpop.f32.mrb[0].mxu0
      %v836 = vadd.f32 %v659, %v835
      %v837 = vpop.f32.mrb[0].mxu0
      %838 = vmatprep.mubr.f32.mxu0 0.0
      %839 = vmatmul.mubr.f32.gmra.mrb[0].mxu0 %v699
      %v840 = vpop.f32.mrb[0].mxu0
      %v841 = vadd.f32 %v659, %v840
      %v842 = vpop.f32.mrb[0].mxu0
      %843 = vmatprep.mubr.f32.mxu0 0.0
      %844 = vmatmul.mubr.f32.gmra.mrb[0].mxu0 %v702
      %v845 = vpop.f32.mrb[0].mxu0
      %v846 = vadd.f32 %v659, %v845
      %v847 = vpop.f32.mrb[0].mxu0
      %848 = vmatprep.mubr.f32.mxu0 0.0
      %849 = vmatmul.mubr.f32.gmra.mrb[0].mxu0 %v705
      %v850 = vpop.f32.mrb[0].mxu0
      %v851 = vadd.f32 %v659, %v850
      %v852 = vpop.f32.mrb[0].mxu0
      %853 = vmatprep.mubr.f32.mxu0 0.0
      %854 = vmatmul.mubr.f32.gmra.mrb[0].mxu0 %v708
      %v855 = vpop.f32.mrb[0].mxu0
      %v856 = vadd.f32 %v659, %v855
      %v857 = vpop.f32.mrb[0].mxu0
      %858 = vdwg.mxu0
      %v859 = vmul.f32 %v781, 0.5
      %v860 = vmul.f32 %v786, 0.5
      %v861 = vmul.f32 %v791, 0.5
      %v862 = vmul.f32 %v796, 0.5
      %v863 = vmul.f32 %v801, 0.5
      %v864 = vmul.f32 %v806, 0.5
      %v865 = vmul.f32 %v811, 0.5
      %v866 = vmul.f32 %v816, 0.5
      %v867 = vmul.f32 %v821, 0.5
      %v868 = vmul.f32 %v826, 0.5
      %v869 = vmul.f32 %v831, 0.5
      %v870 = vmul.f32 %v836, 0.5
      %v871 = vmul.f32 %v841, 0.5
      %v872 = vmul.f32 %v846, 0.5
      %v873 = vmul.f32 %v851, 0.5
      %v874 = vmul.f32 %v856, 0.5
      %v875 = vmul.f32 %v781, 0.70710677
      %v876 = vmul.f32 %v786, 0.70710677
      %v877 = vmul.f32 %v791, 0.70710677
      %v878 = vmul.f32 %v796, 0.70710677
      %v879 = vmul.f32 %v801, 0.70710677
      %v880 = vmul.f32 %v806, 0.70710677
      %v881 = vmul.f32 %v811, 0.70710677
      %v882 = vmul.f32 %v816, 0.70710677
      %v883 = vmul.f32 %v821, 0.70710677
      %v884 = vmul.f32 %v826, 0.70710677
      %v885 = vmul.f32 %v831, 0.70710677
      %v886 = vmul.f32 %v836, 0.70710677
      %v887 = vmul.f32 %v841, 0.70710677
      %v888 = vmul.f32 %v846, 0.70710677
      %v889 = vmul.f32 %v851, 0.70710677
      %v890 = vmul.f32 %v856, 0.70710677
      %v891 = verf.f32.pop %v875
      %v892 = verf.f32.pop %v876
      %v893 = verf.f32.pop %v877
      %v894 = verf.f32.pop %v878
      %v895 = verf.f32.pop %v879
      %v896 = verf.f32.pop %v880
      %v897 = verf.f32.pop %v881
      %v898 = verf.f32.pop %v882
      %v899 = verf.f32.pop %v883
      %v900 = verf.f32.pop %v884
      %v901 = verf.f32.pop %v885
      %v902 = verf.f32.pop %v886
      %v903 = verf.f32.pop %v887
      %v904 = verf.f32.pop %v888
      %v905 = verf.f32.pop %v889
      %v906 = verf.f32.pop %v890
      %v907 = vadd.f32 %v891, 1.0
      %v908 = vadd.f32 %v892, 1.0
      %v909 = vadd.f32 %v893, 1.0
      %v910 = vadd.f32 %v894, 1.0
      %v911 = vadd.f32 %v895, 1.0
      %v912 = vadd.f32 %v896, 1.0
      %v913 = vadd.f32 %v897, 1.0
      %v914 = vadd.f32 %v898, 1.0
      %v915 = vadd.f32 %v899, 1.0
      %v916 = vadd.f32 %v900, 1.0
      %v917 = vadd.f32 %v901, 1.0
      %v918 = vadd.f32 %v902, 1.0
      %v919 = vadd.f32 %v903, 1.0
      %v920 = vadd.f32 %v904, 1.0
      %v921 = vadd.f32 %v905, 1.0
      %v922 = vadd.f32 %v906, 1.0
      %v923 = vmul.f32 %v859, %v907
      %v924 = vmul.f32 %v860, %v908
      %v925 = vmul.f32 %v861, %v909
      %v926 = vmul.f32 %v862, %v910
      %v927 = vmul.f32 %v863, %v911
      %v928 = vmul.f32 %v864, %v912
      %v929 = vmul.f32 %v865, %v913
      %v930 = vmul.f32 %v866, %v914
      %v931 = vmul.f32 %v867, %v915
      %v932 = vmul.f32 %v868, %v916
      %v933 = vmul.f32 %v869, %v917
      %v934 = vmul.f32 %v870, %v918
      %v935 = vmul.f32 %v871, %v919
      %v936 = vmul.f32 %v872, %v920
      %v937 = vmul.f32 %v873, %v921
      %v938 = vmul.f32 %v874, %v922
      %v939 = vld [vmem:[%s1] sm:$0xff]
      %v940 = vld [vmem:[%s1 + $0x8] sm:$0xff]
      %v941 = vld [vmem:[%s1 + $0x10] sm:$0xff]
      %v942 = vld [vmem:[%s1 + $0x18] sm:$0xff]
      %943 = vmatprep.subr.mxu0 0.0
      %944 = vmatpush1.msra.mxu0 %v923
      %945 = vmatprep.subr.mxu0 0.0
      %946 = vmatpush1.msra.mxu0 %v924
      %947 = vmatprep.subr.mxu0 0.0
      %948 = vmatpush1.msra.mxu0 %v925
      %949 = vmatprep.subr.mxu0 0.0
      %950 = vmatpush1.msra.mxu0 %v926
      %951 = vmatprep.subr.mxu0 0.0
      %952 = vmatpush1.msra.mxu0 %v927
      %953 = vmatprep.subr.mxu0 0.0
      %954 = vmatpush1.msra.mxu0 %v928
      %955 = vmatprep.subr.mxu0 0.0
      %956 = vmatpush1.msra.mxu0 %v929
      %957 = vmatprep.subr.mxu0 0.0
      %958 = vmatpush1.msra.mxu0 %v930
      %959 = vmatprep.subr.mxu0 0.0
      %960 = vmatpush1.msra.mxu0 %v931
      %961 = vmatprep.subr.mxu0 0.0
      %962 = vmatpush1.msra.mxu0 %v932
      %963 = vmatprep.subr.mxu0 0.0
      %964 = vmatpush1.msra.mxu0 %v933
      %965 = vmatprep.subr.mxu0 0.0
      %966 = vmatpush1.msra.mxu0 %v934
      %967 = vmatprep.subr.mxu0 0.0
      %968 = vmatpush1.msra.mxu0 %v935
      %969 = vmatprep.subr.mxu0 0.0
      %970 = vmatpush1.msra.mxu0 %v936
      %971 = vmatprep.subr.mxu0 0.0
      %972 = vmatpush1.msra.mxu0 %v937
      %973 = vmatprep.subr.mxu0 0.0
      %974 = vmatpush1.msra.mxu0 %v938
      %975 = vmatprep.subr.mxu0 0.0
      %976 = vmatpush1.msra.mxu0 0.0
      %977 = vmatprep.subr.mxu0 0.0
      %978 = vmatpush1.msra.mxu0 0.0
      %979 = vmatprep.subr.mxu0 0.0
      %980 = vmatpush1.msra.mxu0 0.0
      %981 = vmatprep.subr.mxu0 0.0
      %982 = vmatpush1.msra.mxu0 0.0
      %983 = vmatprep.subr.mxu0 0.0
      %984 = vmatpush1.msra.mxu0 0.0
      %985 = vmatprep.subr.mxu0 0.0
      %986 = vmatpush1.msra.mxu0 0.0
      %987 = vmatprep.subr.mxu0 0.0
      %988 = vmatpush1.msra.mxu0 0.0
      %989 = vmatprep.subr.mxu0 0.0
      %990 = vmatpush1.msra.mxu0 0.0
      %991 = vmatprep.subr.mxu0 0.0
      %992 = vmatpush1.msra.mxu0 0.0
      %993 = vmatprep.subr.mxu0 0.0
      %994 = vmatpush1.msra.mxu0 0.0
      %995 = vmatprep.subr.mxu0 0.0
      %996 = vmatpush1.msra.mxu0 0.0
      %997 = vmatprep.subr.mxu0 0.0
      %998 = vmatpush1.msra.mxu0 0.0
      %999 = vmatprep.subr.mxu0 0.0
      %1000 = vmatpush1.msra.mxu0 0.0
      %1001 = vmatprep.subr.mxu0 0.0
      %1002 = vmatpush1.msra.mxu0 0.0
      %1003 = vmatprep.subr.mxu0 0.0
      %1004 = vmatpush1.msra.mxu0 0.0
      %1005 = vmatprep.subr.mxu0 0.0
      %1006 = vmatpush1.msra.mxu0 0.0
      %1007 = vmatprep.mubr.f32.mxu0 0.0
      %1008 = vmatmul.mubr.f32.gmra.mrb[0].mxu0 %v939
      %v1009 = vpop.f32.mrb[0].mxu0
      %v1010 = vadd.f32 0.0, %v1009
      %v1011 = vpop.f32.mrb[0].mxu0
      %1012 = vmatprep.mubr.f32.mxu0 0.0
      %1013 = vmatmul.mubr.f32.gmra.mrb[0].mxu0 %v940
      %v1014 = vpop.f32.mrb[0].mxu0
      %v1015 = vadd.f32 0.0, %v1014
      %v1016 = vpop.f32.mrb[0].mxu0
      %1017 = vmatprep.mubr.f32.mxu0 0.0
      %1018 = vmatmul.mubr.f32.gmra.mrb[0].mxu0 %v941
      %v1019 = vpop.f32.mrb[0].mxu0
      %v1020 = vadd.f32 0.0, %v1019
      %v1021 = vpop.f32.mrb[0].mxu0
      %1022 = vmatprep.mubr.f32.mxu0 0.0
      %1023 = vmatmul.mubr.f32.gmra.mrb[0].mxu0 %v942
      %v1024 = vpop.f32.mrb[0].mxu0
      %v1025 = vadd.f32 0.0, %v1024
      %v1026 = vpop.f32.mrb[0].mxu0
      %1027 = vdwg.mxu0
      %v1028 = vld [vmem:[%s612] sm:$0xff]
      %v1029 = vld [vmem:[%s612 + $0x8] sm:$0xff]
      %v1030 = vld [vmem:[%s612 + $0x10] sm:$0xff]
      %v1031 = vld [vmem:[%s612 + $0x18] sm:$0xff]
      %s1032 = scalar_lea.vmem %s1, 32
      %v1033 = vld [vmem:[%s1032] sm:$0xff]
      %v1034 = vld [vmem:[%s1032 + $0x8] sm:$0xff]
      %v1035 = vld [vmem:[%s1032 + $0x10] sm:$0xff]
      %v1036 = vld [vmem:[%s1032 + $0x18] sm:$0xff]
      %1037 = vmatprep.subr.mxu0 0.0
      %1038 = vmatpush1.msra.mxu0 %v923
      %1039 = vmatprep.subr.mxu0 0.0
      %1040 = vmatpush1.msra.mxu0 %v924
      %1041 = vmatprep.subr.mxu0 0.0
      %1042 = vmatpush1.msra.mxu0 %v925
      %1043 = vmatprep.subr.mxu0 0.0
      %1044 = vmatpush1.msra.mxu0 %v926
      %1045 = vmatprep.subr.mxu0 0.0
      %1046 = vmatpush1.msra.mxu0 %v927
      %1047 = vmatprep.subr.mxu0 0.0
      %1048 = vmatpush1.msra.mxu0 %v928
      %1049 = vmatprep.subr.mxu0 0.0
      %1050 = vmatpush1.msra.mxu0 %v929
      %1051 = vmatprep.subr.mxu0 0.0
      %1052 = vmatpush1.msra.mxu0 %v930
      %1053 = vmatprep.subr.mxu0 0.0
      %1054 = vmatpush1.msra.mxu0 %v931
      %1055 = vmatprep.subr.mxu0 0.0
      %1056 = vmatpush1.msra.mxu0 %v932
      %1057 = vmatprep.subr.mxu0 0.0
      %1058 = vmatpush1.msra.mxu0 %v933
      %1059 = vmatprep.subr.mxu0 0.0
      %1060 = vmatpush1.msra.mxu0 %v934
      %1061 = vmatprep.subr.mxu0 0.0
      %1062 = vmatpush1.msra.mxu0 %v935
      %1063 = vmatprep.subr.mxu0 0.0
      %1064 = vmatpush1.msra.mxu0 %v936
      %1065 = vmatprep.subr.mxu0 0.0
      %1066 = vmatpush1.msra.mxu0 %v937
      %1067 = vmatprep.subr.mxu0 0.0
      %1068 = vmatpush1.msra.mxu0 %v938
      %1069 = vmatprep.subr.mxu0 0.0
      %1070 = vmatpush1.msra.mxu0 0.0
      %1071 = vmatprep.subr.mxu0 0.0
      %1072 = vmatpush1.msra.mxu0 0.0
      %1073 = vmatprep.subr.mxu0 0.0
      %1074 = vmatpush1.msra.mxu0 0.0
      %1075 = vmatprep.subr.mxu0 0.0
      %1076 = vmatpush1.msra.mxu0 0.0
      %1077 = vmatprep.subr.mxu0 0.0
      %1078 = vmatpush1.msra.mxu0 0.0
      %1079 = vmatprep.subr.mxu0 0.0
      %1080 = vmatpush1.msra.mxu0 0.0
      %1081 = vmatprep.subr.mxu0 0.0
      %1082 = vmatpush1.msra.mxu0 0.0
      %1083 = vmatprep.subr.mxu0 0.0
      %1084 = vmatpush1.msra.mxu0 0.0
      %1085 = vmatprep.subr.mxu0 0.0
      %1086 = vmatpush1.msra.mxu0 0.0
      %1087 = vmatprep.subr.mxu0 0.0
      %1088 = vmatpush1.msra.mxu0 0.0
      %1089 = vmatprep.subr.mxu0 0.0
      %1090 = vmatpush1.msra.mxu0 0.0
      %1091 = vmatprep.subr.mxu0 0.0
      %1092 = vmatpush1.msra.mxu0 0.0
      %1093 = vmatprep.subr.mxu0 0.0
      %1094 = vmatpush1.msra.mxu0 0.0
      %1095 = vmatprep.subr.mxu0 0.0
      %1096 = vmatpush1.msra.mxu0 0.0
      %1097 = vmatprep.subr.mxu0 0.0
      %1098 = vmatpush1.msra.mxu0 0.0
      %1099 = vmatprep.subr.mxu0 0.0
      %1100 = vmatpush1.msra.mxu0 0.0
      %1101 = vmatprep.mubr.f32.mxu0 0.0
      %1102 = vmatmul.mubr.f32.gmra.mrb[0].mxu0 %v1033
      %v1103 = vpop.f32.mrb[0].mxu0
      %v1104 = vadd.f32 0.0, %v1103
      %v1105 = vpop.f32.mrb[0].mxu0
      %1106 = vmatprep.mubr.f32.mxu0 0.0
      %1107 = vmatmul.mubr.f32.gmra.mrb[0].mxu0 %v1034
      %v1108 = vpop.f32.mrb[0].mxu0
      %v1109 = vadd.f32 0.0, %v1108
      %v1110 = vpop.f32.mrb[0].mxu0
      %1111 = vmatprep.mubr.f32.mxu0 0.0
      %1112 = vmatmul.mubr.f32.gmra.mrb[0].mxu0 %v1035
      %v1113 = vpop.f32.mrb[0].mxu0
      %v1114 = vadd.f32 0.0, %v1113
      %v1115 = vpop.f32.mrb[0].mxu0
      %1116 = vmatprep.mubr.f32.mxu0 0.0
      %1117 = vmatmul.mubr.f32.gmra.mrb[0].mxu0 %v1036
      %v1118 = vpop.f32.mrb[0].mxu0
      %v1119 = vadd.f32 0.0, %v1118
      %v1120 = vpop.f32.mrb[0].mxu0
      %1121 = vdwg.mxu0
      %s1122 = scalar_lea.vmem %s612, 32
      %v1123 = vld [vmem:[%s1122] sm:$0xff]
      %v1124 = vld [vmem:[%s1122 + $0x8] sm:$0xff]
      %v1125 = vld [vmem:[%s1122 + $0x10] sm:$0xff]
      %v1126 = vld [vmem:[%s1122 + $0x18] sm:$0xff]
      %vm1127 = vcmask 261120
      %v1129 = vsel %vm1127, %v1104, 0
      %v1132 = vsel %vm1127, %v1109, 0
      %v1135 = vsel %vm1127, %v1114, 0
      %v1138 = vsel %vm1127, %v1119, 0
      %1140 = vmatprep.subr.mxu0 0.0
      %1141 = vmatpush1.msra.mxu0 %v1123
      %1142 = vmatprep.subr.mxu0 0.0
      %1143 = vmatpush1.msra.mxu0 %v1124
      %1144 = vmatprep.subr.mxu0 0.0
      %1145 = vmatpush1.msra.mxu0 %v1125
      %1146 = vmatprep.subr.mxu0 0.0
      %1147 = vmatpush1.msra.mxu0 %v1126
      %1148 = vmatprep.subr.mxu0 0.0
      %1149 = vmatpush1.msra.mxu0 0.0
      %1150 = vmatprep.subr.mxu0 0.0
      %1151 = vmatpush1.msra.mxu0 0.0
      %1152 = vmatprep.subr.mxu0 0.0
      %1153 = vmatpush1.msra.mxu0 0.0
      %1154 = vmatprep.subr.mxu0 0.0
      %1155 = vmatpush1.msra.mxu0 0.0
      %1156 = vmatprep.subr.mxu0 0.0
      %1157 = vmatpush1.msra.mxu0 0.0
      %1158 = vmatprep.subr.mxu0 0.0
      %1159 = vmatpush1.msra.mxu0 0.0
      %1160 = vmatprep.subr.mxu0 0.0
      %1161 = vmatpush1.msra.mxu0 0.0
      %1162 = vmatprep.subr.mxu0 0.0
      %1163 = vmatpush1.msra.mxu0 0.0
      %1164 = vmatprep.subr.mxu0 0.0
      %1165 = vmatpush1.msra.mxu0 0.0
      %1166 = vmatprep.subr.mxu0 0.0
      %1167 = vmatpush1.msra.mxu0 0.0
      %1168 = vmatprep.subr.mxu0 0.0
      %1169 = vmatpush1.msra.mxu0 0.0
      %1170 = vmatprep.subr.mxu0 0.0
      %1171 = vmatpush1.msra.mxu0 0.0
      %1172 = vmatprep.subr.mxu0 0.0
      %1173 = vmatpush1.msra.mxu0 0.0
      %1174 = vmatprep.subr.mxu0 0.0
      %1175 = vmatpush1.msra.mxu0 0.0
      %1176 = vmatprep.subr.mxu0 0.0
      %1177 = vmatpush1.msra.mxu0 0.0
      %1178 = vmatprep.subr.mxu0 0.0
      %1179 = vmatpush1.msra.mxu0 0.0
      %1180 = vmatprep.subr.mxu0 0.0
      %1181 = vmatpush1.msra.mxu0 0.0
      %1182 = vmatprep.subr.mxu0 0.0
      %1183 = vmatpush1.msra.mxu0 0.0
      %1184 = vmatprep.subr.mxu0 0.0
      %1185 = vmatpush1.msra.mxu0 0.0
      %1186 = vmatprep.subr.mxu0 0.0
      %1187 = vmatpush1.msra.mxu0 0.0
      %1188 = vmatprep.subr.mxu0 0.0
      %1189 = vmatpush1.msra.mxu0 0.0
      %1190 = vmatprep.subr.mxu0 0.0
      %1191 = vmatpush1.msra.mxu0 0.0
      %1192 = vmatprep.subr.mxu0 0.0
      %1193 = vmatpush1.msra.mxu0 0.0
      %1194 = vmatprep.subr.mxu0 0.0
      %1195 = vmatpush1.msra.mxu0 0.0
      %1196 = vmatprep.subr.mxu0 0.0
      %1197 = vmatpush1.msra.mxu0 0.0
      %1198 = vmatprep.subr.mxu0 0.0
      %1199 = vmatpush1.msra.mxu0 0.0
      %1200 = vmatprep.subr.mxu0 0.0
      %1201 = vmatpush1.msra.mxu0 0.0
      %1202 = vmatprep.subr.mxu0 0.0
      %1203 = vmatpush1.msra.mxu0 0.0
      %1204 = vmatprep.mubr.f32.mxu0 0.0
      %1205 = vmatmul.mubr.f32.gmra.mrb[0].mxu0 %v1129
      %v1206 = vpop.f32.mrb[0].mxu0
      %v1207 = vadd.f32 0.0, %v1206
      %v1208 = vpop.f32.mrb[0].mxu0
      %1209 = vmatprep.mubr.f32.mxu0 0.0
      %1210 = vmatmul.mubr.f32.gmra.mrb[0].mxu0 %v1132
      %v1211 = vpop.f32.mrb[0].mxu0
      %v1212 = vadd.f32 0.0, %v1211
      %v1213 = vpop.f32.mrb[0].mxu0
      %1214 = vmatprep.mubr.f32.mxu0 0.0
      %1215 = vmatmul.mubr.f32.gmra.mrb[0].mxu0 %v1135
      %v1216 = vpop.f32.mrb[0].mxu0
      %v1217 = vadd.f32 0.0, %v1216
      %v1218 = vpop.f32.mrb[0].mxu0
      %1219 = vmatprep.mubr.f32.mxu0 0.0
      %1220 = vmatmul.mubr.f32.gmra.mrb[0].mxu0 %v1138
      %v1221 = vpop.f32.mrb[0].mxu0
      %v1222 = vadd.f32 0.0, %v1221
      %v1223 = vpop.f32.mrb[0].mxu0
      %1224 = vdwg.mxu0
      %v1226 = vsel %vm1127, %v1010, 0
      %v1229 = vsel %vm1127, %v1015, 0
      %v1232 = vsel %vm1127, %v1020, 0
      %v1235 = vsel %vm1127, %v1025, 0
      %1237 = vmatprep.subr.mxu0 0.0
      %1238 = vmatpush1.msra.mxu0 %v1028
      %1239 = vmatprep.subr.mxu0 0.0
      %1240 = vmatpush1.msra.mxu0 %v1029
      %1241 = vmatprep.subr.mxu0 0.0
      %1242 = vmatpush1.msra.mxu0 %v1030
      %1243 = vmatprep.subr.mxu0 0.0
      %1244 = vmatpush1.msra.mxu0 %v1031
      %1245 = vmatprep.subr.mxu0 0.0
      %1246 = vmatpush1.msra.mxu0 0.0
      %1247 = vmatprep.subr.mxu0 0.0
      %1248 = vmatpush1.msra.mxu0 0.0
      %1249 = vmatprep.subr.mxu0 0.0
      %1250 = vmatpush1.msra.mxu0 0.0
      %1251 = vmatprep.subr.mxu0 0.0
      %1252 = vmatpush1.msra.mxu0 0.0
      %1253 = vmatprep.subr.mxu0 0.0
      %1254 = vmatpush1.msra.mxu0 0.0
      %1255 = vmatprep.subr.mxu0 0.0
      %1256 = vmatpush1.msra.mxu0 0.0
      %1257 = vmatprep.subr.mxu0 0.0
      %1258 = vmatpush1.msra.mxu0 0.0
      %1259 = vmatprep.subr.mxu0 0.0
      %1260 = vmatpush1.msra.mxu0 0.0
      %1261 = vmatprep.subr.mxu0 0.0
      %1262 = vmatpush1.msra.mxu0 0.0
      %1263 = vmatprep.subr.mxu0 0.0
      %1264 = vmatpush1.msra.mxu0 0.0
      %1265 = vmatprep.subr.mxu0 0.0
      %1266 = vmatpush1.msra.mxu0 0.0
      %1267 = vmatprep.subr.mxu0 0.0
      %1268 = vmatpush1.msra.mxu0 0.0
      %1269 = vmatprep.subr.mxu0 0.0
      %1270 = vmatpush1.msra.mxu0 0.0
      %1271 = vmatprep.subr.mxu0 0.0
      %1272 = vmatpush1.msra.mxu0 0.0
      %1273 = vmatprep.subr.mxu0 0.0
      %1274 = vmatpush1.msra.mxu0 0.0
      %1275 = vmatprep.subr.mxu0 0.0
      %1276 = vmatpush1.msra.mxu0 0.0
      %1277 = vmatprep.subr.mxu0 0.0
      %1278 = vmatpush1.msra.mxu0 0.0
      %1279 = vmatprep.subr.mxu0 0.0
      %1280 = vmatpush1.msra.mxu0 0.0
      %1281 = vmatprep.subr.mxu0 0.0
      %1282 = vmatpush1.msra.mxu0 0.0
      %1283 = vmatprep.subr.mxu0 0.0
      %1284 = vmatpush1.msra.mxu0 0.0
      %1285 = vmatprep.subr.mxu0 0.0
      %1286 = vmatpush1.msra.mxu0 0.0
      %1287 = vmatprep.subr.mxu0 0.0
      %1288 = vmatpush1.msra.mxu0 0.0
      %1289 = vmatprep.subr.mxu0 0.0
      %1290 = vmatpush1.msra.mxu0 0.0
      %1291 = vmatprep.subr.mxu0 0.0
      %1292 = vmatpush1.msra.mxu0 0.0
      %1293 = vmatprep.subr.mxu0 0.0
      %1294 = vmatpush1.msra.mxu0 0.0
      %1295 = vmatprep.subr.mxu0 0.0
      %1296 = vmatpush1.msra.mxu0 0.0
      %1297 = vmatprep.subr.mxu0 0.0
      %1298 = vmatpush1.msra.mxu0 0.0
      %1299 = vmatprep.subr.mxu0 0.0
      %1300 = vmatpush1.msra.mxu0 0.0
      %1301 = vmatprep.mubr.f32.mxu0 0.0
      %1302 = vmatmul.mubr.f32.gmra.mrb[0].mxu0 %v1226
      %v1303 = vpop.f32.mrb[0].mxu0
      %v1304 = vadd.f32 %v1207, %v1303
      %v1305 = vpop.f32.mrb[0].mxu0
      %1306 = vmatprep.mubr.f32.mxu0 0.0
      %1307 = vmatmul.mubr.f32.gmra.mrb[0].mxu0 %v1229
      %v1308 = vpop.f32.mrb[0].mxu0
      %v1309 = vadd.f32 %v1212, %v1308
      %v1310 = vpop.f32.mrb[0].mxu0
      %1311 = vmatprep.mubr.f32.mxu0 0.0
      %1312 = vmatmul.mubr.f32.gmra.mrb[0].mxu0 %v1232
      %v1313 = vpop.f32.mrb[0].mxu0
      %v1314 = vadd.f32 %v1217, %v1313
      %v1315 = vpop.f32.mrb[0].mxu0
      %1316 = vmatprep.mubr.f32.mxu0 0.0
      %1317 = vmatmul.mubr.f32.gmra.mrb[0].mxu0 %v1235
      %v1318 = vpop.f32.mrb[0].mxu0
      %v1319 = vadd.f32 %v1222, %v1318
      %v1320 = vpop.f32.mrb[0].mxu0
      %1321 = vdwg.mxu0
      %s1322 = scalar_lea.vmem %s1, 64
      %v1323 = vld [vmem:[%s1322] sm:$0xff]
      %v1324 = vld [vmem:[%s1322 + $0x8] sm:$0xff]
      %v1325 = vld [vmem:[%s1322 + $0x10] sm:$0xff]
      %v1326 = vld [vmem:[%s1322 + $0x18] sm:$0xff]
      %1327 = vmatprep.subr.mxu0 0.0
      %1328 = vmatpush1.msra.mxu0 %v923
      %1329 = vmatprep.subr.mxu0 0.0
      %1330 = vmatpush1.msra.mxu0 %v924
      %1331 = vmatprep.subr.mxu0 0.0
      %1332 = vmatpush1.msra.mxu0 %v925
      %1333 = vmatprep.subr.mxu0 0.0
      %1334 = vmatpush1.msra.mxu0 %v926
      %1335 = vmatprep.subr.mxu0 0.0
      %1336 = vmatpush1.msra.mxu0 %v927
      %1337 = vmatprep.subr.mxu0 0.0
      %1338 = vmatpush1.msra.mxu0 %v928
      %1339 = vmatprep.subr.mxu0 0.0
      %1340 = vmatpush1.msra.mxu0 %v929
      %1341 = vmatprep.subr.mxu0 0.0
      %1342 = vmatpush1.msra.mxu0 %v930
      %1343 = vmatprep.subr.mxu0 0.0
      %1344 = vmatpush1.msra.mxu0 %v931
      %1345 = vmatprep.subr.mxu0 0.0
      %1346 = vmatpush1.msra.mxu0 %v932
      %1347 = vmatprep.subr.mxu0 0.0
      %1348 = vmatpush1.msra.mxu0 %v933
      %1349 = vmatprep.subr.mxu0 0.0
      %1350 = vmatpush1.msra.mxu0 %v934
      %1351 = vmatprep.subr.mxu0 0.0
      %1352 = vmatpush1.msra.mxu0 %v935
      %1353 = vmatprep.subr.mxu0 0.0
      %1354 = vmatpush1.msra.mxu0 %v936
      %1355 = vmatprep.subr.mxu0 0.0
      %1356 = vmatpush1.msra.mxu0 %v937
      %1357 = vmatprep.subr.mxu0 0.0
      %1358 = vmatpush1.msra.mxu0 %v938
      %1359 = vmatprep.subr.mxu0 0.0
      %1360 = vmatpush1.msra.mxu0 0.0
      %1361 = vmatprep.subr.mxu0 0.0
      %1362 = vmatpush1.msra.mxu0 0.0
      %1363 = vmatprep.subr.mxu0 0.0
      %1364 = vmatpush1.msra.mxu0 0.0
      %1365 = vmatprep.subr.mxu0 0.0
      %1366 = vmatpush1.msra.mxu0 0.0
      %1367 = vmatprep.subr.mxu0 0.0
      %1368 = vmatpush1.msra.mxu0 0.0
      %1369 = vmatprep.subr.mxu0 0.0
      %1370 = vmatpush1.msra.mxu0 0.0
      %1371 = vmatprep.subr.mxu0 0.0
      %1372 = vmatpush1.msra.mxu0 0.0
      %1373 = vmatprep.subr.mxu0 0.0
      %1374 = vmatpush1.msra.mxu0 0.0
      %1375 = vmatprep.subr.mxu0 0.0
      %1376 = vmatpush1.msra.mxu0 0.0
      %1377 = vmatprep.subr.mxu0 0.0
      %1378 = vmatpush1.msra.mxu0 0.0
      %1379 = vmatprep.subr.mxu0 0.0
      %1380 = vmatpush1.msra.mxu0 0.0
      %1381 = vmatprep.subr.mxu0 0.0
      %1382 = vmatpush1.msra.mxu0 0.0
      %1383 = vmatprep.subr.mxu0 0.0
      %1384 = vmatpush1.msra.mxu0 0.0
      %1385 = vmatprep.subr.mxu0 0.0
      %1386 = vmatpush1.msra.mxu0 0.0
      %1387 = vmatprep.subr.mxu0 0.0
      %1388 = vmatpush1.msra.mxu0 0.0
      %1389 = vmatprep.subr.mxu0 0.0
      %1390 = vmatpush1.msra.mxu0 0.0
      %1391 = vmatprep.mubr.f32.mxu0 0.0
      %1392 = vmatmul.mubr.f32.gmra.mrb[0].mxu0 %v1323
      %v1393 = vpop.f32.mrb[0].mxu0
      %v1394 = vadd.f32 0.0, %v1393
      %v1395 = vpop.f32.mrb[0].mxu0
      %1396 = vmatprep.mubr.f32.mxu0 0.0
      %1397 = vmatmul.mubr.f32.gmra.mrb[0].mxu0 %v1324
      %v1398 = vpop.f32.mrb[0].mxu0
      %v1399 = vadd.f32 0.0, %v1398
      %v1400 = vpop.f32.mrb[0].mxu0
      %1401 = vmatprep.mubr.f32.mxu0 0.0
      %1402 = vmatmul.mubr.f32.gmra.mrb[0].mxu0 %v1325
      %v1403 = vpop.f32.mrb[0].mxu0
      %v1404 = vadd.f32 0.0, %v1403
      %v1405 = vpop.f32.mrb[0].mxu0
      %1406 = vmatprep.mubr.f32.mxu0 0.0
      %1407 = vmatmul.mubr.f32.gmra.mrb[0].mxu0 %v1326
      %v1408 = vpop.f32.mrb[0].mxu0
      %v1409 = vadd.f32 0.0, %v1408
      %v1410 = vpop.f32.mrb[0].mxu0
      %1411 = vdwg.mxu0
      %s1412 = scalar_lea.vmem %s612, 64
      %v1413 = vld [vmem:[%s1412] sm:$0xff]
      %v1414 = vld [vmem:[%s1412 + $0x8] sm:$0xff]
      %v1415 = vld [vmem:[%s1412 + $0x10] sm:$0xff]
      %v1416 = vld [vmem:[%s1412 + $0x18] sm:$0xff]
      %v1418 = vsel %vm1127, %v1394, 0
      %v1421 = vsel %vm1127, %v1399, 0
      %v1424 = vsel %vm1127, %v1404, 0
      %v1427 = vsel %vm1127, %v1409, 0
      %1429 = vmatprep.subr.mxu0 0.0
      %1430 = vmatpush1.msra.mxu0 %v1413
      %1431 = vmatprep.subr.mxu0 0.0
      %1432 = vmatpush1.msra.mxu0 %v1414
      %1433 = vmatprep.subr.mxu0 0.0
      %1434 = vmatpush1.msra.mxu0 %v1415
      %1435 = vmatprep.subr.mxu0 0.0
      %1436 = vmatpush1.msra.mxu0 %v1416
      %1437 = vmatprep.subr.mxu0 0.0
      %1438 = vmatpush1.msra.mxu0 0.0
      %1439 = vmatprep.subr.mxu0 0.0
      %1440 = vmatpush1.msra.mxu0 0.0
      %1441 = vmatprep.subr.mxu0 0.0
      %1442 = vmatpush1.msra.mxu0 0.0
      %1443 = vmatprep.subr.mxu0 0.0
      %1444 = vmatpush1.msra.mxu0 0.0
      %1445 = vmatprep.subr.mxu0 0.0
      %1446 = vmatpush1.msra.mxu0 0.0
      %1447 = vmatprep.subr.mxu0 0.0
      %1448 = vmatpush1.msra.mxu0 0.0
      %1449 = vmatprep.subr.mxu0 0.0
      %1450 = vmatpush1.msra.mxu0 0.0
      %1451 = vmatprep.subr.mxu0 0.0
      %1452 = vmatpush1.msra.mxu0 0.0
      %1453 = vmatprep.subr.mxu0 0.0
      %1454 = vmatpush1.msra.mxu0 0.0
      %1455 = vmatprep.subr.mxu0 0.0
      %1456 = vmatpush1.msra.mxu0 0.0
      %1457 = vmatprep.subr.mxu0 0.0
      %1458 = vmatpush1.msra.mxu0 0.0
      %1459 = vmatprep.subr.mxu0 0.0
      %1460 = vmatpush1.msra.mxu0 0.0
      %1461 = vmatprep.subr.mxu0 0.0
      %1462 = vmatpush1.msra.mxu0 0.0
      %1463 = vmatprep.subr.mxu0 0.0
      %1464 = vmatpush1.msra.mxu0 0.0
      %1465 = vmatprep.subr.mxu0 0.0
      %1466 = vmatpush1.msra.mxu0 0.0
      %1467 = vmatprep.subr.mxu0 0.0
      %1468 = vmatpush1.msra.mxu0 0.0
      %1469 = vmatprep.subr.mxu0 0.0
      %1470 = vmatpush1.msra.mxu0 0.0
      %1471 = vmatprep.subr.mxu0 0.0
      %1472 = vmatpush1.msra.mxu0 0.0
      %1473 = vmatprep.subr.mxu0 0.0
      %1474 = vmatpush1.msra.mxu0 0.0
      %1475 = vmatprep.subr.mxu0 0.0
      %1476 = vmatpush1.msra.mxu0 0.0
      %1477 = vmatprep.subr.mxu0 0.0
      %1478 = vmatpush1.msra.mxu0 0.0
      %1479 = vmatprep.subr.mxu0 0.0
      %1480 = vmatpush1.msra.mxu0 0.0
      %1481 = vmatprep.subr.mxu0 0.0
      %1482 = vmatpush1.msra.mxu0 0.0
      %1483 = vmatprep.subr.mxu0 0.0
      %1484 = vmatpush1.msra.mxu0 0.0
      %1485 = vmatprep.subr.mxu0 0.0
      %1486 = vmatpush1.msra.mxu0 0.0
      %1487 = vmatprep.subr.mxu0 0.0
      %1488 = vmatpush1.msra.mxu0 0.0
      %1489 = vmatprep.subr.mxu0 0.0
      %1490 = vmatpush1.msra.mxu0 0.0
      %1491 = vmatprep.subr.mxu0 0.0
      %1492 = vmatpush1.msra.mxu0 0.0
      %1493 = vmatprep.mubr.f32.mxu0 0.0
      %1494 = vmatmul.mubr.f32.gmra.mrb[0].mxu0 %v1418
      %v1495 = vpop.f32.mrb[0].mxu0
      %v1496 = vadd.f32 0.0, %v1495
      %v1497 = vpop.f32.mrb[0].mxu0
      %1498 = vmatprep.mubr.f32.mxu0 0.0
      %1499 = vmatmul.mubr.f32.gmra.mrb[0].mxu0 %v1421
      %v1500 = vpop.f32.mrb[0].mxu0
      %v1501 = vadd.f32 0.0, %v1500
      %v1502 = vpop.f32.mrb[0].mxu0
      %1503 = vmatprep.mubr.f32.mxu0 0.0
      %1504 = vmatmul.mubr.f32.gmra.mrb[0].mxu0 %v1424
      %v1505 = vpop.f32.mrb[0].mxu0
      %v1506 = vadd.f32 0.0, %v1505
      %v1507 = vpop.f32.mrb[0].mxu0
      %1508 = vmatprep.mubr.f32.mxu0 0.0
      %1509 = vmatmul.mubr.f32.gmra.mrb[0].mxu0 %v1427
      %v1510 = vpop.f32.mrb[0].mxu0
      %v1511 = vadd.f32 0.0, %v1510
      %v1512 = vpop.f32.mrb[0].mxu0
      %1513 = vdwg.mxu0
      %v1514 = vadd.f32 %v1304, %v1496
      %v1515 = vadd.f32 %v1309, %v1501
      %v1516 = vadd.f32 %v1314, %v1506
      %v1517 = vadd.f32 %v1319, %v1511
      %s1518 = scalar_lea.vmem %s1, 96
      %v1519 = vld [vmem:[%s1518] sm:$0xff]
      %v1520 = vld [vmem:[%s1518 + $0x8] sm:$0xff]
      %v1521 = vld [vmem:[%s1518 + $0x10] sm:$0xff]
      %v1522 = vld [vmem:[%s1518 + $0x18] sm:$0xff]
      %1523 = vmatprep.subr.mxu0 0.0
      %1524 = vmatpush1.msra.mxu0 %v923
      %1525 = vmatprep.subr.mxu0 0.0
      %1526 = vmatpush1.msra.mxu0 %v924
      %1527 = vmatprep.subr.mxu0 0.0
      %1528 = vmatpush1.msra.mxu0 %v925
      %1529 = vmatprep.subr.mxu0 0.0
      %1530 = vmatpush1.msra.mxu0 %v926
      %1531 = vmatprep.subr.mxu0 0.0
      %1532 = vmatpush1.msra.mxu0 %v927
      %1533 = vmatprep.subr.mxu0 0.0
      %1534 = vmatpush1.msra.mxu0 %v928
      %1535 = vmatprep.subr.mxu0 0.0
      %1536 = vmatpush1.msra.mxu0 %v929
      %1537 = vmatprep.subr.mxu0 0.0
      %1538 = vmatpush1.msra.mxu0 %v930
      %1539 = vmatprep.subr.mxu0 0.0
      %1540 = vmatpush1.msra.mxu0 %v931
      %1541 = vmatprep.subr.mxu0 0.0
      %1542 = vmatpush1.msra.mxu0 %v932
      %1543 = vmatprep.subr.mxu0 0.0
      %1544 = vmatpush1.msra.mxu0 %v933
      %1545 = vmatprep.subr.mxu0 0.0
      %1546 = vmatpush1.msra.mxu0 %v934
      %1547 = vmatprep.subr.mxu0 0.0
      %1548 = vmatpush1.msra.mxu0 %v935
      %1549 = vmatprep.subr.mxu0 0.0
      %1550 = vmatpush1.msra.mxu0 %v936
      %1551 = vmatprep.subr.mxu0 0.0
      %1552 = vmatpush1.msra.mxu0 %v937
      %1553 = vmatprep.subr.mxu0 0.0
      %1554 = vmatpush1.msra.mxu0 %v938
      %1555 = vmatprep.subr.mxu0 0.0
      %1556 = vmatpush1.msra.mxu0 0.0
      %1557 = vmatprep.subr.mxu0 0.0
      %1558 = vmatpush1.msra.mxu0 0.0
      %1559 = vmatprep.subr.mxu0 0.0
      %1560 = vmatpush1.msra.mxu0 0.0
      %1561 = vmatprep.subr.mxu0 0.0
      %1562 = vmatpush1.msra.mxu0 0.0
      %1563 = vmatprep.subr.mxu0 0.0
      %1564 = vmatpush1.msra.mxu0 0.0
      %1565 = vmatprep.subr.mxu0 0.0
      %1566 = vmatpush1.msra.mxu0 0.0
      %1567 = vmatprep.subr.mxu0 0.0
      %1568 = vmatpush1.msra.mxu0 0.0
      %1569 = vmatprep.subr.mxu0 0.0
      %1570 = vmatpush1.msra.mxu0 0.0
      %1571 = vmatprep.subr.mxu0 0.0
      %1572 = vmatpush1.msra.mxu0 0.0
      %1573 = vmatprep.subr.mxu0 0.0
      %1574 = vmatpush1.msra.mxu0 0.0
      %1575 = vmatprep.subr.mxu0 0.0
      %1576 = vmatpush1.msra.mxu0 0.0
      %1577 = vmatprep.subr.mxu0 0.0
      %1578 = vmatpush1.msra.mxu0 0.0
      %1579 = vmatprep.subr.mxu0 0.0
      %1580 = vmatpush1.msra.mxu0 0.0
      %1581 = vmatprep.subr.mxu0 0.0
      %1582 = vmatpush1.msra.mxu0 0.0
      %1583 = vmatprep.subr.mxu0 0.0
      %1584 = vmatpush1.msra.mxu0 0.0
      %1585 = vmatprep.subr.mxu0 0.0
      %1586 = vmatpush1.msra.mxu0 0.0
      %1587 = vmatprep.mubr.f32.mxu0 0.0
      %1588 = vmatmul.mubr.f32.gmra.mrb[0].mxu0 %v1519
      %v1589 = vpop.f32.mrb[0].mxu0
      %v1590 = vadd.f32 0.0, %v1589
      %v1591 = vpop.f32.mrb[0].mxu0
      %1592 = vmatprep.mubr.f32.mxu0 0.0
      %1593 = vmatmul.mubr.f32.gmra.mrb[0].mxu0 %v1520
      %v1594 = vpop.f32.mrb[0].mxu0
      %v1595 = vadd.f32 0.0, %v1594
      %v1596 = vpop.f32.mrb[0].mxu0
      %1597 = vmatprep.mubr.f32.mxu0 0.0
      %1598 = vmatmul.mubr.f32.gmra.mrb[0].mxu0 %v1521
      %v1599 = vpop.f32.mrb[0].mxu0
      %v1600 = vadd.f32 0.0, %v1599
      %v1601 = vpop.f32.mrb[0].mxu0
      %1602 = vmatprep.mubr.f32.mxu0 0.0
      %1603 = vmatmul.mubr.f32.gmra.mrb[0].mxu0 %v1522
      %v1604 = vpop.f32.mrb[0].mxu0
      %v1605 = vadd.f32 0.0, %v1604
      %v1606 = vpop.f32.mrb[0].mxu0
      %1607 = vdwg.mxu0
      %s1608 = scalar_lea.vmem %s612, 96
      %v1609 = vld [vmem:[%s1608] sm:$0xff]
      %v1610 = vld [vmem:[%s1608 + $0x8] sm:$0xff]
      %v1611 = vld [vmem:[%s1608 + $0x10] sm:$0xff]
      %v1612 = vld [vmem:[%s1608 + $0x18] sm:$0xff]
      %v1614 = vsel %vm1127, %v1590, 0
      %v1617 = vsel %vm1127, %v1595, 0
      %v1620 = vsel %vm1127, %v1600, 0
      %v1623 = vsel %vm1127, %v1605, 0
      %1625 = vmatprep.subr.mxu0 0.0
      %1626 = vmatpush1.msra.mxu0 %v1609
      %1627 = vmatprep.subr.mxu0 0.0
      %1628 = vmatpush1.msra.mxu0 %v1610
      %1629 = vmatprep.subr.mxu0 0.0
      %1630 = vmatpush1.msra.mxu0 %v1611
      %1631 = vmatprep.subr.mxu0 0.0
      %1632 = vmatpush1.msra.mxu0 %v1612
      %1633 = vmatprep.subr.mxu0 0.0
      %1634 = vmatpush1.msra.mxu0 0.0
      %1635 = vmatprep.subr.mxu0 0.0
      %1636 = vmatpush1.msra.mxu0 0.0
      %1637 = vmatprep.subr.mxu0 0.0
      %1638 = vmatpush1.msra.mxu0 0.0
      %1639 = vmatprep.subr.mxu0 0.0
      %1640 = vmatpush1.msra.mxu0 0.0
      %1641 = vmatprep.subr.mxu0 0.0
      %1642 = vmatpush1.msra.mxu0 0.0
      %1643 = vmatprep.subr.mxu0 0.0
      %1644 = vmatpush1.msra.mxu0 0.0
      %1645 = vmatprep.subr.mxu0 0.0
      %1646 = vmatpush1.msra.mxu0 0.0
      %1647 = vmatprep.subr.mxu0 0.0
      %1648 = vmatpush1.msra.mxu0 0.0
      %1649 = vmatprep.subr.mxu0 0.0
      %1650 = vmatpush1.msra.mxu0 0.0
      %1651 = vmatprep.subr.mxu0 0.0
      %1652 = vmatpush1.msra.mxu0 0.0
      %1653 = vmatprep.subr.mxu0 0.0
      %1654 = vmatpush1.msra.mxu0 0.0
      %1655 = vmatprep.subr.mxu0 0.0
      %1656 = vmatpush1.msra.mxu0 0.0
      %1657 = vmatprep.subr.mxu0 0.0
      %1658 = vmatpush1.msra.mxu0 0.0
      %1659 = vmatprep.subr.mxu0 0.0
      %1660 = vmatpush1.msra.mxu0 0.0
      %1661 = vmatprep.subr.mxu0 0.0
      %1662 = vmatpush1.msra.mxu0 0.0
      %1663 = vmatprep.subr.mxu0 0.0
      %1664 = vmatpush1.msra.mxu0 0.0
      %1665 = vmatprep.subr.mxu0 0.0
      %1666 = vmatpush1.msra.mxu0 0.0
      %1667 = vmatprep.subr.mxu0 0.0
      %1668 = vmatpush1.msra.mxu0 0.0
      %1669 = vmatprep.subr.mxu0 0.0
      %1670 = vmatpush1.msra.mxu0 0.0
      %1671 = vmatprep.subr.mxu0 0.0
      %1672 = vmatpush1.msra.mxu0 0.0
      %1673 = vmatprep.subr.mxu0 0.0
      %1674 = vmatpush1.msra.mxu0 0.0
      %1675 = vmatprep.subr.mxu0 0.0
      %1676 = vmatpush1.msra.mxu0 0.0
      %1677 = vmatprep.subr.mxu0 0.0
      %1678 = vmatpush1.msra.mxu0 0.0
      %1679 = vmatprep.subr.mxu0 0.0
      %1680 = vmatpush1.msra.mxu0 0.0
      %1681 = vmatprep.subr.mxu0 0.0
      %1682 = vmatpush1.msra.mxu0 0.0
      %1683 = vmatprep.subr.mxu0 0.0
      %1684 = vmatpush1.msra.mxu0 0.0
      %1685 = vmatprep.subr.mxu0 0.0
      %1686 = vmatpush1.msra.mxu0 0.0
      %1687 = vmatprep.subr.mxu0 0.0
      %1688 = vmatpush1.msra.mxu0 0.0
      %1689 = vmatprep.mubr.f32.mxu0 0.0
      %1690 = vmatmul.mubr.f32.gmra.mrb[0].mxu0 %v1614
      %v1691 = vpop.f32.mrb[0].mxu0
      %v1692 = vadd.f32 0.0, %v1691
      %v1693 = vpop.f32.mrb[0].mxu0
      %1694 = vmatprep.mubr.f32.mxu0 0.0
      %1695 = vmatmul.mubr.f32.gmra.mrb[0].mxu0 %v1617
      %v1696 = vpop.f32.mrb[0].mxu0
      %v1697 = vadd.f32 0.0, %v1696
      %v1698 = vpop.f32.mrb[0].mxu0
      %1699 = vmatprep.mubr.f32.mxu0 0.0
      %1700 = vmatmul.mubr.f32.gmra.mrb[0].mxu0 %v1620
      %v1701 = vpop.f32.mrb[0].mxu0
      %v1702 = vadd.f32 0.0, %v1701
      %v1703 = vpop.f32.mrb[0].mxu0
      %1704 = vmatprep.mubr.f32.mxu0 0.0
      %1705 = vmatmul.mubr.f32.gmra.mrb[0].mxu0 %v1623
      %v1706 = vpop.f32.mrb[0].mxu0
      %v1707 = vadd.f32 0.0, %v1706
      %v1708 = vpop.f32.mrb[0].mxu0
      %1709 = vdwg.mxu0
      %v1710 = vadd.f32 %v1514, %v1692
      %v1711 = vadd.f32 %v1515, %v1697
      %v1712 = vadd.f32 %v1516, %v1702
      %v1713 = vadd.f32 %v1517, %v1707
      %s1714 = scalar_lea.vmem %s1, 128
      %v1715 = vld [vmem:[%s1714] sm:$0xff]
      %v1716 = vld [vmem:[%s1714 + $0x8] sm:$0xff]
      %v1717 = vld [vmem:[%s1714 + $0x10] sm:$0xff]
      %v1718 = vld [vmem:[%s1714 + $0x18] sm:$0xff]
      %1719 = vmatprep.subr.mxu0 0.0
      %1720 = vmatpush1.msra.mxu0 %v923
      %1721 = vmatprep.subr.mxu0 0.0
      %1722 = vmatpush1.msra.mxu0 %v924
      %1723 = vmatprep.subr.mxu0 0.0
      %1724 = vmatpush1.msra.mxu0 %v925
      %1725 = vmatprep.subr.mxu0 0.0
      %1726 = vmatpush1.msra.mxu0 %v926
      %1727 = vmatprep.subr.mxu0 0.0
      %1728 = vmatpush1.msra.mxu0 %v927
      %1729 = vmatprep.subr.mxu0 0.0
      %1730 = vmatpush1.msra.mxu0 %v928
      %1731 = vmatprep.subr.mxu0 0.0
      %1732 = vmatpush1.msra.mxu0 %v929
      %1733 = vmatprep.subr.mxu0 0.0
      %1734 = vmatpush1.msra.mxu0 %v930
      %1735 = vmatprep.subr.mxu0 0.0
      %1736 = vmatpush1.msra.mxu0 %v931
      %1737 = vmatprep.subr.mxu0 0.0
      %1738 = vmatpush1.msra.mxu0 %v932
      %1739 = vmatprep.subr.mxu0 0.0
      %1740 = vmatpush1.msra.mxu0 %v933
      %1741 = vmatprep.subr.mxu0 0.0
      %1742 = vmatpush1.msra.mxu0 %v934
      %1743 = vmatprep.subr.mxu0 0.0
      %1744 = vmatpush1.msra.mxu0 %v935
      %1745 = vmatprep.subr.mxu0 0.0
      %1746 = vmatpush1.msra.mxu0 %v936
      %1747 = vmatprep.subr.mxu0 0.0
      %1748 = vmatpush1.msra.mxu0 %v937
      %1749 = vmatprep.subr.mxu0 0.0
      %1750 = vmatpush1.msra.mxu0 %v938
      %1751 = vmatprep.subr.mxu0 0.0
      %1752 = vmatpush1.msra.mxu0 0.0
      %1753 = vmatprep.subr.mxu0 0.0
      %1754 = vmatpush1.msra.mxu0 0.0
      %1755 = vmatprep.subr.mxu0 0.0
      %1756 = vmatpush1.msra.mxu0 0.0
      %1757 = vmatprep.subr.mxu0 0.0
      %1758 = vmatpush1.msra.mxu0 0.0
      %1759 = vmatprep.subr.mxu0 0.0
      %1760 = vmatpush1.msra.mxu0 0.0
      %1761 = vmatprep.subr.mxu0 0.0
      %1762 = vmatpush1.msra.mxu0 0.0
      %1763 = vmatprep.subr.mxu0 0.0
      %1764 = vmatpush1.msra.mxu0 0.0
      %1765 = vmatprep.subr.mxu0 0.0
      %1766 = vmatpush1.msra.mxu0 0.0
      %1767 = vmatprep.subr.mxu0 0.0
      %1768 = vmatpush1.msra.mxu0 0.0
      %1769 = vmatprep.subr.mxu0 0.0
      %1770 = vmatpush1.msra.mxu0 0.0
      %1771 = vmatprep.subr.mxu0 0.0
      %1772 = vmatpush1.msra.mxu0 0.0
      %1773 = vmatprep.subr.mxu0 0.0
      %1774 = vmatpush1.msra.mxu0 0.0
      %1775 = vmatprep.subr.mxu0 0.0
      %1776 = vmatpush1.msra.mxu0 0.0
      %1777 = vmatprep.subr.mxu0 0.0
      %1778 = vmatpush1.msra.mxu0 0.0
      %1779 = vmatprep.subr.mxu0 0.0
      %1780 = vmatpush1.msra.mxu0 0.0
      %1781 = vmatprep.subr.mxu0 0.0
      %1782 = vmatpush1.msra.mxu0 0.0
      %1783 = vmatprep.mubr.f32.mxu0 0.0
      %1784 = vmatmul.mubr.f32.gmra.mrb[0].mxu0 %v1715
      %v1785 = vpop.f32.mrb[0].mxu0
      %v1786 = vadd.f32 0.0, %v1785
      %v1787 = vpop.f32.mrb[0].mxu0
      %1788 = vmatprep.mubr.f32.mxu0 0.0
      %1789 = vmatmul.mubr.f32.gmra.mrb[0].mxu0 %v1716
      %v1790 = vpop.f32.mrb[0].mxu0
      %v1791 = vadd.f32 0.0, %v1790
      %v1792 = vpop.f32.mrb[0].mxu0
      %1793 = vmatprep.mubr.f32.mxu0 0.0
      %1794 = vmatmul.mubr.f32.gmra.mrb[0].mxu0 %v1717
      %v1795 = vpop.f32.mrb[0].mxu0
      %v1796 = vadd.f32 0.0, %v1795
      %v1797 = vpop.f32.mrb[0].mxu0
      %1798 = vmatprep.mubr.f32.mxu0 0.0
      %1799 = vmatmul.mubr.f32.gmra.mrb[0].mxu0 %v1718
      %v1800 = vpop.f32.mrb[0].mxu0
      %v1801 = vadd.f32 0.0, %v1800
      %v1802 = vpop.f32.mrb[0].mxu0
      %1803 = vdwg.mxu0
      %s1804 = scalar_lea.vmem %s612, 128
      %v1805 = vld [vmem:[%s1804] sm:$0xff]
      %v1806 = vld [vmem:[%s1804 + $0x8] sm:$0xff]
      %v1807 = vld [vmem:[%s1804 + $0x10] sm:$0xff]
      %v1808 = vld [vmem:[%s1804 + $0x18] sm:$0xff]
      %v1810 = vsel %vm1127, %v1786, 0
      %v1813 = vsel %vm1127, %v1791, 0
      %v1816 = vsel %vm1127, %v1796, 0
      %v1819 = vsel %vm1127, %v1801, 0
      %1821 = vmatprep.subr.mxu0 0.0
      %1822 = vmatpush1.msra.mxu0 %v1805
      %1823 = vmatprep.subr.mxu0 0.0
      %1824 = vmatpush1.msra.mxu0 %v1806
      %1825 = vmatprep.subr.mxu0 0.0
      %1826 = vmatpush1.msra.mxu0 %v1807
      %1827 = vmatprep.subr.mxu0 0.0
      %1828 = vmatpush1.msra.mxu0 %v1808
      %1829 = vmatprep.subr.mxu0 0.0
      %1830 = vmatpush1.msra.mxu0 0.0
      %1831 = vmatprep.subr.mxu0 0.0
      %1832 = vmatpush1.msra.mxu0 0.0
      %1833 = vmatprep.subr.mxu0 0.0
      %1834 = vmatpush1.msra.mxu0 0.0
      %1835 = vmatprep.subr.mxu0 0.0
      %1836 = vmatpush1.msra.mxu0 0.0
      %1837 = vmatprep.subr.mxu0 0.0
      %1838 = vmatpush1.msra.mxu0 0.0
      %1839 = vmatprep.subr.mxu0 0.0
      %1840 = vmatpush1.msra.mxu0 0.0
      %1841 = vmatprep.subr.mxu0 0.0
      %1842 = vmatpush1.msra.mxu0 0.0
      %1843 = vmatprep.subr.mxu0 0.0
      %1844 = vmatpush1.msra.mxu0 0.0
      %1845 = vmatprep.subr.mxu0 0.0
      %1846 = vmatpush1.msra.mxu0 0.0
      %1847 = vmatprep.subr.mxu0 0.0
      %1848 = vmatpush1.msra.mxu0 0.0
      %1849 = vmatprep.subr.mxu0 0.0
      %1850 = vmatpush1.msra.mxu0 0.0
      %1851 = vmatprep.subr.mxu0 0.0
      %1852 = vmatpush1.msra.mxu0 0.0
      %1853 = vmatprep.subr.mxu0 0.0
      %1854 = vmatpush1.msra.mxu0 0.0
      %1855 = vmatprep.subr.mxu0 0.0
      %1856 = vmatpush1.msra.mxu0 0.0
      %1857 = vmatprep.subr.mxu0 0.0
      %1858 = vmatpush1.msra.mxu0 0.0
      %1859 = vmatprep.subr.mxu0 0.0
      %1860 = vmatpush1.msra.mxu0 0.0
      %1861 = vmatprep.subr.mxu0 0.0
      %1862 = vmatpush1.msra.mxu0 0.0
      %1863 = vmatprep.subr.mxu0 0.0
      %1864 = vmatpush1.msra.mxu0 0.0
      %1865 = vmatprep.subr.mxu0 0.0
      %1866 = vmatpush1.msra.mxu0 0.0
      %1867 = vmatprep.subr.mxu0 0.0
      %1868 = vmatpush1.msra.mxu0 0.0
      %1869 = vmatprep.subr.mxu0 0.0
      %1870 = vmatpush1.msra.mxu0 0.0
      %1871 = vmatprep.subr.mxu0 0.0
      %1872 = vmatpush1.msra.mxu0 0.0
      %1873 = vmatprep.subr.mxu0 0.0
      %1874 = vmatpush1.msra.mxu0 0.0
      %1875 = vmatprep.subr.mxu0 0.0
      %1876 = vmatpush1.msra.mxu0 0.0
      %1877 = vmatprep.subr.mxu0 0.0
      %1878 = vmatpush1.msra.mxu0 0.0
      %1879 = vmatprep.subr.mxu0 0.0
      %1880 = vmatpush1.msra.mxu0 0.0
      %1881 = vmatprep.subr.mxu0 0.0
      %1882 = vmatpush1.msra.mxu0 0.0
      %1883 = vmatprep.subr.mxu0 0.0
      %1884 = vmatpush1.msra.mxu0 0.0
      %1885 = vmatprep.mubr.f32.mxu0 0.0
      %1886 = vmatmul.mubr.f32.gmra.mrb[0].mxu0 %v1810
      %v1887 = vpop.f32.mrb[0].mxu0
      %v1888 = vadd.f32 0.0, %v1887
      %v1889 = vpop.f32.mrb[0].mxu0
      %1890 = vmatprep.mubr.f32.mxu0 0.0
      %1891 = vmatmul.mubr.f32.gmra.mrb[0].mxu0 %v1813
      %v1892 = vpop.f32.mrb[0].mxu0
      %v1893 = vadd.f32 0.0, %v1892
      %v1894 = vpop.f32.mrb[0].mxu0
      %1895 = vmatprep.mubr.f32.mxu0 0.0
      %1896 = vmatmul.mubr.f32.gmra.mrb[0].mxu0 %v1816
      %v1897 = vpop.f32.mrb[0].mxu0
      %v1898 = vadd.f32 0.0, %v1897
      %v1899 = vpop.f32.mrb[0].mxu0
      %1900 = vmatprep.mubr.f32.mxu0 0.0
      %1901 = vmatmul.mubr.f32.gmra.mrb[0].mxu0 %v1819
      %v1902 = vpop.f32.mrb[0].mxu0
      %v1903 = vadd.f32 0.0, %v1902
      %v1904 = vpop.f32.mrb[0].mxu0
      %1905 = vdwg.mxu0
      %v1906 = vadd.f32 %v1710, %v1888
      %v1907 = vadd.f32 %v1711, %v1893
      %v1908 = vadd.f32 %v1712, %v1898
      %v1909 = vadd.f32 %v1713, %v1903
      %s1910 = scalar_lea.vmem %s1, 160
      %v1911 = vld [vmem:[%s1910] sm:$0xff]
      %v1912 = vld [vmem:[%s1910 + $0x8] sm:$0xff]
      %v1913 = vld [vmem:[%s1910 + $0x10] sm:$0xff]
      %v1914 = vld [vmem:[%s1910 + $0x18] sm:$0xff]
      %1915 = vmatprep.subr.mxu0 0.0
      %1916 = vmatpush1.msra.mxu0 %v923
      %1917 = vmatprep.subr.mxu0 0.0
      %1918 = vmatpush1.msra.mxu0 %v924
      %1919 = vmatprep.subr.mxu0 0.0
      %1920 = vmatpush1.msra.mxu0 %v925
      %1921 = vmatprep.subr.mxu0 0.0
      %1922 = vmatpush1.msra.mxu0 %v926
      %1923 = vmatprep.subr.mxu0 0.0
      %1924 = vmatpush1.msra.mxu0 %v927
      %1925 = vmatprep.subr.mxu0 0.0
      %1926 = vmatpush1.msra.mxu0 %v928
      %1927 = vmatprep.subr.mxu0 0.0
      %1928 = vmatpush1.msra.mxu0 %v929
      %1929 = vmatprep.subr.mxu0 0.0
      %1930 = vmatpush1.msra.mxu0 %v930
      %1931 = vmatprep.subr.mxu0 0.0
      %1932 = vmatpush1.msra.mxu0 %v931
      %1933 = vmatprep.subr.mxu0 0.0
      %1934 = vmatpush1.msra.mxu0 %v932
      %1935 = vmatprep.subr.mxu0 0.0
      %1936 = vmatpush1.msra.mxu0 %v933
      %1937 = vmatprep.subr.mxu0 0.0
      %1938 = vmatpush1.msra.mxu0 %v934
      %1939 = vmatprep.subr.mxu0 0.0
      %1940 = vmatpush1.msra.mxu0 %v935
      %1941 = vmatprep.subr.mxu0 0.0
      %1942 = vmatpush1.msra.mxu0 %v936
      %1943 = vmatprep.subr.mxu0 0.0
      %1944 = vmatpush1.msra.mxu0 %v937
      %1945 = vmatprep.subr.mxu0 0.0
      %1946 = vmatpush1.msra.mxu0 %v938
      %1947 = vmatprep.subr.mxu0 0.0
      %1948 = vmatpush1.msra.mxu0 0.0
      %1949 = vmatprep.subr.mxu0 0.0
      %1950 = vmatpush1.msra.mxu0 0.0
      %1951 = vmatprep.subr.mxu0 0.0
      %1952 = vmatpush1.msra.mxu0 0.0
      %1953 = vmatprep.subr.mxu0 0.0
      %1954 = vmatpush1.msra.mxu0 0.0
      %1955 = vmatprep.subr.mxu0 0.0
      %1956 = vmatpush1.msra.mxu0 0.0
      %1957 = vmatprep.subr.mxu0 0.0
      %1958 = vmatpush1.msra.mxu0 0.0
      %1959 = vmatprep.subr.mxu0 0.0
      %1960 = vmatpush1.msra.mxu0 0.0
      %1961 = vmatprep.subr.mxu0 0.0
      %1962 = vmatpush1.msra.mxu0 0.0
      %1963 = vmatprep.subr.mxu0 0.0
      %1964 = vmatpush1.msra.mxu0 0.0
      %1965 = vmatprep.subr.mxu0 0.0
      %1966 = vmatpush1.msra.mxu0 0.0
      %1967 = vmatprep.subr.mxu0 0.0
      %1968 = vmatpush1.msra.mxu0 0.0
      %1969 = vmatprep.subr.mxu0 0.0
      %1970 = vmatpush1.msra.mxu0 0.0
      %1971 = vmatprep.subr.mxu0 0.0
      %1972 = vmatpush1.msra.mxu0 0.0
      %1973 = vmatprep.subr.mxu0 0.0
      %1974 = vmatpush1.msra.mxu0 0.0
      %1975 = vmatprep.subr.mxu0 0.0
      %1976 = vmatpush1.msra.mxu0 0.0
      %1977 = vmatprep.subr.mxu0 0.0
      %1978 = vmatpush1.msra.mxu0 0.0
      %1979 = vmatprep.mubr.f32.mxu0 0.0
      %1980 = vmatmul.mubr.f32.gmra.mrb[0].mxu0 %v1911
      %v1981 = vpop.f32.mrb[0].mxu0
      %v1982 = vadd.f32 0.0, %v1981
      %v1983 = vpop.f32.mrb[0].mxu0
      %1984 = vmatprep.mubr.f32.mxu0 0.0
      %1985 = vmatmul.mubr.f32.gmra.mrb[0].mxu0 %v1912
      %v1986 = vpop.f32.mrb[0].mxu0
      %v1987 = vadd.f32 0.0, %v1986
      %v1988 = vpop.f32.mrb[0].mxu0
      %1989 = vmatprep.mubr.f32.mxu0 0.0
      %1990 = vmatmul.mubr.f32.gmra.mrb[0].mxu0 %v1913
      %v1991 = vpop.f32.mrb[0].mxu0
      %v1992 = vadd.f32 0.0, %v1991
      %v1993 = vpop.f32.mrb[0].mxu0
      %1994 = vmatprep.mubr.f32.mxu0 0.0
      %1995 = vmatmul.mubr.f32.gmra.mrb[0].mxu0 %v1914
      %v1996 = vpop.f32.mrb[0].mxu0
      %v1997 = vadd.f32 0.0, %v1996
      %v1998 = vpop.f32.mrb[0].mxu0
      %1999 = vdwg.mxu0
      %s2000 = scalar_lea.vmem %s612, 160
      %v2001 = vld [vmem:[%s2000] sm:$0xff]
      %v2002 = vld [vmem:[%s2000 + $0x8] sm:$0xff]
      %v2003 = vld [vmem:[%s2000 + $0x10] sm:$0xff]
      %v2004 = vld [vmem:[%s2000 + $0x18] sm:$0xff]
      %v2006 = vsel %vm1127, %v1982, 0
      %v2009 = vsel %vm1127, %v1987, 0
      %v2012 = vsel %vm1127, %v1992, 0
      %v2015 = vsel %vm1127, %v1997, 0
      %2017 = vmatprep.subr.mxu0 0.0
      %2018 = vmatpush1.msra.mxu0 %v2001
      %2019 = vmatprep.subr.mxu0 0.0
      %2020 = vmatpush1.msra.mxu0 %v2002
      %2021 = vmatprep.subr.mxu0 0.0
      %2022 = vmatpush1.msra.mxu0 %v2003
      %2023 = vmatprep.subr.mxu0 0.0
      %2024 = vmatpush1.msra.mxu0 %v2004
      %2025 = vmatprep.subr.mxu0 0.0
      %2026 = vmatpush1.msra.mxu0 0.0
      %2027 = vmatprep.subr.mxu0 0.0
      %2028 = vmatpush1.msra.mxu0 0.0
      %2029 = vmatprep.subr.mxu0 0.0
      %2030 = vmatpush1.msra.mxu0 0.0
      %2031 = vmatprep.subr.mxu0 0.0
      %2032 = vmatpush1.msra.mxu0 0.0
      %2033 = vmatprep.subr.mxu0 0.0
      %2034 = vmatpush1.msra.mxu0 0.0
      %2035 = vmatprep.subr.mxu0 0.0
      %2036 = vmatpush1.msra.mxu0 0.0
      %2037 = vmatprep.subr.mxu0 0.0
      %2038 = vmatpush1.msra.mxu0 0.0
      %2039 = vmatprep.subr.mxu0 0.0
      %2040 = vmatpush1.msra.mxu0 0.0
      %2041 = vmatprep.subr.mxu0 0.0
      %2042 = vmatpush1.msra.mxu0 0.0
      %2043 = vmatprep.subr.mxu0 0.0
      %2044 = vmatpush1.msra.mxu0 0.0
      %2045 = vmatprep.subr.mxu0 0.0
      %2046 = vmatpush1.msra.mxu0 0.0
      %2047 = vmatprep.subr.mxu0 0.0
      %2048 = vmatpush1.msra.mxu0 0.0
      %2049 = vmatprep.subr.mxu0 0.0
      %2050 = vmatpush1.msra.mxu0 0.0
      %2051 = vmatprep.subr.mxu0 0.0
      %2052 = vmatpush1.msra.mxu0 0.0
      %2053 = vmatprep.subr.mxu0 0.0
      %2054 = vmatpush1.msra.mxu0 0.0
      %2055 = vmatprep.subr.mxu0 0.0
      %2056 = vmatpush1.msra.mxu0 0.0
      %2057 = vmatprep.subr.mxu0 0.0
      %2058 = vmatpush1.msra.mxu0 0.0
      %2059 = vmatprep.subr.mxu0 0.0
      %2060 = vmatpush1.msra.mxu0 0.0
      %2061 = vmatprep.subr.mxu0 0.0
      %2062 = vmatpush1.msra.mxu0 0.0
      %2063 = vmatprep.subr.mxu0 0.0
      %2064 = vmatpush1.msra.mxu0 0.0
      %2065 = vmatprep.subr.mxu0 0.0
      %2066 = vmatpush1.msra.mxu0 0.0
      %2067 = vmatprep.subr.mxu0 0.0
      %2068 = vmatpush1.msra.mxu0 0.0
      %2069 = vmatprep.subr.mxu0 0.0
      %2070 = vmatpush1.msra.mxu0 0.0
      %2071 = vmatprep.subr.mxu0 0.0
      %2072 = vmatpush1.msra.mxu0 0.0
      %2073 = vmatprep.subr.mxu0 0.0
      %2074 = vmatpush1.msra.mxu0 0.0
      %2075 = vmatprep.subr.mxu0 0.0
      %2076 = vmatpush1.msra.mxu0 0.0
      %2077 = vmatprep.subr.mxu0 0.0
      %2078 = vmatpush1.msra.mxu0 0.0
      %2079 = vmatprep.subr.mxu0 0.0
      %2080 = vmatpush1.msra.mxu0 0.0
      %2081 = vmatprep.mubr.f32.mxu0 0.0
      %2082 = vmatmul.mubr.f32.gmra.mrb[0].mxu0 %v2006
      %v2083 = vpop.f32.mrb[0].mxu0
      %v2084 = vadd.f32 0.0, %v2083
      %v2085 = vpop.f32.mrb[0].mxu0
      %2086 = vmatprep.mubr.f32.mxu0 0.0
      %2087 = vmatmul.mubr.f32.gmra.mrb[0].mxu0 %v2009
      %v2088 = vpop.f32.mrb[0].mxu0
      %v2089 = vadd.f32 0.0, %v2088
      %v2090 = vpop.f32.mrb[0].mxu0
      %2091 = vmatprep.mubr.f32.mxu0 0.0
      %2092 = vmatmul.mubr.f32.gmra.mrb[0].mxu0 %v2012
      %v2093 = vpop.f32.mrb[0].mxu0
      %v2094 = vadd.f32 0.0, %v2093
      %v2095 = vpop.f32.mrb[0].mxu0
      %2096 = vmatprep.mubr.f32.mxu0 0.0
      %2097 = vmatmul.mubr.f32.gmra.mrb[0].mxu0 %v2015
      %v2098 = vpop.f32.mrb[0].mxu0
      %v2099 = vadd.f32 0.0, %v2098
      %v2100 = vpop.f32.mrb[0].mxu0
      %2101 = vdwg.mxu0
      %v2102 = vadd.f32 %v1906, %v2084
      %v2103 = vadd.f32 %v1907, %v2089
      %v2104 = vadd.f32 %v1908, %v2094
      %v2105 = vadd.f32 %v1909, %v2099
      %s2106 = scalar_lea.vmem %s1, 192
      %v2107 = vld [vmem:[%s2106] sm:$0xff]
      %v2108 = vld [vmem:[%s2106 + $0x8] sm:$0xff]
      %v2109 = vld [vmem:[%s2106 + $0x10] sm:$0xff]
      %v2110 = vld [vmem:[%s2106 + $0x18] sm:$0xff]
      %2111 = vmatprep.subr.mxu0 0.0
      %2112 = vmatpush1.msra.mxu0 %v923
      %2113 = vmatprep.subr.mxu0 0.0
      %2114 = vmatpush1.msra.mxu0 %v924
      %2115 = vmatprep.subr.mxu0 0.0
      %2116 = vmatpush1.msra.mxu0 %v925
      %2117 = vmatprep.subr.mxu0 0.0
      %2118 = vmatpush1.msra.mxu0 %v926
      %2119 = vmatprep.subr.mxu0 0.0
      %2120 = vmatpush1.msra.mxu0 %v927
      %2121 = vmatprep.subr.mxu0 0.0
      %2122 = vmatpush1.msra.mxu0 %v928
      %2123 = vmatprep.subr.mxu0 0.0
      %2124 = vmatpush1.msra.mxu0 %v929
      %2125 = vmatprep.subr.mxu0 0.0
      %2126 = vmatpush1.msra.mxu0 %v930
      %2127 = vmatprep.subr.mxu0 0.0
      %2128 = vmatpush1.msra.mxu0 %v931
      %2129 = vmatprep.subr.mxu0 0.0
      %2130 = vmatpush1.msra.mxu0 %v932
      %2131 = vmatprep.subr.mxu0 0.0
      %2132 = vmatpush1.msra.mxu0 %v933
      %2133 = vmatprep.subr.mxu0 0.0
      %2134 = vmatpush1.msra.mxu0 %v934
      %2135 = vmatprep.subr.mxu0 0.0
      %2136 = vmatpush1.msra.mxu0 %v935
      %2137 = vmatprep.subr.mxu0 0.0
      %2138 = vmatpush1.msra.mxu0 %v936
      %2139 = vmatprep.subr.mxu0 0.0
      %2140 = vmatpush1.msra.mxu0 %v937
      %2141 = vmatprep.subr.mxu0 0.0
      %2142 = vmatpush1.msra.mxu0 %v938
      %2143 = vmatprep.subr.mxu0 0.0
      %2144 = vmatpush1.msra.mxu0 0.0
      %2145 = vmatprep.subr.mxu0 0.0
      %2146 = vmatpush1.msra.mxu0 0.0
      %2147 = vmatprep.subr.mxu0 0.0
      %2148 = vmatpush1.msra.mxu0 0.0
      %2149 = vmatprep.subr.mxu0 0.0
      %2150 = vmatpush1.msra.mxu0 0.0
      %2151 = vmatprep.subr.mxu0 0.0
      %2152 = vmatpush1.msra.mxu0 0.0
      %2153 = vmatprep.subr.mxu0 0.0
      %2154 = vmatpush1.msra.mxu0 0.0
      %2155 = vmatprep.subr.mxu0 0.0
      %2156 = vmatpush1.msra.mxu0 0.0
      %2157 = vmatprep.subr.mxu0 0.0
      %2158 = vmatpush1.msra.mxu0 0.0
      %2159 = vmatprep.subr.mxu0 0.0
      %2160 = vmatpush1.msra.mxu0 0.0
      %2161 = vmatprep.subr.mxu0 0.0
      %2162 = vmatpush1.msra.mxu0 0.0
      %2163 = vmatprep.subr.mxu0 0.0
      %2164 = vmatpush1.msra.mxu0 0.0
      %2165 = vmatprep.subr.mxu0 0.0
      %2166 = vmatpush1.msra.mxu0 0.0
      %2167 = vmatprep.subr.mxu0 0.0
      %2168 = vmatpush1.msra.mxu0 0.0
      %2169 = vmatprep.subr.mxu0 0.0
      %2170 = vmatpush1.msra.mxu0 0.0
      %2171 = vmatprep.subr.mxu0 0.0
      %2172 = vmatpush1.msra.mxu0 0.0
      %2173 = vmatprep.subr.mxu0 0.0
      %2174 = vmatpush1.msra.mxu0 0.0
      %2175 = vmatprep.mubr.f32.mxu0 0.0
      %2176 = vmatmul.mubr.f32.gmra.mrb[0].mxu0 %v2107
      %v2177 = vpop.f32.mrb[0].mxu0
      %v2178 = vadd.f32 0.0, %v2177
      %v2179 = vpop.f32.mrb[0].mxu0
      %2180 = vmatprep.mubr.f32.mxu0 0.0
      %2181 = vmatmul.mubr.f32.gmra.mrb[0].mxu0 %v2108
      %v2182 = vpop.f32.mrb[0].mxu0
      %v2183 = vadd.f32 0.0, %v2182
      %v2184 = vpop.f32.mrb[0].mxu0
      %2185 = vmatprep.mubr.f32.mxu0 0.0
      %2186 = vmatmul.mubr.f32.gmra.mrb[0].mxu0 %v2109
      %v2187 = vpop.f32.mrb[0].mxu0
      %v2188 = vadd.f32 0.0, %v2187
      %v2189 = vpop.f32.mrb[0].mxu0
      %2190 = vmatprep.mubr.f32.mxu0 0.0
      %2191 = vmatmul.mubr.f32.gmra.mrb[0].mxu0 %v2110
      %v2192 = vpop.f32.mrb[0].mxu0
      %v2193 = vadd.f32 0.0, %v2192
      %v2194 = vpop.f32.mrb[0].mxu0
      %2195 = vdwg.mxu0
      %s2196 = scalar_lea.vmem %s612, 192
      %v2197 = vld [vmem:[%s2196] sm:$0xff]
      %v2198 = vld [vmem:[%s2196 + $0x8] sm:$0xff]
      %v2199 = vld [vmem:[%s2196 + $0x10] sm:$0xff]
      %v2200 = vld [vmem:[%s2196 + $0x18] sm:$0xff]
      %v2202 = vsel %vm1127, %v2178, 0
      %v2205 = vsel %vm1127, %v2183, 0
      %v2208 = vsel %vm1127, %v2188, 0
      %v2211 = vsel %vm1127, %v2193, 0
      %2213 = vmatprep.subr.mxu0 0.0
      %2214 = vmatpush1.msra.mxu0 %v2197
      %2215 = vmatprep.subr.mxu0 0.0
      %2216 = vmatpush1.msra.mxu0 %v2198
      %2217 = vmatprep.subr.mxu0 0.0
      %2218 = vmatpush1.msra.mxu0 %v2199
      %2219 = vmatprep.subr.mxu0 0.0
      %2220 = vmatpush1.msra.mxu0 %v2200
      %2221 = vmatprep.subr.mxu0 0.0
      %2222 = vmatpush1.msra.mxu0 0.0
      %2223 = vmatprep.subr.mxu0 0.0
      %2224 = vmatpush1.msra.mxu0 0.0
      %2225 = vmatprep.subr.mxu0 0.0
      %2226 = vmatpush1.msra.mxu0 0.0
      %2227 = vmatprep.subr.mxu0 0.0
      %2228 = vmatpush1.msra.mxu0 0.0
      %2229 = vmatprep.subr.mxu0 0.0
      %2230 = vmatpush1.msra.mxu0 0.0
      %2231 = vmatprep.subr.mxu0 0.0
      %2232 = vmatpush1.msra.mxu0 0.0
      %2233 = vmatprep.subr.mxu0 0.0
      %2234 = vmatpush1.msra.mxu0 0.0
      %2235 = vmatprep.subr.mxu0 0.0
      %2236 = vmatpush1.msra.mxu0 0.0
      %2237 = vmatprep.subr.mxu0 0.0
      %2238 = vmatpush1.msra.mxu0 0.0
      %2239 = vmatprep.subr.mxu0 0.0
      %2240 = vmatpush1.msra.mxu0 0.0
      %2241 = vmatprep.subr.mxu0 0.0
      %2242 = vmatpush1.msra.mxu0 0.0
      %2243 = vmatprep.subr.mxu0 0.0
      %2244 = vmatpush1.msra.mxu0 0.0
      %2245 = vmatprep.subr.mxu0 0.0
      %2246 = vmatpush1.msra.mxu0 0.0
      %2247 = vmatprep.subr.mxu0 0.0
      %2248 = vmatpush1.msra.mxu0 0.0
      %2249 = vmatprep.subr.mxu0 0.0
      %2250 = vmatpush1.msra.mxu0 0.0
      %2251 = vmatprep.subr.mxu0 0.0
      %2252 = vmatpush1.msra.mxu0 0.0
      %2253 = vmatprep.subr.mxu0 0.0
      %2254 = vmatpush1.msra.mxu0 0.0
      %2255 = vmatprep.subr.mxu0 0.0
      %2256 = vmatpush1.msra.mxu0 0.0
      %2257 = vmatprep.subr.mxu0 0.0
      %2258 = vmatpush1.msra.mxu0 0.0
      %2259 = vmatprep.subr.mxu0 0.0
      %2260 = vmatpush1.msra.mxu0 0.0
      %2261 = vmatprep.subr.mxu0 0.0
      %2262 = vmatpush1.msra.mxu0 0.0
      %2263 = vmatprep.subr.mxu0 0.0
      %2264 = vmatpush1.msra.mxu0 0.0
      %2265 = vmatprep.subr.mxu0 0.0
      %2266 = vmatpush1.msra.mxu0 0.0
      %2267 = vmatprep.subr.mxu0 0.0
      %2268 = vmatpush1.msra.mxu0 0.0
      %2269 = vmatprep.subr.mxu0 0.0
      %2270 = vmatpush1.msra.mxu0 0.0
      %2271 = vmatprep.subr.mxu0 0.0
      %2272 = vmatpush1.msra.mxu0 0.0
      %2273 = vmatprep.subr.mxu0 0.0
      %2274 = vmatpush1.msra.mxu0 0.0
      %2275 = vmatprep.subr.mxu0 0.0
      %2276 = vmatpush1.msra.mxu0 0.0
      %2277 = vmatprep.mubr.f32.mxu0 0.0
      %2278 = vmatmul.mubr.f32.gmra.mrb[0].mxu0 %v2202
      %v2279 = vpop.f32.mrb[0].mxu0
      %v2280 = vadd.f32 0.0, %v2279
      %v2281 = vpop.f32.mrb[0].mxu0
      %2282 = vmatprep.mubr.f32.mxu0 0.0
      %2283 = vmatmul.mubr.f32.gmra.mrb[0].mxu0 %v2205
      %v2284 = vpop.f32.mrb[0].mxu0
      %v2285 = vadd.f32 0.0, %v2284
      %v2286 = vpop.f32.mrb[0].mxu0
      %2287 = vmatprep.mubr.f32.mxu0 0.0
      %2288 = vmatmul.mubr.f32.gmra.mrb[0].mxu0 %v2208
      %v2289 = vpop.f32.mrb[0].mxu0
      %v2290 = vadd.f32 0.0, %v2289
      %v2291 = vpop.f32.mrb[0].mxu0
      %2292 = vmatprep.mubr.f32.mxu0 0.0
      %2293 = vmatmul.mubr.f32.gmra.mrb[0].mxu0 %v2211
      %v2294 = vpop.f32.mrb[0].mxu0
      %v2295 = vadd.f32 0.0, %v2294
      %v2296 = vpop.f32.mrb[0].mxu0
      %2297 = vdwg.mxu0
      %v2298 = vadd.f32 %v2102, %v2280
      %v2299 = vadd.f32 %v2103, %v2285
      %v2300 = vadd.f32 %v2104, %v2290
      %v2301 = vadd.f32 %v2105, %v2295
      %s2302 = scalar_lea.vmem %s1, 224
      %v2303 = vld [vmem:[%s2302] sm:$0xff]
      %v2304 = vld [vmem:[%s2302 + $0x8] sm:$0xff]
      %v2305 = vld [vmem:[%s2302 + $0x10] sm:$0xff]
      %v2306 = vld [vmem:[%s2302 + $0x18] sm:$0xff]
      %2307 = vmatprep.subr.mxu0 0.0
      %2308 = vmatpush1.msra.mxu0 %v923
      %2309 = vmatprep.subr.mxu0 0.0
      %2310 = vmatpush1.msra.mxu0 %v924
      %2311 = vmatprep.subr.mxu0 0.0
      %2312 = vmatpush1.msra.mxu0 %v925
      %2313 = vmatprep.subr.mxu0 0.0
      %2314 = vmatpush1.msra.mxu0 %v926
      %2315 = vmatprep.subr.mxu0 0.0
      %2316 = vmatpush1.msra.mxu0 %v927
      %2317 = vmatprep.subr.mxu0 0.0
      %2318 = vmatpush1.msra.mxu0 %v928
      %2319 = vmatprep.subr.mxu0 0.0
      %2320 = vmatpush1.msra.mxu0 %v929
      %2321 = vmatprep.subr.mxu0 0.0
      %2322 = vmatpush1.msra.mxu0 %v930
      %2323 = vmatprep.subr.mxu0 0.0
      %2324 = vmatpush1.msra.mxu0 %v931
      %2325 = vmatprep.subr.mxu0 0.0
      %2326 = vmatpush1.msra.mxu0 %v932
      %2327 = vmatprep.subr.mxu0 0.0
      %2328 = vmatpush1.msra.mxu0 %v933
      %2329 = vmatprep.subr.mxu0 0.0
      %2330 = vmatpush1.msra.mxu0 %v934
      %2331 = vmatprep.subr.mxu0 0.0
      %2332 = vmatpush1.msra.mxu0 %v935
      %2333 = vmatprep.subr.mxu0 0.0
      %2334 = vmatpush1.msra.mxu0 %v936
      %2335 = vmatprep.subr.mxu0 0.0
      %2336 = vmatpush1.msra.mxu0 %v937
      %2337 = vmatprep.subr.mxu0 0.0
      %2338 = vmatpush1.msra.mxu0 %v938
      %2339 = vmatprep.subr.mxu0 0.0
      %2340 = vmatpush1.msra.mxu0 0.0
      %2341 = vmatprep.subr.mxu0 0.0
      %2342 = vmatpush1.msra.mxu0 0.0
      %2343 = vmatprep.subr.mxu0 0.0
      %2344 = vmatpush1.msra.mxu0 0.0
      %2345 = vmatprep.subr.mxu0 0.0
      %2346 = vmatpush1.msra.mxu0 0.0
      %2347 = vmatprep.subr.mxu0 0.0
      %2348 = vmatpush1.msra.mxu0 0.0
      %2349 = vmatprep.subr.mxu0 0.0
      %2350 = vmatpush1.msra.mxu0 0.0
      %2351 = vmatprep.subr.mxu0 0.0
      %2352 = vmatpush1.msra.mxu0 0.0
      %2353 = vmatprep.subr.mxu0 0.0
      %2354 = vmatpush1.msra.mxu0 0.0
      %2355 = vmatprep.subr.mxu0 0.0
      %2356 = vmatpush1.msra.mxu0 0.0
      %2357 = vmatprep.subr.mxu0 0.0
      %2358 = vmatpush1.msra.mxu0 0.0
      %2359 = vmatprep.subr.mxu0 0.0
      %2360 = vmatpush1.msra.mxu0 0.0
      %2361 = vmatprep.subr.mxu0 0.0
      %2362 = vmatpush1.msra.mxu0 0.0
      %2363 = vmatprep.subr.mxu0 0.0
      %2364 = vmatpush1.msra.mxu0 0.0
      %2365 = vmatprep.subr.mxu0 0.0
      %2366 = vmatpush1.msra.mxu0 0.0
      %2367 = vmatprep.subr.mxu0 0.0
      %2368 = vmatpush1.msra.mxu0 0.0
      %2369 = vmatprep.subr.mxu0 0.0
      %2370 = vmatpush1.msra.mxu0 0.0
      %2371 = vmatprep.mubr.f32.mxu0 0.0
      %2372 = vmatmul.mubr.f32.gmra.mrb[0].mxu0 %v2303
      %v2373 = vpop.f32.mrb[0].mxu0
      %v2374 = vadd.f32 0.0, %v2373
      %v2375 = vpop.f32.mrb[0].mxu0
      %2376 = vmatprep.mubr.f32.mxu0 0.0
      %2377 = vmatmul.mubr.f32.gmra.mrb[0].mxu0 %v2304
      %v2378 = vpop.f32.mrb[0].mxu0
      %v2379 = vadd.f32 0.0, %v2378
      %v2380 = vpop.f32.mrb[0].mxu0
      %2381 = vmatprep.mubr.f32.mxu0 0.0
      %2382 = vmatmul.mubr.f32.gmra.mrb[0].mxu0 %v2305
      %v2383 = vpop.f32.mrb[0].mxu0
      %v2384 = vadd.f32 0.0, %v2383
      %v2385 = vpop.f32.mrb[0].mxu0
      %2386 = vmatprep.mubr.f32.mxu0 0.0
      %2387 = vmatmul.mubr.f32.gmra.mrb[0].mxu0 %v2306
      %v2388 = vpop.f32.mrb[0].mxu0
      %v2389 = vadd.f32 0.0, %v2388
      %v2390 = vpop.f32.mrb[0].mxu0
      %2391 = vdwg.mxu0
      %s2392 = scalar_lea.vmem %s612, 224
      %v2393 = vld [vmem:[%s2392] sm:$0xff]
      %v2394 = vld [vmem:[%s2392 + $0x8] sm:$0xff]
      %v2395 = vld [vmem:[%s2392 + $0x10] sm:$0xff]
      %v2396 = vld [vmem:[%s2392 + $0x18] sm:$0xff]
      %v2398 = vsel %vm1127, %v2374, 0
      %v2401 = vsel %vm1127, %v2379, 0
      %v2404 = vsel %vm1127, %v2384, 0
      %v2407 = vsel %vm1127, %v2389, 0
      %2409 = vmatprep.subr.mxu0 0.0
      %2410 = vmatpush1.msra.mxu0 %v2393
      %2411 = vmatprep.subr.mxu0 0.0
      %2412 = vmatpush1.msra.mxu0 %v2394
      %2413 = vmatprep.subr.mxu0 0.0
      %2414 = vmatpush1.msra.mxu0 %v2395
      %2415 = vmatprep.subr.mxu0 0.0
      %2416 = vmatpush1.msra.mxu0 %v2396
      %2417 = vmatprep.subr.mxu0 0.0
      %2418 = vmatpush1.msra.mxu0 0.0
      %2419 = vmatprep.subr.mxu0 0.0
      %2420 = vmatpush1.msra.mxu0 0.0
      %2421 = vmatprep.subr.mxu0 0.0
      %2422 = vmatpush1.msra.mxu0 0.0
      %2423 = vmatprep.subr.mxu0 0.0
      %2424 = vmatpush1.msra.mxu0 0.0
      %2425 = vmatprep.subr.mxu0 0.0
      %2426 = vmatpush1.msra.mxu0 0.0
      %2427 = vmatprep.subr.mxu0 0.0
      %2428 = vmatpush1.msra.mxu0 0.0
      %2429 = vmatprep.subr.mxu0 0.0
      %2430 = vmatpush1.msra.mxu0 0.0
      %2431 = vmatprep.subr.mxu0 0.0
      %2432 = vmatpush1.msra.mxu0 0.0
      %2433 = vmatprep.subr.mxu0 0.0
      %2434 = vmatpush1.msra.mxu0 0.0
      %2435 = vmatprep.subr.mxu0 0.0
      %2436 = vmatpush1.msra.mxu0 0.0
      %2437 = vmatprep.subr.mxu0 0.0
      %2438 = vmatpush1.msra.mxu0 0.0
      %2439 = vmatprep.subr.mxu0 0.0
      %2440 = vmatpush1.msra.mxu0 0.0
      %2441 = vmatprep.subr.mxu0 0.0
      %2442 = vmatpush1.msra.mxu0 0.0
      %2443 = vmatprep.subr.mxu0 0.0
      %2444 = vmatpush1.msra.mxu0 0.0
      %2445 = vmatprep.subr.mxu0 0.0
      %2446 = vmatpush1.msra.mxu0 0.0
      %2447 = vmatprep.subr.mxu0 0.0
      %2448 = vmatpush1.msra.mxu0 0.0
      %2449 = vmatprep.subr.mxu0 0.0
      %2450 = vmatpush1.msra.mxu0 0.0
      %2451 = vmatprep.subr.mxu0 0.0
      %2452 = vmatpush1.msra.mxu0 0.0
      %2453 = vmatprep.subr.mxu0 0.0
      %2454 = vmatpush1.msra.mxu0 0.0
      %2455 = vmatprep.subr.mxu0 0.0
      %2456 = vmatpush1.msra.mxu0 0.0
      %2457 = vmatprep.subr.mxu0 0.0
      %2458 = vmatpush1.msra.mxu0 0.0
      %2459 = vmatprep.subr.mxu0 0.0
      %2460 = vmatpush1.msra.mxu0 0.0
      %2461 = vmatprep.subr.mxu0 0.0
      %2462 = vmatpush1.msra.mxu0 0.0
      %2463 = vmatprep.subr.mxu0 0.0
      %2464 = vmatpush1.msra.mxu0 0.0
      %2465 = vmatprep.subr.mxu0 0.0
      %2466 = vmatpush1.msra.mxu0 0.0
      %2467 = vmatprep.subr.mxu0 0.0
      %2468 = vmatpush1.msra.mxu0 0.0
      %2469 = vmatprep.subr.mxu0 0.0
      %2470 = vmatpush1.msra.mxu0 0.0
      %2471 = vmatprep.subr.mxu0 0.0
      %2472 = vmatpush1.msra.mxu0 0.0
      %2473 = vmatprep.mubr.f32.mxu0 0.0
      %2474 = vmatmul.mubr.f32.gmra.mrb[0].mxu0 %v2398
      %v2475 = vpop.f32.mrb[0].mxu0
      %v2476 = vadd.f32 0.0, %v2475
      %v2477 = vpop.f32.mrb[0].mxu0
      %2478 = vmatprep.mubr.f32.mxu0 0.0
      %2479 = vmatmul.mubr.f32.gmra.mrb[0].mxu0 %v2401
      %v2480 = vpop.f32.mrb[0].mxu0
      %v2481 = vadd.f32 0.0, %v2480
      %v2482 = vpop.f32.mrb[0].mxu0
      %2483 = vmatprep.mubr.f32.mxu0 0.0
      %2484 = vmatmul.mubr.f32.gmra.mrb[0].mxu0 %v2404
      %v2485 = vpop.f32.mrb[0].mxu0
      %v2486 = vadd.f32 0.0, %v2485
      %v2487 = vpop.f32.mrb[0].mxu0
      %2488 = vmatprep.mubr.f32.mxu0 0.0
      %2489 = vmatmul.mubr.f32.gmra.mrb[0].mxu0 %v2407
      %v2490 = vpop.f32.mrb[0].mxu0
      %v2491 = vadd.f32 0.0, %v2490
      %v2492 = vpop.f32.mrb[0].mxu0
      %2493 = vdwg.mxu0
      %v2494 = vadd.f32 %v2298, %v2476
      %v2495 = vadd.f32 %v2299, %v2481
      %v2496 = vadd.f32 %v2300, %v2486
      %v2497 = vadd.f32 %v2301, %v2491
      %s2498 = scalar_lea.vmem %s1, 256
      %v2499 = vld [vmem:[%s2498] sm:$0xff]
      %v2500 = vld [vmem:[%s2498 + $0x8] sm:$0xff]
      %v2501 = vld [vmem:[%s2498 + $0x10] sm:$0xff]
      %v2502 = vld [vmem:[%s2498 + $0x18] sm:$0xff]
      %2503 = vmatprep.subr.mxu0 0.0
      %2504 = vmatpush1.msra.mxu0 %v923
      %2505 = vmatprep.subr.mxu0 0.0
      %2506 = vmatpush1.msra.mxu0 %v924
      %2507 = vmatprep.subr.mxu0 0.0
      %2508 = vmatpush1.msra.mxu0 %v925
      %2509 = vmatprep.subr.mxu0 0.0
      %2510 = vmatpush1.msra.mxu0 %v926
      %2511 = vmatprep.subr.mxu0 0.0
      %2512 = vmatpush1.msra.mxu0 %v927
      %2513 = vmatprep.subr.mxu0 0.0
      %2514 = vmatpush1.msra.mxu0 %v928
      %2515 = vmatprep.subr.mxu0 0.0
      %2516 = vmatpush1.msra.mxu0 %v929
      %2517 = vmatprep.subr.mxu0 0.0
      %2518 = vmatpush1.msra.mxu0 %v930
      %2519 = vmatprep.subr.mxu0 0.0
      %2520 = vmatpush1.msra.mxu0 %v931
      %2521 = vmatprep.subr.mxu0 0.0
      %2522 = vmatpush1.msra.mxu0 %v932
      %2523 = vmatprep.subr.mxu0 0.0
      %2524 = vmatpush1.msra.mxu0 %v933
      %2525 = vmatprep.subr.mxu0 0.0
      %2526 = vmatpush1.msra.mxu0 %v934
      %2527 = vmatprep.subr.mxu0 0.0
      %2528 = vmatpush1.msra.mxu0 %v935
      %2529 = vmatprep.subr.mxu0 0.0
      %2530 = vmatpush1.msra.mxu0 %v936
      %2531 = vmatprep.subr.mxu0 0.0
      %2532 = vmatpush1.msra.mxu0 %v937
      %2533 = vmatprep.subr.mxu0 0.0
      %2534 = vmatpush1.msra.mxu0 %v938
      %2535 = vmatprep.subr.mxu0 0.0
      %2536 = vmatpush1.msra.mxu0 0.0
      %2537 = vmatprep.subr.mxu0 0.0
      %2538 = vmatpush1.msra.mxu0 0.0
      %2539 = vmatprep.subr.mxu0 0.0
      %2540 = vmatpush1.msra.mxu0 0.0
      %2541 = vmatprep.subr.mxu0 0.0
      %2542 = vmatpush1.msra.mxu0 0.0
      %2543 = vmatprep.subr.mxu0 0.0
      %2544 = vmatpush1.msra.mxu0 0.0
      %2545 = vmatprep.subr.mxu0 0.0
      %2546 = vmatpush1.msra.mxu0 0.0
      %2547 = vmatprep.subr.mxu0 0.0
      %2548 = vmatpush1.msra.mxu0 0.0
      %2549 = vmatprep.subr.mxu0 0.0
      %2550 = vmatpush1.msra.mxu0 0.0
      %2551 = vmatprep.subr.mxu0 0.0
      %2552 = vmatpush1.msra.mxu0 0.0
      %2553 = vmatprep.subr.mxu0 0.0
      %2554 = vmatpush1.msra.mxu0 0.0
      %2555 = vmatprep.subr.mxu0 0.0
      %2556 = vmatpush1.msra.mxu0 0.0
      %2557 = vmatprep.subr.mxu0 0.0
      %2558 = vmatpush1.msra.mxu0 0.0
      %2559 = vmatprep.subr.mxu0 0.0
      %2560 = vmatpush1.msra.mxu0 0.0
      %2561 = vmatprep.subr.mxu0 0.0
      %2562 = vmatpush1.msra.mxu0 0.0
      %2563 = vmatprep.subr.mxu0 0.0
      %2564 = vmatpush1.msra.mxu0 0.0
      %2565 = vmatprep.subr.mxu0 0.0
      %2566 = vmatpush1.msra.mxu0 0.0
      %2567 = vmatprep.mubr.f32.mxu0 0.0
      %2568 = vmatmul.mubr.f32.gmra.mrb[0].mxu0 %v2499
      %v2569 = vpop.f32.mrb[0].mxu0
      %v2570 = vadd.f32 0.0, %v2569
      %v2571 = vpop.f32.mrb[0].mxu0
      %2572 = vmatprep.mubr.f32.mxu0 0.0
      %2573 = vmatmul.mubr.f32.gmra.mrb[0].mxu0 %v2500
      %v2574 = vpop.f32.mrb[0].mxu0
      %v2575 = vadd.f32 0.0, %v2574
      %v2576 = vpop.f32.mrb[0].mxu0
      %2577 = vmatprep.mubr.f32.mxu0 0.0
      %2578 = vmatmul.mubr.f32.gmra.mrb[0].mxu0 %v2501
      %v2579 = vpop.f32.mrb[0].mxu0
      %v2580 = vadd.f32 0.0, %v2579
      %v2581 = vpop.f32.mrb[0].mxu0
      %2582 = vmatprep.mubr.f32.mxu0 0.0
      %2583 = vmatmul.mubr.f32.gmra.mrb[0].mxu0 %v2502
      %v2584 = vpop.f32.mrb[0].mxu0
      %v2585 = vadd.f32 0.0, %v2584
      %v2586 = vpop.f32.mrb[0].mxu0
      %2587 = vdwg.mxu0
      %s2588 = scalar_lea.vmem %s612, 256
      %v2589 = vld [vmem:[%s2588] sm:$0xff]
      %v2590 = vld [vmem:[%s2588 + $0x8] sm:$0xff]
      %v2591 = vld [vmem:[%s2588 + $0x10] sm:$0xff]
      %v2592 = vld [vmem:[%s2588 + $0x18] sm:$0xff]
      %v2594 = vsel %vm1127, %v2570, 0
      %v2597 = vsel %vm1127, %v2575, 0
      %v2600 = vsel %vm1127, %v2580, 0
      %v2603 = vsel %vm1127, %v2585, 0
      %2605 = vmatprep.subr.mxu0 0.0
      %2606 = vmatpush1.msra.mxu0 %v2589
      %2607 = vmatprep.subr.mxu0 0.0
      %2608 = vmatpush1.msra.mxu0 %v2590
      %2609 = vmatprep.subr.mxu0 0.0
      %2610 = vmatpush1.msra.mxu0 %v2591
      %2611 = vmatprep.subr.mxu0 0.0
      %2612 = vmatpush1.msra.mxu0 %v2592
      %2613 = vmatprep.subr.mxu0 0.0
      %2614 = vmatpush1.msra.mxu0 0.0
      %2615 = vmatprep.subr.mxu0 0.0
      %2616 = vmatpush1.msra.mxu0 0.0
      %2617 = vmatprep.subr.mxu0 0.0
      %2618 = vmatpush1.msra.mxu0 0.0
      %2619 = vmatprep.subr.mxu0 0.0
      %2620 = vmatpush1.msra.mxu0 0.0
      %2621 = vmatprep.subr.mxu0 0.0
      %2622 = vmatpush1.msra.mxu0 0.0
      %2623 = vmatprep.subr.mxu0 0.0
      %2624 = vmatpush1.msra.mxu0 0.0
      %2625 = vmatprep.subr.mxu0 0.0
      %2626 = vmatpush1.msra.mxu0 0.0
      %2627 = vmatprep.subr.mxu0 0.0
      %2628 = vmatpush1.msra.mxu0 0.0
      %2629 = vmatprep.subr.mxu0 0.0
      %2630 = vmatpush1.msra.mxu0 0.0
      %2631 = vmatprep.subr.mxu0 0.0
      %2632 = vmatpush1.msra.mxu0 0.0
      %2633 = vmatprep.subr.mxu0 0.0
      %2634 = vmatpush1.msra.mxu0 0.0
      %2635 = vmatprep.subr.mxu0 0.0
      %2636 = vmatpush1.msra.mxu0 0.0
      %2637 = vmatprep.subr.mxu0 0.0
      %2638 = vmatpush1.msra.mxu0 0.0
      %2639 = vmatprep.subr.mxu0 0.0
      %2640 = vmatpush1.msra.mxu0 0.0
      %2641 = vmatprep.subr.mxu0 0.0
      %2642 = vmatpush1.msra.mxu0 0.0
      %2643 = vmatprep.subr.mxu0 0.0
      %2644 = vmatpush1.msra.mxu0 0.0
      %2645 = vmatprep.subr.mxu0 0.0
      %2646 = vmatpush1.msra.mxu0 0.0
      %2647 = vmatprep.subr.mxu0 0.0
      %2648 = vmatpush1.msra.mxu0 0.0
      %2649 = vmatprep.subr.mxu0 0.0
      %2650 = vmatpush1.msra.mxu0 0.0
      %2651 = vmatprep.subr.mxu0 0.0
      %2652 = vmatpush1.msra.mxu0 0.0
      %2653 = vmatprep.subr.mxu0 0.0
      %2654 = vmatpush1.msra.mxu0 0.0
      %2655 = vmatprep.subr.mxu0 0.0
      %2656 = vmatpush1.msra.mxu0 0.0
      %2657 = vmatprep.subr.mxu0 0.0
      %2658 = vmatpush1.msra.mxu0 0.0
      %2659 = vmatprep.subr.mxu0 0.0
      %2660 = vmatpush1.msra.mxu0 0.0
      %2661 = vmatprep.subr.mxu0 0.0
      %2662 = vmatpush1.msra.mxu0 0.0
      %2663 = vmatprep.subr.mxu0 0.0
      %2664 = vmatpush1.msra.mxu0 0.0
      %2665 = vmatprep.subr.mxu0 0.0
      %2666 = vmatpush1.msra.mxu0 0.0
      %2667 = vmatprep.subr.mxu0 0.0
      %2668 = vmatpush1.msra.mxu0 0.0
      %2669 = vmatprep.mubr.f32.mxu0 0.0
      %2670 = vmatmul.mubr.f32.gmra.mrb[0].mxu0 %v2594
      %v2671 = vpop.f32.mrb[0].mxu0
      %v2672 = vadd.f32 0.0, %v2671
      %v2673 = vpop.f32.mrb[0].mxu0
      %2674 = vmatprep.mubr.f32.mxu0 0.0
      %2675 = vmatmul.mubr.f32.gmra.mrb[0].mxu0 %v2597
      %v2676 = vpop.f32.mrb[0].mxu0
      %v2677 = vadd.f32 0.0, %v2676
      %v2678 = vpop.f32.mrb[0].mxu0
      %2679 = vmatprep.mubr.f32.mxu0 0.0
      %2680 = vmatmul.mubr.f32.gmra.mrb[0].mxu0 %v2600
      %v2681 = vpop.f32.mrb[0].mxu0
      %v2682 = vadd.f32 0.0, %v2681
      %v2683 = vpop.f32.mrb[0].mxu0
      %2684 = vmatprep.mubr.f32.mxu0 0.0
      %2685 = vmatmul.mubr.f32.gmra.mrb[0].mxu0 %v2603
      %v2686 = vpop.f32.mrb[0].mxu0
      %v2687 = vadd.f32 0.0, %v2686
      %v2688 = vpop.f32.mrb[0].mxu0
      %2689 = vdwg.mxu0
      %v2690 = vadd.f32 %v2494, %v2672
      %v2691 = vadd.f32 %v2495, %v2677
      %v2692 = vadd.f32 %v2496, %v2682
      %v2693 = vadd.f32 %v2497, %v2687
      %v2694 = vld [vmem:[%s615] sm:$0x1]
      %v2696 = vlaneseq
      %v2697 = vshrl.u32 %v2696, 7
      %v2698 = vsub.s32 0, %v2697
      %v2699 = vrot.slane %v2694, %v2698
      %v2701 = vadd.f32 %v2690, %v2699
      %v2702 = vadd.f32 %v2691, %v2699
      %v2703 = vadd.f32 %v2692, %v2699
      %v2704 = vadd.f32 %v2693, %v2699
      %v2705 = vmul.f32 %v2701, 0.5
      %v2706 = vmul.f32 %v2702, 0.5
      %v2707 = vmul.f32 %v2703, 0.5
      %v2708 = vmul.f32 %v2704, 0.5
      %v2709 = vmul.f32 %v2701, 0.70710677
      %v2710 = vmul.f32 %v2702, 0.70710677
      %v2711 = vmul.f32 %v2703, 0.70710677
      %v2712 = vmul.f32 %v2704, 0.70710677
      %v2713 = verf.f32.pop %v2709
      %v2714 = verf.f32.pop %v2710
      %v2715 = verf.f32.pop %v2711
      %v2716 = verf.f32.pop %v2712
      %v2717 = vadd.f32 %v2713, 1.0
      %v2718 = vadd.f32 %v2714, 1.0
      %v2719 = vadd.f32 %v2715, 1.0
      %v2720 = vadd.f32 %v2716, 1.0
      %v2721 = vmul.f32 %v2705, %v2717
      %v2722 = vmul.f32 %v2706, %v2718
      %v2723 = vmul.f32 %v2707, %v2719
      %v2724 = vmul.f32 %v2708, %v2720
      %v2725 = vld [vmem:[%s2] sm:$0xff]
      %v2727 = vsel %vm1127, %v2725, 0
      %2729 = vmatprep.subr.mxu0 0.0
      %2730 = vmatpush1.msra.mxu0 %v2721
      %2731 = vmatprep.subr.mxu0 0.0
      %2732 = vmatpush1.msra.mxu0 %v2722
      %2733 = vmatprep.subr.mxu0 0.0
      %2734 = vmatpush1.msra.mxu0 %v2723
      %2735 = vmatprep.subr.mxu0 0.0
      %2736 = vmatpush1.msra.mxu0 %v2724
      %2737 = vmatprep.subr.mxu0 0.0
      %2738 = vmatpush1.msra.mxu0 0.0
      %2739 = vmatprep.subr.mxu0 0.0
      %2740 = vmatpush1.msra.mxu0 0.0
      %2741 = vmatprep.subr.mxu0 0.0
      %2742 = vmatpush1.msra.mxu0 0.0
      %2743 = vmatprep.subr.mxu0 0.0
      %2744 = vmatpush1.msra.mxu0 0.0
      %2745 = vmatprep.subr.mxu0 0.0
      %2746 = vmatpush1.msra.mxu0 0.0
      %2747 = vmatprep.subr.mxu0 0.0
      %2748 = vmatpush1.msra.mxu0 0.0
      %2749 = vmatprep.subr.mxu0 0.0
      %2750 = vmatpush1.msra.mxu0 0.0
      %2751 = vmatprep.subr.mxu0 0.0
      %2752 = vmatpush1.msra.mxu0 0.0
      %2753 = vmatprep.subr.mxu0 0.0
      %2754 = vmatpush1.msra.mxu0 0.0
      %2755 = vmatprep.subr.mxu0 0.0
      %2756 = vmatpush1.msra.mxu0 0.0
      %2757 = vmatprep.subr.mxu0 0.0
      %2758 = vmatpush1.msra.mxu0 0.0
      %2759 = vmatprep.subr.mxu0 0.0
      %2760 = vmatpush1.msra.mxu0 0.0
      %2761 = vmatprep.subr.mxu0 0.0
      %2762 = vmatpush1.msra.mxu0 0.0
      %2763 = vmatprep.subr.mxu0 0.0
      %2764 = vmatpush1.msra.mxu0 0.0
      %2765 = vmatprep.subr.mxu0 0.0
      %2766 = vmatpush1.msra.mxu0 0.0
      %2767 = vmatprep.subr.mxu0 0.0
      %2768 = vmatpush1.msra.mxu0 0.0
      %2769 = vmatprep.subr.mxu0 0.0
      %2770 = vmatpush1.msra.mxu0 0.0
      %2771 = vmatprep.subr.mxu0 0.0
      %2772 = vmatpush1.msra.mxu0 0.0
      %2773 = vmatprep.subr.mxu0 0.0
      %2774 = vmatpush1.msra.mxu0 0.0
      %2775 = vmatprep.subr.mxu0 0.0
      %2776 = vmatpush1.msra.mxu0 0.0
      %2777 = vmatprep.subr.mxu0 0.0
      %2778 = vmatpush1.msra.mxu0 0.0
      %2779 = vmatprep.subr.mxu0 0.0
      %2780 = vmatpush1.msra.mxu0 0.0
      %2781 = vmatprep.subr.mxu0 0.0
      %2782 = vmatpush1.msra.mxu0 0.0
      %2783 = vmatprep.subr.mxu0 0.0
      %2784 = vmatpush1.msra.mxu0 0.0
      %2785 = vmatprep.subr.mxu0 0.0
      %2786 = vmatpush1.msra.mxu0 0.0
      %2787 = vmatprep.subr.mxu0 0.0
      %2788 = vmatpush1.msra.mxu0 0.0
      %2789 = vmatprep.subr.mxu0 0.0
      %2790 = vmatpush1.msra.mxu0 0.0
      %2791 = vmatprep.subr.mxu0 0.0
      %2792 = vmatpush1.msra.mxu0 0.0
      %2793 = vmatprep.mubr.f32.mxu0 0.0
      %2794 = vmatmul.mubr.f32.gmra.mrb[0].mxu0 %v2727
      %v2795 = vpop.f32.mrb[0].mxu0
      %v2796 = vadd.f32 0.0, %v2795
      %v2797 = vpop.f32.mrb[0].mxu0
      %2798 = vdwg.mxu0
      %v2799 = vld [vmem:[%s620] sm:$0xff]
      %v2800 = vld [vmem:[%s620 + $0x8] sm:$0xff]
      %v2801 = vld [vmem:[%s620 + $0x10] sm:$0xff]
      %v2802 = vld [vmem:[%s620 + $0x18] sm:$0xff]
      %v2803 = vld [vmem:[%s620 + $0x20] sm:$0xff]
      %v2804 = vld [vmem:[%s620 + $0x28] sm:$0xff]
      %v2805 = vld [vmem:[%s620 + $0x30] sm:$0xff]
      %v2806 = vld [vmem:[%s620 + $0x38] sm:$0xff]
      %s2807 = scalar_lea.vmem %s2, 8
      %v2808 = vld [vmem:[%s2807] sm:$0xff]
      %v2810 = vsel %vm1127, %v2808, 0
      %2812 = vmatprep.subr.mxu0 0.0
      %2813 = vmatpush1.msra.mxu0 %v2721
      %2814 = vmatprep.subr.mxu0 0.0
      %2815 = vmatpush1.msra.mxu0 %v2722
      %2816 = vmatprep.subr.mxu0 0.0
      %2817 = vmatpush1.msra.mxu0 %v2723
      %2818 = vmatprep.subr.mxu0 0.0
      %2819 = vmatpush1.msra.mxu0 %v2724
      %2820 = vmatprep.subr.mxu0 0.0
      %2821 = vmatpush1.msra.mxu0 0.0
      %2822 = vmatprep.subr.mxu0 0.0
      %2823 = vmatpush1.msra.mxu0 0.0
      %2824 = vmatprep.subr.mxu0 0.0
      %2825 = vmatpush1.msra.mxu0 0.0
      %2826 = vmatprep.subr.mxu0 0.0
      %2827 = vmatpush1.msra.mxu0 0.0
      %2828 = vmatprep.subr.mxu0 0.0
      %2829 = vmatpush1.msra.mxu0 0.0
      %2830 = vmatprep.subr.mxu0 0.0
      %2831 = vmatpush1.msra.mxu0 0.0
      %2832 = vmatprep.subr.mxu0 0.0
      %2833 = vmatpush1.msra.mxu0 0.0
      %2834 = vmatprep.subr.mxu0 0.0
      %2835 = vmatpush1.msra.mxu0 0.0
      %2836 = vmatprep.subr.mxu0 0.0
      %2837 = vmatpush1.msra.mxu0 0.0
      %2838 = vmatprep.subr.mxu0 0.0
      %2839 = vmatpush1.msra.mxu0 0.0
      %2840 = vmatprep.subr.mxu0 0.0
      %2841 = vmatpush1.msra.mxu0 0.0
      %2842 = vmatprep.subr.mxu0 0.0
      %2843 = vmatpush1.msra.mxu0 0.0
      %2844 = vmatprep.subr.mxu0 0.0
      %2845 = vmatpush1.msra.mxu0 0.0
      %2846 = vmatprep.subr.mxu0 0.0
      %2847 = vmatpush1.msra.mxu0 0.0
      %2848 = vmatprep.subr.mxu0 0.0
      %2849 = vmatpush1.msra.mxu0 0.0
      %2850 = vmatprep.subr.mxu0 0.0
      %2851 = vmatpush1.msra.mxu0 0.0
      %2852 = vmatprep.subr.mxu0 0.0
      %2853 = vmatpush1.msra.mxu0 0.0
      %2854 = vmatprep.subr.mxu0 0.0
      %2855 = vmatpush1.msra.mxu0 0.0
      %2856 = vmatprep.subr.mxu0 0.0
      %2857 = vmatpush1.msra.mxu0 0.0
      %2858 = vmatprep.subr.mxu0 0.0
      %2859 = vmatpush1.msra.mxu0 0.0
      %2860 = vmatprep.subr.mxu0 0.0
      %2861 = vmatpush1.msra.mxu0 0.0
      %2862 = vmatprep.subr.mxu0 0.0
      %2863 = vmatpush1.msra.mxu0 0.0
      %2864 = vmatprep.subr.mxu0 0.0
      %2865 = vmatpush1.msra.mxu0 0.0
      %2866 = vmatprep.subr.mxu0 0.0
      %2867 = vmatpush1.msra.mxu0 0.0
      %2868 = vmatprep.subr.mxu0 0.0
      %2869 = vmatpush1.msra.mxu0 0.0
      %2870 = vmatprep.subr.mxu0 0.0
      %2871 = vmatpush1.msra.mxu0 0.0
      %2872 = vmatprep.subr.mxu0 0.0
      %2873 = vmatpush1.msra.mxu0 0.0
      %2874 = vmatprep.subr.mxu0 0.0
      %2875 = vmatpush1.msra.mxu0 0.0
      %2876 = vmatprep.mubr.f32.mxu0 0.0
      %2877 = vmatmul.mubr.f32.gmra.mrb[0].mxu0 %v2810
      %v2878 = vpop.f32.mrb[0].mxu0
      %v2879 = vadd.f32 0.0, %v2878
      %v2880 = vpop.f32.mrb[0].mxu0
      %2881 = vdwg.mxu0
      %s2882 = scalar_lea.vmem %s620, 64
      %v2883 = vld [vmem:[%s2882] sm:$0xff]
      %v2884 = vld [vmem:[%s2882 + $0x8] sm:$0xff]
      %v2885 = vld [vmem:[%s2882 + $0x10] sm:$0xff]
      %v2886 = vld [vmem:[%s2882 + $0x18] sm:$0xff]
      %v2887 = vld [vmem:[%s2882 + $0x20] sm:$0xff]
      %v2888 = vld [vmem:[%s2882 + $0x28] sm:$0xff]
      %v2889 = vld [vmem:[%s2882 + $0x30] sm:$0xff]
      %v2890 = vld [vmem:[%s2882 + $0x38] sm:$0xff]
      %vm2891 = vcmask 523264
      %v2893 = vsel %vm2891, %v2879, 0
      %2895 = vmatprep.subr.mxu0 0.0
      %2896 = vmatpush1.msra.mxu0 %v2883
      %2897 = vmatprep.subr.mxu0 0.0
      %2898 = vmatpush1.msra.mxu0 %v2884
      %2899 = vmatprep.subr.mxu0 0.0
      %2900 = vmatpush1.msra.mxu0 %v2885
      %2901 = vmatprep.subr.mxu0 0.0
      %2902 = vmatpush1.msra.mxu0 %v2886
      %2903 = vmatprep.subr.mxu0 0.0
      %2904 = vmatpush1.msra.mxu0 %v2887
      %2905 = vmatprep.subr.mxu0 0.0
      %2906 = vmatpush1.msra.mxu0 %v2888
      %2907 = vmatprep.subr.mxu0 0.0
      %2908 = vmatpush1.msra.mxu0 %v2889
      %2909 = vmatprep.subr.mxu0 0.0
      %2910 = vmatpush1.msra.mxu0 %v2890
      %2911 = vmatprep.subr.mxu0 0.0
      %2912 = vmatpush1.msra.mxu0 0.0
      %2913 = vmatprep.subr.mxu0 0.0
      %2914 = vmatpush1.msra.mxu0 0.0
      %2915 = vmatprep.subr.mxu0 0.0
      %2916 = vmatpush1.msra.mxu0 0.0
      %2917 = vmatprep.subr.mxu0 0.0
      %2918 = vmatpush1.msra.mxu0 0.0
      %2919 = vmatprep.subr.mxu0 0.0
      %2920 = vmatpush1.msra.mxu0 0.0
      %2921 = vmatprep.subr.mxu0 0.0
      %2922 = vmatpush1.msra.mxu0 0.0
      %2923 = vmatprep.subr.mxu0 0.0
      %2924 = vmatpush1.msra.mxu0 0.0
      %2925 = vmatprep.subr.mxu0 0.0
      %2926 = vmatpush1.msra.mxu0 0.0
      %2927 = vmatprep.subr.mxu0 0.0
      %2928 = vmatpush1.msra.mxu0 0.0
      %2929 = vmatprep.subr.mxu0 0.0
      %2930 = vmatpush1.msra.mxu0 0.0
      %2931 = vmatprep.subr.mxu0 0.0
      %2932 = vmatpush1.msra.mxu0 0.0
      %2933 = vmatprep.subr.mxu0 0.0
      %2934 = vmatpush1.msra.mxu0 0.0
      %2935 = vmatprep.subr.mxu0 0.0
      %2936 = vmatpush1.msra.mxu0 0.0
      %2937 = vmatprep.subr.mxu0 0.0
      %2938 = vmatpush1.msra.mxu0 0.0
      %2939 = vmatprep.subr.mxu0 0.0
      %2940 = vmatpush1.msra.mxu0 0.0
      %2941 = vmatprep.subr.mxu0 0.0
      %2942 = vmatpush1.msra.mxu0 0.0
      %2943 = vmatprep.subr.mxu0 0.0
      %2944 = vmatpush1.msra.mxu0 0.0
      %2945 = vmatprep.subr.mxu0 0.0
      %2946 = vmatpush1.msra.mxu0 0.0
      %2947 = vmatprep.subr.mxu0 0.0
      %2948 = vmatpush1.msra.mxu0 0.0
      %2949 = vmatprep.subr.mxu0 0.0
      %2950 = vmatpush1.msra.mxu0 0.0
      %2951 = vmatprep.subr.mxu0 0.0
      %2952 = vmatpush1.msra.mxu0 0.0
      %2953 = vmatprep.subr.mxu0 0.0
      %2954 = vmatpush1.msra.mxu0 0.0
      %2955 = vmatprep.subr.mxu0 0.0
      %2956 = vmatpush1.msra.mxu0 0.0
      %2957 = vmatprep.subr.mxu0 0.0
      %2958 = vmatpush1.msra.mxu0 0.0
      %2959 = vmatprep.mubr.f32.mxu0 0.0
      %2960 = vmatmul.mubr.f32.gmra.mrb[0].mxu0 %v2893
      %v2961 = vpop.f32.mrb[0].mxu0
      %v2962 = vadd.f32 0.0, %v2961
      %v2963 = vpop.f32.mrb[0].mxu0
      %2964 = vdwg.mxu0
      %v2966 = vsel %vm2891, %v2796, 0
      %2968 = vmatprep.subr.mxu0 0.0
      %2969 = vmatpush1.msra.mxu0 %v2799
      %2970 = vmatprep.subr.mxu0 0.0
      %2971 = vmatpush1.msra.mxu0 %v2800
      %2972 = vmatprep.subr.mxu0 0.0
      %2973 = vmatpush1.msra.mxu0 %v2801
      %2974 = vmatprep.subr.mxu0 0.0
      %2975 = vmatpush1.msra.mxu0 %v2802
      %2976 = vmatprep.subr.mxu0 0.0
      %2977 = vmatpush1.msra.mxu0 %v2803
      %2978 = vmatprep.subr.mxu0 0.0
      %2979 = vmatpush1.msra.mxu0 %v2804
      %2980 = vmatprep.subr.mxu0 0.0
      %2981 = vmatpush1.msra.mxu0 %v2805
      %2982 = vmatprep.subr.mxu0 0.0
      %2983 = vmatpush1.msra.mxu0 %v2806
      %2984 = vmatprep.subr.mxu0 0.0
      %2985 = vmatpush1.msra.mxu0 0.0
      %2986 = vmatprep.subr.mxu0 0.0
      %2987 = vmatpush1.msra.mxu0 0.0
      %2988 = vmatprep.subr.mxu0 0.0
      %2989 = vmatpush1.msra.mxu0 0.0
      %2990 = vmatprep.subr.mxu0 0.0
      %2991 = vmatpush1.msra.mxu0 0.0
      %2992 = vmatprep.subr.mxu0 0.0
      %2993 = vmatpush1.msra.mxu0 0.0
      %2994 = vmatprep.subr.mxu0 0.0
      %2995 = vmatpush1.msra.mxu0 0.0
      %2996 = vmatprep.subr.mxu0 0.0
      %2997 = vmatpush1.msra.mxu0 0.0
      %2998 = vmatprep.subr.mxu0 0.0
      %2999 = vmatpush1.msra.mxu0 0.0
      %3000 = vmatprep.subr.mxu0 0.0
      %3001 = vmatpush1.msra.mxu0 0.0
      %3002 = vmatprep.subr.mxu0 0.0
      %3003 = vmatpush1.msra.mxu0 0.0
      %3004 = vmatprep.subr.mxu0 0.0
      %3005 = vmatpush1.msra.mxu0 0.0
      %3006 = vmatprep.subr.mxu0 0.0
      %3007 = vmatpush1.msra.mxu0 0.0
      %3008 = vmatprep.subr.mxu0 0.0
      %3009 = vmatpush1.msra.mxu0 0.0
      %3010 = vmatprep.subr.mxu0 0.0
      %3011 = vmatpush1.msra.mxu0 0.0
      %3012 = vmatprep.subr.mxu0 0.0
      %3013 = vmatpush1.msra.mxu0 0.0
      %3014 = vmatprep.subr.mxu0 0.0
      %3015 = vmatpush1.msra.mxu0 0.0
      %3016 = vmatprep.subr.mxu0 0.0
      %3017 = vmatpush1.msra.mxu0 0.0
      %3018 = vmatprep.subr.mxu0 0.0
      %3019 = vmatpush1.msra.mxu0 0.0
      %3020 = vmatprep.subr.mxu0 0.0
      %3021 = vmatpush1.msra.mxu0 0.0
      %3022 = vmatprep.subr.mxu0 0.0
      %3023 = vmatpush1.msra.mxu0 0.0
      %3024 = vmatprep.subr.mxu0 0.0
      %3025 = vmatpush1.msra.mxu0 0.0
      %3026 = vmatprep.subr.mxu0 0.0
      %3027 = vmatpush1.msra.mxu0 0.0
      %3028 = vmatprep.subr.mxu0 0.0
      %3029 = vmatpush1.msra.mxu0 0.0
      %3030 = vmatprep.subr.mxu0 0.0
      %3031 = vmatpush1.msra.mxu0 0.0
      %3032 = vmatprep.mubr.f32.mxu0 0.0
      %3033 = vmatmul.mubr.f32.gmra.mrb[0].mxu0 %v2966
      %v3034 = vpop.f32.mrb[0].mxu0
      %v3035 = vadd.f32 %v2962, %v3034
      %v3036 = vpop.f32.mrb[0].mxu0
      %3037 = vdwg.mxu0
      %s3038 = scalar_lea.vmem %s2, 16
      %v3039 = vld [vmem:[%s3038] sm:$0xff]
      %v3041 = vsel %vm1127, %v3039, 0
      %3043 = vmatprep.subr.mxu0 0.0
      %3044 = vmatpush1.msra.mxu0 %v2721
      %3045 = vmatprep.subr.mxu0 0.0
      %3046 = vmatpush1.msra.mxu0 %v2722
      %3047 = vmatprep.subr.mxu0 0.0
      %3048 = vmatpush1.msra.mxu0 %v2723
      %3049 = vmatprep.subr.mxu0 0.0
      %3050 = vmatpush1.msra.mxu0 %v2724
      %3051 = vmatprep.subr.mxu0 0.0
      %3052 = vmatpush1.msra.mxu0 0.0
      %3053 = vmatprep.subr.mxu0 0.0
      %3054 = vmatpush1.msra.mxu0 0.0
      %3055 = vmatprep.subr.mxu0 0.0
      %3056 = vmatpush1.msra.mxu0 0.0
      %3057 = vmatprep.subr.mxu0 0.0
      %3058 = vmatpush1.msra.mxu0 0.0
      %3059 = vmatprep.subr.mxu0 0.0
      %3060 = vmatpush1.msra.mxu0 0.0
      %3061 = vmatprep.subr.mxu0 0.0
      %3062 = vmatpush1.msra.mxu0 0.0
      %3063 = vmatprep.subr.mxu0 0.0
      %3064 = vmatpush1.msra.mxu0 0.0
      %3065 = vmatprep.subr.mxu0 0.0
      %3066 = vmatpush1.msra.mxu0 0.0
      %3067 = vmatprep.subr.mxu0 0.0
      %3068 = vmatpush1.msra.mxu0 0.0
      %3069 = vmatprep.subr.mxu0 0.0
      %3070 = vmatpush1.msra.mxu0 0.0
      %3071 = vmatprep.subr.mxu0 0.0
      %3072 = vmatpush1.msra.mxu0 0.0
      %3073 = vmatprep.subr.mxu0 0.0
      %3074 = vmatpush1.msra.mxu0 0.0
      %3075 = vmatprep.subr.mxu0 0.0
      %3076 = vmatpush1.msra.mxu0 0.0
      %3077 = vmatprep.subr.mxu0 0.0
      %3078 = vmatpush1.msra.mxu0 0.0
      %3079 = vmatprep.subr.mxu0 0.0
      %3080 = vmatpush1.msra.mxu0 0.0
      %3081 = vmatprep.subr.mxu0 0.0
      %3082 = vmatpush1.msra.mxu0 0.0
      %3083 = vmatprep.subr.mxu0 0.0
      %3084 = vmatpush1.msra.mxu0 0.0
      %3085 = vmatprep.subr.mxu0 0.0
      %3086 = vmatpush1.msra.mxu0 0.0
      %3087 = vmatprep.subr.mxu0 0.0
      %3088 = vmatpush1.msra.mxu0 0.0
      %3089 = vmatprep.subr.mxu0 0.0
      %3090 = vmatpush1.msra.mxu0 0.0
      %3091 = vmatprep.subr.mxu0 0.0
      %3092 = vmatpush1.msra.mxu0 0.0
      %3093 = vmatprep.subr.mxu0 0.0
      %3094 = vmatpush1.msra.mxu0 0.0
      %3095 = vmatprep.subr.mxu0 0.0
      %3096 = vmatpush1.msra.mxu0 0.0
      %3097 = vmatprep.subr.mxu0 0.0
      %3098 = vmatpush1.msra.mxu0 0.0
      %3099 = vmatprep.subr.mxu0 0.0
      %3100 = vmatpush1.msra.mxu0 0.0
      %3101 = vmatprep.subr.mxu0 0.0
      %3102 = vmatpush1.msra.mxu0 0.0
      %3103 = vmatprep.subr.mxu0 0.0
      %3104 = vmatpush1.msra.mxu0 0.0
      %3105 = vmatprep.subr.mxu0 0.0
      %3106 = vmatpush1.msra.mxu0 0.0
      %3107 = vmatprep.mubr.f32.mxu0 0.0
      %3108 = vmatmul.mubr.f32.gmra.mrb[0].mxu0 %v3041
      %v3109 = vpop.f32.mrb[0].mxu0
      %v3110 = vadd.f32 0.0, %v3109
      %v3111 = vpop.f32.mrb[0].mxu0
      %3112 = vdwg.mxu0
      %s3113 = scalar_lea.vmem %s620, 128
      %v3114 = vld [vmem:[%s3113] sm:$0xff]
      %v3115 = vld [vmem:[%s3113 + $0x8] sm:$0xff]
      %v3116 = vld [vmem:[%s3113 + $0x10] sm:$0xff]
      %v3117 = vld [vmem:[%s3113 + $0x18] sm:$0xff]
      %v3118 = vld [vmem:[%s3113 + $0x20] sm:$0xff]
      %v3119 = vld [vmem:[%s3113 + $0x28] sm:$0xff]
      %v3120 = vld [vmem:[%s3113 + $0x30] sm:$0xff]
      %v3121 = vld [vmem:[%s3113 + $0x38] sm:$0xff]
      %v3123 = vsel %vm2891, %v3110, 0
      %3125 = vmatprep.subr.mxu0 0.0
      %3126 = vmatpush1.msra.mxu0 %v3114
      %3127 = vmatprep.subr.mxu0 0.0
      %3128 = vmatpush1.msra.mxu0 %v3115
      %3129 = vmatprep.subr.mxu0 0.0
      %3130 = vmatpush1.msra.mxu0 %v3116
      %3131 = vmatprep.subr.mxu0 0.0
      %3132 = vmatpush1.msra.mxu0 %v3117
      %3133 = vmatprep.subr.mxu0 0.0
      %3134 = vmatpush1.msra.mxu0 %v3118
      %3135 = vmatprep.subr.mxu0 0.0
      %3136 = vmatpush1.msra.mxu0 %v3119
      %3137 = vmatprep.subr.mxu0 0.0
      %3138 = vmatpush1.msra.mxu0 %v3120
      %3139 = vmatprep.subr.mxu0 0.0
      %3140 = vmatpush1.msra.mxu0 %v3121
      %3141 = vmatprep.subr.mxu0 0.0
      %3142 = vmatpush1.msra.mxu0 0.0
      %3143 = vmatprep.subr.mxu0 0.0
      %3144 = vmatpush1.msra.mxu0 0.0
      %3145 = vmatprep.subr.mxu0 0.0
      %3146 = vmatpush1.msra.mxu0 0.0
      %3147 = vmatprep.subr.mxu0 0.0
      %3148 = vmatpush1.msra.mxu0 0.0
      %3149 = vmatprep.subr.mxu0 0.0
      %3150 = vmatpush1.msra.mxu0 0.0
      %3151 = vmatprep.subr.mxu0 0.0
      %3152 = vmatpush1.msra.mxu0 0.0
      %3153 = vmatprep.subr.mxu0 0.0
      %3154 = vmatpush1.msra.mxu0 0.0
      %3155 = vmatprep.subr.mxu0 0.0
      %3156 = vmatpush1.msra.mxu0 0.0
      %3157 = vmatprep.subr.mxu0 0.0
      %3158 = vmatpush1.msra.mxu0 0.0
      %3159 = vmatprep.subr.mxu0 0.0
      %3160 = vmatpush1.msra.mxu0 0.0
      %3161 = vmatprep.subr.mxu0 0.0
      %3162 = vmatpush1.msra.mxu0 0.0
      %3163 = vmatprep.subr.mxu0 0.0
      %3164 = vmatpush1.msra.mxu0 0.0
      %3165 = vmatprep.subr.mxu0 0.0
      %3166 = vmatpush1.msra.mxu0 0.0
      %3167 = vmatprep.subr.mxu0 0.0
      %3168 = vmatpush1.msra.mxu0 0.0
      %3169 = vmatprep.subr.mxu0 0.0
      %3170 = vmatpush1.msra.mxu0 0.0
      %3171 = vmatprep.subr.mxu0 0.0
      %3172 = vmatpush1.msra.mxu0 0.0
      %3173 = vmatprep.subr.mxu0 0.0
      %3174 = vmatpush1.msra.mxu0 0.0
      %3175 = vmatprep.subr.mxu0 0.0
      %3176 = vmatpush1.msra.mxu0 0.0
      %3177 = vmatprep.subr.mxu0 0.0
      %3178 = vmatpush1.msra.mxu0 0.0
      %3179 = vmatprep.subr.mxu0 0.0
      %3180 = vmatpush1.msra.mxu0 0.0
      %3181 = vmatprep.subr.mxu0 0.0
      %3182 = vmatpush1.msra.mxu0 0.0
      %3183 = vmatprep.subr.mxu0 0.0
      %3184 = vmatpush1.msra.mxu0 0.0
      %3185 = vmatprep.subr.mxu0 0.0
      %3186 = vmatpush1.msra.mxu0 0.0
      %3187 = vmatprep.subr.mxu0 0.0
      %3188 = vmatpush1.msra.mxu0 0.0
      %3189 = vmatprep.mubr.f32.mxu0 0.0
      %3190 = vmatmul.mubr.f32.gmra.mrb[0].mxu0 %v3123
      %v3191 = vpop.f32.mrb[0].mxu0
      %v3192 = vadd.f32 0.0, %v3191
      %v3193 = vpop.f32.mrb[0].mxu0
      %3194 = vdwg.mxu0
      %v3195 = vadd.f32 %v3035, %v3192
      %s3196 = scalar_lea.vmem %s2, 24
      %v3197 = vld [vmem:[%s3196] sm:$0xff]
      %v3199 = vsel %vm1127, %v3197, 0
      %3201 = vmatprep.subr.mxu0 0.0
      %3202 = vmatpush1.msra.mxu0 %v2721
      %3203 = vmatprep.subr.mxu0 0.0
      %3204 = vmatpush1.msra.mxu0 %v2722
      %3205 = vmatprep.subr.mxu0 0.0
      %3206 = vmatpush1.msra.mxu0 %v2723
      %3207 = vmatprep.subr.mxu0 0.0
      %3208 = vmatpush1.msra.mxu0 %v2724
      %3209 = vmatprep.subr.mxu0 0.0
      %3210 = vmatpush1.msra.mxu0 0.0
      %3211 = vmatprep.subr.mxu0 0.0
      %3212 = vmatpush1.msra.mxu0 0.0
      %3213 = vmatprep.subr.mxu0 0.0
      %3214 = vmatpush1.msra.mxu0 0.0
      %3215 = vmatprep.subr.mxu0 0.0
      %3216 = vmatpush1.msra.mxu0 0.0
      %3217 = vmatprep.subr.mxu0 0.0
      %3218 = vmatpush1.msra.mxu0 0.0
      %3219 = vmatprep.subr.mxu0 0.0
      %3220 = vmatpush1.msra.mxu0 0.0
      %3221 = vmatprep.subr.mxu0 0.0
      %3222 = vmatpush1.msra.mxu0 0.0
      %3223 = vmatprep.subr.mxu0 0.0
      %3224 = vmatpush1.msra.mxu0 0.0
      %3225 = vmatprep.subr.mxu0 0.0
      %3226 = vmatpush1.msra.mxu0 0.0
      %3227 = vmatprep.subr.mxu0 0.0
      %3228 = vmatpush1.msra.mxu0 0.0
      %3229 = vmatprep.subr.mxu0 0.0
      %3230 = vmatpush1.msra.mxu0 0.0
      %3231 = vmatprep.subr.mxu0 0.0
      %3232 = vmatpush1.msra.mxu0 0.0
      %3233 = vmatprep.subr.mxu0 0.0
      %3234 = vmatpush1.msra.mxu0 0.0
      %3235 = vmatprep.subr.mxu0 0.0
      %3236 = vmatpush1.msra.mxu0 0.0
      %3237 = vmatprep.subr.mxu0 0.0
      %3238 = vmatpush1.msra.mxu0 0.0
      %3239 = vmatprep.subr.mxu0 0.0
      %3240 = vmatpush1.msra.mxu0 0.0
      %3241 = vmatprep.subr.mxu0 0.0
      %3242 = vmatpush1.msra.mxu0 0.0
      %3243 = vmatprep.subr.mxu0 0.0
      %3244 = vmatpush1.msra.mxu0 0.0
      %3245 = vmatprep.subr.mxu0 0.0
      %3246 = vmatpush1.msra.mxu0 0.0
      %3247 = vmatprep.subr.mxu0 0.0
      %3248 = vmatpush1.msra.mxu0 0.0
      %3249 = vmatprep.subr.mxu0 0.0
      %3250 = vmatpush1.msra.mxu0 0.0
      %3251 = vmatprep.subr.mxu0 0.0
      %3252 = vmatpush1.msra.mxu0 0.0
      %3253 = vmatprep.subr.mxu0 0.0
      %3254 = vmatpush1.msra.mxu0 0.0
      %3255 = vmatprep.subr.mxu0 0.0
      %3256 = vmatpush1.msra.mxu0 0.0
      %3257 = vmatprep.subr.mxu0 0.0
      %3258 = vmatpush1.msra.mxu0 0.0
      %3259 = vmatprep.subr.mxu0 0.0
      %3260 = vmatpush1.msra.mxu0 0.0
      %3261 = vmatprep.subr.mxu0 0.0
      %3262 = vmatpush1.msra.mxu0 0.0
      %3263 = vmatprep.subr.mxu0 0.0
      %3264 = vmatpush1.msra.mxu0 0.0
      %3265 = vmatprep.mubr.f32.mxu0 0.0
      %3266 = vmatmul.mubr.f32.gmra.mrb[0].mxu0 %v3199
      %v3267 = vpop.f32.mrb[0].mxu0
      %v3268 = vadd.f32 0.0, %v3267
      %v3269 = vpop.f32.mrb[0].mxu0
      %3270 = vdwg.mxu0
      %s3271 = scalar_lea.vmem %s620, 192
      %v3272 = vld [vmem:[%s3271] sm:$0xff]
      %v3273 = vld [vmem:[%s3271 + $0x8] sm:$0xff]
      %v3274 = vld [vmem:[%s3271 + $0x10] sm:$0xff]
      %v3275 = vld [vmem:[%s3271 + $0x18] sm:$0xff]
      %v3276 = vld [vmem:[%s3271 + $0x20] sm:$0xff]
      %v3277 = vld [vmem:[%s3271 + $0x28] sm:$0xff]
      %v3278 = vld [vmem:[%s3271 + $0x30] sm:$0xff]
      %v3279 = vld [vmem:[%s3271 + $0x38] sm:$0xff]
      %v3281 = vsel %vm2891, %v3268, 0
      %3283 = vmatprep.subr.mxu0 0.0
      %3284 = vmatpush1.msra.mxu0 %v3272
      %3285 = vmatprep.subr.mxu0 0.0
      %3286 = vmatpush1.msra.mxu0 %v3273
      %3287 = vmatprep.subr.mxu0 0.0
      %3288 = vmatpush1.msra.mxu0 %v3274
      %3289 = vmatprep.subr.mxu0 0.0
      %3290 = vmatpush1.msra.mxu0 %v3275
      %3291 = vmatprep.subr.mxu0 0.0
      %3292 = vmatpush1.msra.mxu0 %v3276
      %3293 = vmatprep.subr.mxu0 0.0
      %3294 = vmatpush1.msra.mxu0 %v3277
      %3295 = vmatprep.subr.mxu0 0.0
      %3296 = vmatpush1.msra.mxu0 %v3278
      %3297 = vmatprep.subr.mxu0 0.0
      %3298 = vmatpush1.msra.mxu0 %v3279
      %3299 = vmatprep.subr.mxu0 0.0
      %3300 = vmatpush1.msra.mxu0 0.0
      %3301 = vmatprep.subr.mxu0 0.0
      %3302 = vmatpush1.msra.mxu0 0.0
      %3303 = vmatprep.subr.mxu0 0.0
      %3304 = vmatpush1.msra.mxu0 0.0
      %3305 = vmatprep.subr.mxu0 0.0
      %3306 = vmatpush1.msra.mxu0 0.0
      %3307 = vmatprep.subr.mxu0 0.0
      %3308 = vmatpush1.msra.mxu0 0.0
      %3309 = vmatprep.subr.mxu0 0.0
      %3310 = vmatpush1.msra.mxu0 0.0
      %3311 = vmatprep.subr.mxu0 0.0
      %3312 = vmatpush1.msra.mxu0 0.0
      %3313 = vmatprep.subr.mxu0 0.0
      %3314 = vmatpush1.msra.mxu0 0.0
      %3315 = vmatprep.subr.mxu0 0.0
      %3316 = vmatpush1.msra.mxu0 0.0
      %3317 = vmatprep.subr.mxu0 0.0
      %3318 = vmatpush1.msra.mxu0 0.0
      %3319 = vmatprep.subr.mxu0 0.0
      %3320 = vmatpush1.msra.mxu0 0.0
      %3321 = vmatprep.subr.mxu0 0.0
      %3322 = vmatpush1.msra.mxu0 0.0
      %3323 = vmatprep.subr.mxu0 0.0
      %3324 = vmatpush1.msra.mxu0 0.0
      %3325 = vmatprep.subr.mxu0 0.0
      %3326 = vmatpush1.msra.mxu0 0.0
      %3327 = vmatprep.subr.mxu0 0.0
      %3328 = vmatpush1.msra.mxu0 0.0
      %3329 = vmatprep.subr.mxu0 0.0
      %3330 = vmatpush1.msra.mxu0 0.0
      %3331 = vmatprep.subr.mxu0 0.0
      %3332 = vmatpush1.msra.mxu0 0.0
      %3333 = vmatprep.subr.mxu0 0.0
      %3334 = vmatpush1.msra.mxu0 0.0
      %3335 = vmatprep.subr.mxu0 0.0
      %3336 = vmatpush1.msra.mxu0 0.0
      %3337 = vmatprep.subr.mxu0 0.0
      %3338 = vmatpush1.msra.mxu0 0.0
      %3339 = vmatprep.subr.mxu0 0.0
      %3340 = vmatpush1.msra.mxu0 0.0
      %3341 = vmatprep.subr.mxu0 0.0
      %3342 = vmatpush1.msra.mxu0 0.0
      %3343 = vmatprep.subr.mxu0 0.0
      %3344 = vmatpush1.msra.mxu0 0.0
      %3345 = vmatprep.subr.mxu0 0.0
      %3346 = vmatpush1.msra.mxu0 0.0
      %3347 = vmatprep.mubr.f32.mxu0 0.0
      %3348 = vmatmul.mubr.f32.gmra.mrb[0].mxu0 %v3281
      %v3349 = vpop.f32.mrb[0].mxu0
      %v3350 = vadd.f32 0.0, %v3349
      %v3351 = vpop.f32.mrb[0].mxu0
      %3352 = vdwg.mxu0
      %v3353 = vadd.f32 %v3195, %v3350
      %s3354 = scalar_lea.vmem %s2, 32
      %v3355 = vld [vmem:[%s3354] sm:$0xff]
      %v3357 = vsel %vm1127, %v3355, 0
      %3359 = vmatprep.subr.mxu0 0.0
      %3360 = vmatpush1.msra.mxu0 %v2721
      %3361 = vmatprep.subr.mxu0 0.0
      %3362 = vmatpush1.msra.mxu0 %v2722
      %3363 = vmatprep.subr.mxu0 0.0
      %3364 = vmatpush1.msra.mxu0 %v2723
      %3365 = vmatprep.subr.mxu0 0.0
      %3366 = vmatpush1.msra.mxu0 %v2724
      %3367 = vmatprep.subr.mxu0 0.0
      %3368 = vmatpush1.msra.mxu0 0.0
      %3369 = vmatprep.subr.mxu0 0.0
      %3370 = vmatpush1.msra.mxu0 0.0
      %3371 = vmatprep.subr.mxu0 0.0
      %3372 = vmatpush1.msra.mxu0 0.0
      %3373 = vmatprep.subr.mxu0 0.0
      %3374 = vmatpush1.msra.mxu0 0.0
      %3375 = vmatprep.subr.mxu0 0.0
      %3376 = vmatpush1.msra.mxu0 0.0
      %3377 = vmatprep.subr.mxu0 0.0
      %3378 = vmatpush1.msra.mxu0 0.0
      %3379 = vmatprep.subr.mxu0 0.0
      %3380 = vmatpush1.msra.mxu0 0.0
      %3381 = vmatprep.subr.mxu0 0.0
      %3382 = vmatpush1.msra.mxu0 0.0
      %3383 = vmatprep.subr.mxu0 0.0
      %3384 = vmatpush1.msra.mxu0 0.0
      %3385 = vmatprep.subr.mxu0 0.0
      %3386 = vmatpush1.msra.mxu0 0.0
      %3387 = vmatprep.subr.mxu0 0.0
      %3388 = vmatpush1.msra.mxu0 0.0
      %3389 = vmatprep.subr.mxu0 0.0
      %3390 = vmatpush1.msra.mxu0 0.0
      %3391 = vmatprep.subr.mxu0 0.0
      %3392 = vmatpush1.msra.mxu0 0.0
      %3393 = vmatprep.subr.mxu0 0.0
      %3394 = vmatpush1.msra.mxu0 0.0
      %3395 = vmatprep.subr.mxu0 0.0
      %3396 = vmatpush1.msra.mxu0 0.0
      %3397 = vmatprep.subr.mxu0 0.0
      %3398 = vmatpush1.msra.mxu0 0.0
      %3399 = vmatprep.subr.mxu0 0.0
      %3400 = vmatpush1.msra.mxu0 0.0
      %3401 = vmatprep.subr.mxu0 0.0
      %3402 = vmatpush1.msra.mxu0 0.0
      %3403 = vmatprep.subr.mxu0 0.0
      %3404 = vmatpush1.msra.mxu0 0.0
      %3405 = vmatprep.subr.mxu0 0.0
      %3406 = vmatpush1.msra.mxu0 0.0
      %3407 = vmatprep.subr.mxu0 0.0
      %3408 = vmatpush1.msra.mxu0 0.0
      %3409 = vmatprep.subr.mxu0 0.0
      %3410 = vmatpush1.msra.mxu0 0.0
      %3411 = vmatprep.subr.mxu0 0.0
      %3412 = vmatpush1.msra.mxu0 0.0
      %3413 = vmatprep.subr.mxu0 0.0
      %3414 = vmatpush1.msra.mxu0 0.0
      %3415 = vmatprep.subr.mxu0 0.0
      %3416 = vmatpush1.msra.mxu0 0.0
      %3417 = vmatprep.subr.mxu0 0.0
      %3418 = vmatpush1.msra.mxu0 0.0
      %3419 = vmatprep.subr.mxu0 0.0
      %3420 = vmatpush1.msra.mxu0 0.0
      %3421 = vmatprep.subr.mxu0 0.0
      %3422 = vmatpush1.msra.mxu0 0.0
      %3423 = vmatprep.mubr.f32.mxu0 0.0
      %3424 = vmatmul.mubr.f32.gmra.mrb[0].mxu0 %v3357
      %v3425 = vpop.f32.mrb[0].mxu0
      %v3426 = vadd.f32 0.0, %v3425
      %v3427 = vpop.f32.mrb[0].mxu0
      %3428 = vdwg.mxu0
      %s3429 = scalar_lea.vmem %s620, 256
      %v3430 = vld [vmem:[%s3429] sm:$0xff]
      %v3431 = vld [vmem:[%s3429 + $0x8] sm:$0xff]
      %v3432 = vld [vmem:[%s3429 + $0x10] sm:$0xff]
      %v3433 = vld [vmem:[%s3429 + $0x18] sm:$0xff]
      %v3434 = vld [vmem:[%s3429 + $0x20] sm:$0xff]
      %v3435 = vld [vmem:[%s3429 + $0x28] sm:$0xff]
      %v3436 = vld [vmem:[%s3429 + $0x30] sm:$0xff]
      %v3437 = vld [vmem:[%s3429 + $0x38] sm:$0xff]
      %v3439 = vsel %vm2891, %v3426, 0
      %3441 = vmatprep.subr.mxu0 0.0
      %3442 = vmatpush1.msra.mxu0 %v3430
      %3443 = vmatprep.subr.mxu0 0.0
      %3444 = vmatpush1.msra.mxu0 %v3431
      %3445 = vmatprep.subr.mxu0 0.0
      %3446 = vmatpush1.msra.mxu0 %v3432
      %3447 = vmatprep.subr.mxu0 0.0
      %3448 = vmatpush1.msra.mxu0 %v3433
      %3449 = vmatprep.subr.mxu0 0.0
      %3450 = vmatpush1.msra.mxu0 %v3434
      %3451 = vmatprep.subr.mxu0 0.0
      %3452 = vmatpush1.msra.mxu0 %v3435
      %3453 = vmatprep.subr.mxu0 0.0
      %3454 = vmatpush1.msra.mxu0 %v3436
      %3455 = vmatprep.subr.mxu0 0.0
      %3456 = vmatpush1.msra.mxu0 %v3437
      %3457 = vmatprep.subr.mxu0 0.0
      %3458 = vmatpush1.msra.mxu0 0.0
      %3459 = vmatprep.subr.mxu0 0.0
      %3460 = vmatpush1.msra.mxu0 0.0
      %3461 = vmatprep.subr.mxu0 0.0
      %3462 = vmatpush1.msra.mxu0 0.0
      %3463 = vmatprep.subr.mxu0 0.0
      %3464 = vmatpush1.msra.mxu0 0.0
      %3465 = vmatprep.subr.mxu0 0.0
      %3466 = vmatpush1.msra.mxu0 0.0
      %3467 = vmatprep.subr.mxu0 0.0
      %3468 = vmatpush1.msra.mxu0 0.0
      %3469 = vmatprep.subr.mxu0 0.0
      %3470 = vmatpush1.msra.mxu0 0.0
      %3471 = vmatprep.subr.mxu0 0.0
      %3472 = vmatpush1.msra.mxu0 0.0
      %3473 = vmatprep.subr.mxu0 0.0
      %3474 = vmatpush1.msra.mxu0 0.0
      %3475 = vmatprep.subr.mxu0 0.0
      %3476 = vmatpush1.msra.mxu0 0.0
      %3477 = vmatprep.subr.mxu0 0.0
      %3478 = vmatpush1.msra.mxu0 0.0
      %3479 = vmatprep.subr.mxu0 0.0
      %3480 = vmatpush1.msra.mxu0 0.0
      %3481 = vmatprep.subr.mxu0 0.0
      %3482 = vmatpush1.msra.mxu0 0.0
      %3483 = vmatprep.subr.mxu0 0.0
      %3484 = vmatpush1.msra.mxu0 0.0
      %3485 = vmatprep.subr.mxu0 0.0
      %3486 = vmatpush1.msra.mxu0 0.0
      %3487 = vmatprep.subr.mxu0 0.0
      %3488 = vmatpush1.msra.mxu0 0.0
      %3489 = vmatprep.subr.mxu0 0.0
      %3490 = vmatpush1.msra.mxu0 0.0
      %3491 = vmatprep.subr.mxu0 0.0
      %3492 = vmatpush1.msra.mxu0 0.0
      %3493 = vmatprep.subr.mxu0 0.0
      %3494 = vmatpush1.msra.mxu0 0.0
      %3495 = vmatprep.subr.mxu0 0.0
      %3496 = vmatpush1.msra.mxu0 0.0
      %3497 = vmatprep.subr.mxu0 0.0
      %3498 = vmatpush1.msra.mxu0 0.0
      %3499 = vmatprep.subr.mxu0 0.0
      %3500 = vmatpush1.msra.mxu0 0.0
      %3501 = vmatprep.subr.mxu0 0.0
      %3502 = vmatpush1.msra.mxu0 0.0
      %3503 = vmatprep.subr.mxu0 0.0
      %3504 = vmatpush1.msra.mxu0 0.0
      %3505 = vmatprep.mubr.f32.mxu0 0.0
      %3506 = vmatmul.mubr.f32.gmra.mrb[0].mxu0 %v3439
      %v3507 = vpop.f32.mrb[0].mxu0
      %v3508 = vadd.f32 0.0, %v3507
      %v3509 = vpop.f32.mrb[0].mxu0
      %3510 = vdwg.mxu0
      %v3511 = vadd.f32 %v3353, %v3508
      %s3512 = scalar_lea.vmem %s2, 40
      %v3513 = vld [vmem:[%s3512] sm:$0xff]
      %v3515 = vsel %vm1127, %v3513, 0
      %3517 = vmatprep.subr.mxu0 0.0
      %3518 = vmatpush1.msra.mxu0 %v2721
      %3519 = vmatprep.subr.mxu0 0.0
      %3520 = vmatpush1.msra.mxu0 %v2722
      %3521 = vmatprep.subr.mxu0 0.0
      %3522 = vmatpush1.msra.mxu0 %v2723
      %3523 = vmatprep.subr.mxu0 0.0
      %3524 = vmatpush1.msra.mxu0 %v2724
      %3525 = vmatprep.subr.mxu0 0.0
      %3526 = vmatpush1.msra.mxu0 0.0
      %3527 = vmatprep.subr.mxu0 0.0
      %3528 = vmatpush1.msra.mxu0 0.0
      %3529 = vmatprep.subr.mxu0 0.0
      %3530 = vmatpush1.msra.mxu0 0.0
      %3531 = vmatprep.subr.mxu0 0.0
      %3532 = vmatpush1.msra.mxu0 0.0
      %3533 = vmatprep.subr.mxu0 0.0
      %3534 = vmatpush1.msra.mxu0 0.0
      %3535 = vmatprep.subr.mxu0 0.0
      %3536 = vmatpush1.msra.mxu0 0.0
      %3537 = vmatprep.subr.mxu0 0.0
      %3538 = vmatpush1.msra.mxu0 0.0
      %3539 = vmatprep.subr.mxu0 0.0
      %3540 = vmatpush1.msra.mxu0 0.0
      %3541 = vmatprep.subr.mxu0 0.0
      %3542 = vmatpush1.msra.mxu0 0.0
      %3543 = vmatprep.subr.mxu0 0.0
      %3544 = vmatpush1.msra.mxu0 0.0
      %3545 = vmatprep.subr.mxu0 0.0
      %3546 = vmatpush1.msra.mxu0 0.0
      %3547 = vmatprep.subr.mxu0 0.0
      %3548 = vmatpush1.msra.mxu0 0.0
      %3549 = vmatprep.subr.mxu0 0.0
      %3550 = vmatpush1.msra.mxu0 0.0
      %3551 = vmatprep.subr.mxu0 0.0
      %3552 = vmatpush1.msra.mxu0 0.0
      %3553 = vmatprep.subr.mxu0 0.0
      %3554 = vmatpush1.msra.mxu0 0.0
      %3555 = vmatprep.subr.mxu0 0.0
      %3556 = vmatpush1.msra.mxu0 0.0
      %3557 = vmatprep.subr.mxu0 0.0
      %3558 = vmatpush1.msra.mxu0 0.0
      %3559 = vmatprep.subr.mxu0 0.0
      %3560 = vmatpush1.msra.mxu0 0.0
      %3561 = vmatprep.subr.mxu0 0.0
      %3562 = vmatpush1.msra.mxu0 0.0
      %3563 = vmatprep.subr.mxu0 0.0
      %3564 = vmatpush1.msra.mxu0 0.0
      %3565 = vmatprep.subr.mxu0 0.0
      %3566 = vmatpush1.msra.mxu0 0.0
      %3567 = vmatprep.subr.mxu0 0.0
      %3568 = vmatpush1.msra.mxu0 0.0
      %3569 = vmatprep.subr.mxu0 0.0
      %3570 = vmatpush1.msra.mxu0 0.0
      %3571 = vmatprep.subr.mxu0 0.0
      %3572 = vmatpush1.msra.mxu0 0.0
      %3573 = vmatprep.subr.mxu0 0.0
      %3574 = vmatpush1.msra.mxu0 0.0
      %3575 = vmatprep.subr.mxu0 0.0
      %3576 = vmatpush1.msra.mxu0 0.0
      %3577 = vmatprep.subr.mxu0 0.0
      %3578 = vmatpush1.msra.mxu0 0.0
      %3579 = vmatprep.subr.mxu0 0.0
      %3580 = vmatpush1.msra.mxu0 0.0
      %3581 = vmatprep.mubr.f32.mxu0 0.0
      %3582 = vmatmul.mubr.f32.gmra.mrb[0].mxu0 %v3515
      %v3583 = vpop.f32.mrb[0].mxu0
      %v3584 = vadd.f32 0.0, %v3583
      %v3585 = vpop.f32.mrb[0].mxu0
      %3586 = vdwg.mxu0
      %s3587 = scalar_lea.vmem %s620, 320
      %v3588 = vld [vmem:[%s3587] sm:$0xff]
      %v3589 = vld [vmem:[%s3587 + $0x8] sm:$0xff]
      %v3590 = vld [vmem:[%s3587 + $0x10] sm:$0xff]
      %v3591 = vld [vmem:[%s3587 + $0x18] sm:$0xff]
      %v3592 = vld [vmem:[%s3587 + $0x20] sm:$0xff]
      %v3593 = vld [vmem:[%s3587 + $0x28] sm:$0xff]
      %v3594 = vld [vmem:[%s3587 + $0x30] sm:$0xff]
      %v3595 = vld [vmem:[%s3587 + $0x38] sm:$0xff]
      %v3597 = vsel %vm2891, %v3584, 0
      %3599 = vmatprep.subr.mxu0 0.0
      %3600 = vmatpush1.msra.mxu0 %v3588
      %3601 = vmatprep.subr.mxu0 0.0
      %3602 = vmatpush1.msra.mxu0 %v3589
      %3603 = vmatprep.subr.mxu0 0.0
      %3604 = vmatpush1.msra.mxu0 %v3590
      %3605 = vmatprep.subr.mxu0 0.0
      %3606 = vmatpush1.msra.mxu0 %v3591
      %3607 = vmatprep.subr.mxu0 0.0
      %3608 = vmatpush1.msra.mxu0 %v3592
      %3609 = vmatprep.subr.mxu0 0.0
      %3610 = vmatpush1.msra.mxu0 %v3593
      %3611 = vmatprep.subr.mxu0 0.0
      %3612 = vmatpush1.msra.mxu0 %v3594
      %3613 = vmatprep.subr.mxu0 0.0
      %3614 = vmatpush1.msra.mxu0 %v3595
      %3615 = vmatprep.subr.mxu0 0.0
      %3616 = vmatpush1.msra.mxu0 0.0
      %3617 = vmatprep.subr.mxu0 0.0
      %3618 = vmatpush1.msra.mxu0 0.0
      %3619 = vmatprep.subr.mxu0 0.0
      %3620 = vmatpush1.msra.mxu0 0.0
      %3621 = vmatprep.subr.mxu0 0.0
      %3622 = vmatpush1.msra.mxu0 0.0
      %3623 = vmatprep.subr.mxu0 0.0
      %3624 = vmatpush1.msra.mxu0 0.0
      %3625 = vmatprep.subr.mxu0 0.0
      %3626 = vmatpush1.msra.mxu0 0.0
      %3627 = vmatprep.subr.mxu0 0.0
      %3628 = vmatpush1.msra.mxu0 0.0
      %3629 = vmatprep.subr.mxu0 0.0
      %3630 = vmatpush1.msra.mxu0 0.0
      %3631 = vmatprep.subr.mxu0 0.0
      %3632 = vmatpush1.msra.mxu0 0.0
      %3633 = vmatprep.subr.mxu0 0.0
      %3634 = vmatpush1.msra.mxu0 0.0
      %3635 = vmatprep.subr.mxu0 0.0
      %3636 = vmatpush1.msra.mxu0 0.0
      %3637 = vmatprep.subr.mxu0 0.0
      %3638 = vmatpush1.msra.mxu0 0.0
      %3639 = vmatprep.subr.mxu0 0.0
      %3640 = vmatpush1.msra.mxu0 0.0
      %3641 = vmatprep.subr.mxu0 0.0
      %3642 = vmatpush1.msra.mxu0 0.0
      %3643 = vmatprep.subr.mxu0 0.0
      %3644 = vmatpush1.msra.mxu0 0.0
      %3645 = vmatprep.subr.mxu0 0.0
      %3646 = vmatpush1.msra.mxu0 0.0
      %3647 = vmatprep.subr.mxu0 0.0
      %3648 = vmatpush1.msra.mxu0 0.0
      %3649 = vmatprep.subr.mxu0 0.0
      %3650 = vmatpush1.msra.mxu0 0.0
      %3651 = vmatprep.subr.mxu0 0.0
      %3652 = vmatpush1.msra.mxu0 0.0
      %3653 = vmatprep.subr.mxu0 0.0
      %3654 = vmatpush1.msra.mxu0 0.0
      %3655 = vmatprep.subr.mxu0 0.0
      %3656 = vmatpush1.msra.mxu0 0.0
      %3657 = vmatprep.subr.mxu0 0.0
      %3658 = vmatpush1.msra.mxu0 0.0
      %3659 = vmatprep.subr.mxu0 0.0
      %3660 = vmatpush1.msra.mxu0 0.0
      %3661 = vmatprep.subr.mxu0 0.0
      %3662 = vmatpush1.msra.mxu0 0.0
      %3663 = vmatprep.mubr.f32.mxu0 0.0
      %3664 = vmatmul.mubr.f32.gmra.mrb[0].mxu0 %v3597
      %v3665 = vpop.f32.mrb[0].mxu0
      %v3666 = vadd.f32 0.0, %v3665
      %v3667 = vpop.f32.mrb[0].mxu0
      %3668 = vdwg.mxu0
      %v3669 = vadd.f32 %v3511, %v3666
      %s3670 = scalar_lea.vmem %s2, 48
      %v3671 = vld [vmem:[%s3670] sm:$0xff]
      %v3673 = vsel %vm1127, %v3671, 0
      %3675 = vmatprep.subr.mxu0 0.0
      %3676 = vmatpush1.msra.mxu0 %v2721
      %3677 = vmatprep.subr.mxu0 0.0
      %3678 = vmatpush1.msra.mxu0 %v2722
      %3679 = vmatprep.subr.mxu0 0.0
      %3680 = vmatpush1.msra.mxu0 %v2723
      %3681 = vmatprep.subr.mxu0 0.0
      %3682 = vmatpush1.msra.mxu0 %v2724
      %3683 = vmatprep.subr.mxu0 0.0
      %3684 = vmatpush1.msra.mxu0 0.0
      %3685 = vmatprep.subr.mxu0 0.0
      %3686 = vmatpush1.msra.mxu0 0.0
      %3687 = vmatprep.subr.mxu0 0.0
      %3688 = vmatpush1.msra.mxu0 0.0
      %3689 = vmatprep.subr.mxu0 0.0
      %3690 = vmatpush1.msra.mxu0 0.0
      %3691 = vmatprep.subr.mxu0 0.0
      %3692 = vmatpush1.msra.mxu0 0.0
      %3693 = vmatprep.subr.mxu0 0.0
      %3694 = vmatpush1.msra.mxu0 0.0
      %3695 = vmatprep.subr.mxu0 0.0
      %3696 = vmatpush1.msra.mxu0 0.0
      %3697 = vmatprep.subr.mxu0 0.0
      %3698 = vmatpush1.msra.mxu0 0.0
      %3699 = vmatprep.subr.mxu0 0.0
      %3700 = vmatpush1.msra.mxu0 0.0
      %3701 = vmatprep.subr.mxu0 0.0
      %3702 = vmatpush1.msra.mxu0 0.0
      %3703 = vmatprep.subr.mxu0 0.0
      %3704 = vmatpush1.msra.mxu0 0.0
      %3705 = vmatprep.subr.mxu0 0.0
      %3706 = vmatpush1.msra.mxu0 0.0
      %3707 = vmatprep.subr.mxu0 0.0
      %3708 = vmatpush1.msra.mxu0 0.0
      %3709 = vmatprep.subr.mxu0 0.0
      %3710 = vmatpush1.msra.mxu0 0.0
      %3711 = vmatprep.subr.mxu0 0.0
      %3712 = vmatpush1.msra.mxu0 0.0
      %3713 = vmatprep.subr.mxu0 0.0
      %3714 = vmatpush1.msra.mxu0 0.0
      %3715 = vmatprep.subr.mxu0 0.0
      %3716 = vmatpush1.msra.mxu0 0.0
      %3717 = vmatprep.subr.mxu0 0.0
      %3718 = vmatpush1.msra.mxu0 0.0
      %3719 = vmatprep.subr.mxu0 0.0
      %3720 = vmatpush1.msra.mxu0 0.0
      %3721 = vmatprep.subr.mxu0 0.0
      %3722 = vmatpush1.msra.mxu0 0.0
      %3723 = vmatprep.subr.mxu0 0.0
      %3724 = vmatpush1.msra.mxu0 0.0
      %3725 = vmatprep.subr.mxu0 0.0
      %3726 = vmatpush1.msra.mxu0 0.0
      %3727 = vmatprep.subr.mxu0 0.0
      %3728 = vmatpush1.msra.mxu0 0.0
      %3729 = vmatprep.subr.mxu0 0.0
      %3730 = vmatpush1.msra.mxu0 0.0
      %3731 = vmatprep.subr.mxu0 0.0
      %3732 = vmatpush1.msra.mxu0 0.0
      %3733 = vmatprep.subr.mxu0 0.0
      %3734 = vmatpush1.msra.mxu0 0.0
      %3735 = vmatprep.subr.mxu0 0.0
      %3736 = vmatpush1.msra.mxu0 0.0
      %3737 = vmatprep.subr.mxu0 0.0
      %3738 = vmatpush1.msra.mxu0 0.0
      %3739 = vmatprep.mubr.f32.mxu0 0.0
      %3740 = vmatmul.mubr.f32.gmra.mrb[0].mxu0 %v3673
      %v3741 = vpop.f32.mrb[0].mxu0
      %v3742 = vadd.f32 0.0, %v3741
      %v3743 = vpop.f32.mrb[0].mxu0
      %3744 = vdwg.mxu0
      %s3745 = scalar_lea.vmem %s620, 384
      %v3746 = vld [vmem:[%s3745] sm:$0xff]
      %v3747 = vld [vmem:[%s3745 + $0x8] sm:$0xff]
      %v3748 = vld [vmem:[%s3745 + $0x10] sm:$0xff]
      %v3749 = vld [vmem:[%s3745 + $0x18] sm:$0xff]
      %v3750 = vld [vmem:[%s3745 + $0x20] sm:$0xff]
      %v3751 = vld [vmem:[%s3745 + $0x28] sm:$0xff]
      %v3752 = vld [vmem:[%s3745 + $0x30] sm:$0xff]
      %v3753 = vld [vmem:[%s3745 + $0x38] sm:$0xff]
      %v3755 = vsel %vm2891, %v3742, 0
      %3757 = vmatprep.subr.mxu0 0.0
      %3758 = vmatpush1.msra.mxu0 %v3746
      %3759 = vmatprep.subr.mxu0 0.0
      %3760 = vmatpush1.msra.mxu0 %v3747
      %3761 = vmatprep.subr.mxu0 0.0
      %3762 = vmatpush1.msra.mxu0 %v3748
      %3763 = vmatprep.subr.mxu0 0.0
      %3764 = vmatpush1.msra.mxu0 %v3749
      %3765 = vmatprep.subr.mxu0 0.0
      %3766 = vmatpush1.msra.mxu0 %v3750
      %3767 = vmatprep.subr.mxu0 0.0
      %3768 = vmatpush1.msra.mxu0 %v3751
      %3769 = vmatprep.subr.mxu0 0.0
      %3770 = vmatpush1.msra.mxu0 %v3752
      %3771 = vmatprep.subr.mxu0 0.0
      %3772 = vmatpush1.msra.mxu0 %v3753
      %3773 = vmatprep.subr.mxu0 0.0
      %3774 = vmatpush1.msra.mxu0 0.0
      %3775 = vmatprep.subr.mxu0 0.0
      %3776 = vmatpush1.msra.mxu0 0.0
      %3777 = vmatprep.subr.mxu0 0.0
      %3778 = vmatpush1.msra.mxu0 0.0
      %3779 = vmatprep.subr.mxu0 0.0
      %3780 = vmatpush1.msra.mxu0 0.0
      %3781 = vmatprep.subr.mxu0 0.0
      %3782 = vmatpush1.msra.mxu0 0.0
      %3783 = vmatprep.subr.mxu0 0.0
      %3784 = vmatpush1.msra.mxu0 0.0
      %3785 = vmatprep.subr.mxu0 0.0
      %3786 = vmatpush1.msra.mxu0 0.0
      %3787 = vmatprep.subr.mxu0 0.0
      %3788 = vmatpush1.msra.mxu0 0.0
      %3789 = vmatprep.subr.mxu0 0.0
      %3790 = vmatpush1.msra.mxu0 0.0
      %3791 = vmatprep.subr.mxu0 0.0
      %3792 = vmatpush1.msra.mxu0 0.0
      %3793 = vmatprep.subr.mxu0 0.0
      %3794 = vmatpush1.msra.mxu0 0.0
      %3795 = vmatprep.subr.mxu0 0.0
      %3796 = vmatpush1.msra.mxu0 0.0
      %3797 = vmatprep.subr.mxu0 0.0
      %3798 = vmatpush1.msra.mxu0 0.0
      %3799 = vmatprep.subr.mxu0 0.0
      %3800 = vmatpush1.msra.mxu0 0.0
      %3801 = vmatprep.subr.mxu0 0.0
      %3802 = vmatpush1.msra.mxu0 0.0
      %3803 = vmatprep.subr.mxu0 0.0
      %3804 = vmatpush1.msra.mxu0 0.0
      %3805 = vmatprep.subr.mxu0 0.0
      %3806 = vmatpush1.msra.mxu0 0.0
      %3807 = vmatprep.subr.mxu0 0.0
      %3808 = vmatpush1.msra.mxu0 0.0
      %3809 = vmatprep.subr.mxu0 0.0
      %3810 = vmatpush1.msra.mxu0 0.0
      %3811 = vmatprep.subr.mxu0 0.0
      %3812 = vmatpush1.msra.mxu0 0.0
      %3813 = vmatprep.subr.mxu0 0.0
      %3814 = vmatpush1.msra.mxu0 0.0
      %3815 = vmatprep.subr.mxu0 0.0
      %3816 = vmatpush1.msra.mxu0 0.0
      %3817 = vmatprep.subr.mxu0 0.0
      %3818 = vmatpush1.msra.mxu0 0.0
      %3819 = vmatprep.subr.mxu0 0.0
      %3820 = vmatpush1.msra.mxu0 0.0
      %3821 = vmatprep.mubr.f32.mxu0 0.0
      %3822 = vmatmul.mubr.f32.gmra.mrb[0].mxu0 %v3755
      %v3823 = vpop.f32.mrb[0].mxu0
      %v3824 = vadd.f32 0.0, %v3823
      %v3825 = vpop.f32.mrb[0].mxu0
      %3826 = vdwg.mxu0
      %v3827 = vadd.f32 %v3669, %v3824
      %s3828 = scalar_lea.vmem %s2, 56
      %v3829 = vld [vmem:[%s3828] sm:$0xff]
      %v3831 = vsel %vm1127, %v3829, 0
      %3833 = vmatprep.subr.mxu0 0.0
      %3834 = vmatpush1.msra.mxu0 %v2721
      %3835 = vmatprep.subr.mxu0 0.0
      %3836 = vmatpush1.msra.mxu0 %v2722
      %3837 = vmatprep.subr.mxu0 0.0
      %3838 = vmatpush1.msra.mxu0 %v2723
      %3839 = vmatprep.subr.mxu0 0.0
      %3840 = vmatpush1.msra.mxu0 %v2724
      %3841 = vmatprep.subr.mxu0 0.0
      %3842 = vmatpush1.msra.mxu0 0.0
      %3843 = vmatprep.subr.mxu0 0.0
      %3844 = vmatpush1.msra.mxu0 0.0
      %3845 = vmatprep.subr.mxu0 0.0
      %3846 = vmatpush1.msra.mxu0 0.0
      %3847 = vmatprep.subr.mxu0 0.0
      %3848 = vmatpush1.msra.mxu0 0.0
      %3849 = vmatprep.subr.mxu0 0.0
      %3850 = vmatpush1.msra.mxu0 0.0
      %3851 = vmatprep.subr.mxu0 0.0
      %3852 = vmatpush1.msra.mxu0 0.0
      %3853 = vmatprep.subr.mxu0 0.0
      %3854 = vmatpush1.msra.mxu0 0.0
      %3855 = vmatprep.subr.mxu0 0.0
      %3856 = vmatpush1.msra.mxu0 0.0
      %3857 = vmatprep.subr.mxu0 0.0
      %3858 = vmatpush1.msra.mxu0 0.0
      %3859 = vmatprep.subr.mxu0 0.0
      %3860 = vmatpush1.msra.mxu0 0.0
      %3861 = vmatprep.subr.mxu0 0.0
      %3862 = vmatpush1.msra.mxu0 0.0
      %3863 = vmatprep.subr.mxu0 0.0
      %3864 = vmatpush1.msra.mxu0 0.0
      %3865 = vmatprep.subr.mxu0 0.0
      %3866 = vmatpush1.msra.mxu0 0.0
      %3867 = vmatprep.subr.mxu0 0.0
      %3868 = vmatpush1.msra.mxu0 0.0
      %3869 = vmatprep.subr.mxu0 0.0
      %3870 = vmatpush1.msra.mxu0 0.0
      %3871 = vmatprep.subr.mxu0 0.0
      %3872 = vmatpush1.msra.mxu0 0.0
      %3873 = vmatprep.subr.mxu0 0.0
      %3874 = vmatpush1.msra.mxu0 0.0
      %3875 = vmatprep.subr.mxu0 0.0
      %3876 = vmatpush1.msra.mxu0 0.0
      %3877 = vmatprep.subr.mxu0 0.0
      %3878 = vmatpush1.msra.mxu0 0.0
      %3879 = vmatprep.subr.mxu0 0.0
      %3880 = vmatpush1.msra.mxu0 0.0
      %3881 = vmatprep.subr.mxu0 0.0
      %3882 = vmatpush1.msra.mxu0 0.0
      %3883 = vmatprep.subr.mxu0 0.0
      %3884 = vmatpush1.msra.mxu0 0.0
      %3885 = vmatprep.subr.mxu0 0.0
      %3886 = vmatpush1.msra.mxu0 0.0
      %3887 = vmatprep.subr.mxu0 0.0
      %3888 = vmatpush1.msra.mxu0 0.0
      %3889 = vmatprep.subr.mxu0 0.0
      %3890 = vmatpush1.msra.mxu0 0.0
      %3891 = vmatprep.subr.mxu0 0.0
      %3892 = vmatpush1.msra.mxu0 0.0
      %3893 = vmatprep.subr.mxu0 0.0
      %3894 = vmatpush1.msra.mxu0 0.0
      %3895 = vmatprep.subr.mxu0 0.0
      %3896 = vmatpush1.msra.mxu0 0.0
      %3897 = vmatprep.mubr.f32.mxu0 0.0
      %3898 = vmatmul.mubr.f32.gmra.mrb[0].mxu0 %v3831
      %v3899 = vpop.f32.mrb[0].mxu0
      %v3900 = vadd.f32 0.0, %v3899
      %v3901 = vpop.f32.mrb[0].mxu0
      %3902 = vdwg.mxu0
      %s3903 = scalar_lea.vmem %s620, 448
      %v3904 = vld [vmem:[%s3903] sm:$0xff]
      %v3905 = vld [vmem:[%s3903 + $0x8] sm:$0xff]
      %v3906 = vld [vmem:[%s3903 + $0x10] sm:$0xff]
      %v3907 = vld [vmem:[%s3903 + $0x18] sm:$0xff]
      %v3908 = vld [vmem:[%s3903 + $0x20] sm:$0xff]
      %v3909 = vld [vmem:[%s3903 + $0x28] sm:$0xff]
      %v3910 = vld [vmem:[%s3903 + $0x30] sm:$0xff]
      %v3911 = vld [vmem:[%s3903 + $0x38] sm:$0xff]
      %v3913 = vsel %vm2891, %v3900, 0
      %3915 = vmatprep.subr.mxu0 0.0
      %3916 = vmatpush1.msra.mxu0 %v3904
      %3917 = vmatprep.subr.mxu0 0.0
      %3918 = vmatpush1.msra.mxu0 %v3905
      %3919 = vmatprep.subr.mxu0 0.0
      %3920 = vmatpush1.msra.mxu0 %v3906
      %3921 = vmatprep.subr.mxu0 0.0
      %3922 = vmatpush1.msra.mxu0 %v3907
      %3923 = vmatprep.subr.mxu0 0.0
      %3924 = vmatpush1.msra.mxu0 %v3908
      %3925 = vmatprep.subr.mxu0 0.0
      %3926 = vmatpush1.msra.mxu0 %v3909
      %3927 = vmatprep.subr.mxu0 0.0
      %3928 = vmatpush1.msra.mxu0 %v3910
      %3929 = vmatprep.subr.mxu0 0.0
      %3930 = vmatpush1.msra.mxu0 %v3911
      %3931 = vmatprep.subr.mxu0 0.0
      %3932 = vmatpush1.msra.mxu0 0.0
      %3933 = vmatprep.subr.mxu0 0.0
      %3934 = vmatpush1.msra.mxu0 0.0
      %3935 = vmatprep.subr.mxu0 0.0
      %3936 = vmatpush1.msra.mxu0 0.0
      %3937 = vmatprep.subr.mxu0 0.0
      %3938 = vmatpush1.msra.mxu0 0.0
      %3939 = vmatprep.subr.mxu0 0.0
      %3940 = vmatpush1.msra.mxu0 0.0
      %3941 = vmatprep.subr.mxu0 0.0
      %3942 = vmatpush1.msra.mxu0 0.0
      %3943 = vmatprep.subr.mxu0 0.0
      %3944 = vmatpush1.msra.mxu0 0.0
      %3945 = vmatprep.subr.mxu0 0.0
      %3946 = vmatpush1.msra.mxu0 0.0
      %3947 = vmatprep.subr.mxu0 0.0
      %3948 = vmatpush1.msra.mxu0 0.0
      %3949 = vmatprep.subr.mxu0 0.0
      %3950 = vmatpush1.msra.mxu0 0.0
      %3951 = vmatprep.subr.mxu0 0.0
      %3952 = vmatpush1.msra.mxu0 0.0
      %3953 = vmatprep.subr.mxu0 0.0
      %3954 = vmatpush1.msra.mxu0 0.0
      %3955 = vmatprep.subr.mxu0 0.0
      %3956 = vmatpush1.msra.mxu0 0.0
      %3957 = vmatprep.subr.mxu0 0.0
      %3958 = vmatpush1.msra.mxu0 0.0
      %3959 = vmatprep.subr.mxu0 0.0
      %3960 = vmatpush1.msra.mxu0 0.0
      %3961 = vmatprep.subr.mxu0 0.0
      %3962 = vmatpush1.msra.mxu0 0.0
      %3963 = vmatprep.subr.mxu0 0.0
      %3964 = vmatpush1.msra.mxu0 0.0
      %3965 = vmatprep.subr.mxu0 0.0
      %3966 = vmatpush1.msra.mxu0 0.0
      %3967 = vmatprep.subr.mxu0 0.0
      %3968 = vmatpush1.msra.mxu0 0.0
      %3969 = vmatprep.subr.mxu0 0.0
      %3970 = vmatpush1.msra.mxu0 0.0
      %3971 = vmatprep.subr.mxu0 0.0
      %3972 = vmatpush1.msra.mxu0 0.0
      %3973 = vmatprep.subr.mxu0 0.0
      %3974 = vmatpush1.msra.mxu0 0.0
      %3975 = vmatprep.subr.mxu0 0.0
      %3976 = vmatpush1.msra.mxu0 0.0
      %3977 = vmatprep.subr.mxu0 0.0
      %3978 = vmatpush1.msra.mxu0 0.0
      %3979 = vmatprep.mubr.f32.mxu0 0.0
      %3980 = vmatmul.mubr.f32.gmra.mrb[0].mxu0 %v3913
      %v3981 = vpop.f32.mrb[0].mxu0
      %v3982 = vadd.f32 0.0, %v3981
      %v3983 = vpop.f32.mrb[0].mxu0
      %3984 = vdwg.mxu0
      %v3985 = vadd.f32 %v3827, %v3982
      %s3986 = scalar_lea.vmem %s2, 64
      %v3987 = vld [vmem:[%s3986] sm:$0xff]
      %v3989 = vsel %vm1127, %v3987, 0
      %3991 = vmatprep.subr.mxu0 0.0
      %3992 = vmatpush1.msra.mxu0 %v2721
      %3993 = vmatprep.subr.mxu0 0.0
      %3994 = vmatpush1.msra.mxu0 %v2722
      %3995 = vmatprep.subr.mxu0 0.0
      %3996 = vmatpush1.msra.mxu0 %v2723
      %3997 = vmatprep.subr.mxu0 0.0
      %3998 = vmatpush1.msra.mxu0 %v2724
      %3999 = vmatprep.subr.mxu0 0.0
      %4000 = vmatpush1.msra.mxu0 0.0
      %4001 = vmatprep.subr.mxu0 0.0
      %4002 = vmatpush1.msra.mxu0 0.0
      %4003 = vmatprep.subr.mxu0 0.0
      %4004 = vmatpush1.msra.mxu0 0.0
      %4005 = vmatprep.subr.mxu0 0.0
      %4006 = vmatpush1.msra.mxu0 0.0
      %4007 = vmatprep.subr.mxu0 0.0
      %4008 = vmatpush1.msra.mxu0 0.0
      %4009 = vmatprep.subr.mxu0 0.0
      %4010 = vmatpush1.msra.mxu0 0.0
      %4011 = vmatprep.subr.mxu0 0.0
      %4012 = vmatpush1.msra.mxu0 0.0
      %4013 = vmatprep.subr.mxu0 0.0
      %4014 = vmatpush1.msra.mxu0 0.0
      %4015 = vmatprep.subr.mxu0 0.0
      %4016 = vmatpush1.msra.mxu0 0.0
      %4017 = vmatprep.subr.mxu0 0.0
      %4018 = vmatpush1.msra.mxu0 0.0
      %4019 = vmatprep.subr.mxu0 0.0
      %4020 = vmatpush1.msra.mxu0 0.0
      %4021 = vmatprep.subr.mxu0 0.0
      %4022 = vmatpush1.msra.mxu0 0.0
      %4023 = vmatprep.subr.mxu0 0.0
      %4024 = vmatpush1.msra.mxu0 0.0
      %4025 = vmatprep.subr.mxu0 0.0
      %4026 = vmatpush1.msra.mxu0 0.0
      %4027 = vmatprep.subr.mxu0 0.0
      %4028 = vmatpush1.msra.mxu0 0.0
      %4029 = vmatprep.subr.mxu0 0.0
      %4030 = vmatpush1.msra.mxu0 0.0
      %4031 = vmatprep.subr.mxu0 0.0
      %4032 = vmatpush1.msra.mxu0 0.0
      %4033 = vmatprep.subr.mxu0 0.0
      %4034 = vmatpush1.msra.mxu0 0.0
      %4035 = vmatprep.subr.mxu0 0.0
      %4036 = vmatpush1.msra.mxu0 0.0
      %4037 = vmatprep.subr.mxu0 0.0
      %4038 = vmatpush1.msra.mxu0 0.0
      %4039 = vmatprep.subr.mxu0 0.0
      %4040 = vmatpush1.msra.mxu0 0.0
      %4041 = vmatprep.subr.mxu0 0.0
      %4042 = vmatpush1.msra.mxu0 0.0
      %4043 = vmatprep.subr.mxu0 0.0
      %4044 = vmatpush1.msra.mxu0 0.0
      %4045 = vmatprep.subr.mxu0 0.0
      %4046 = vmatpush1.msra.mxu0 0.0
      %4047 = vmatprep.subr.mxu0 0.0
      %4048 = vmatpush1.msra.mxu0 0.0
      %4049 = vmatprep.subr.mxu0 0.0
      %4050 = vmatpush1.msra.mxu0 0.0
      %4051 = vmatprep.subr.mxu0 0.0
      %4052 = vmatpush1.msra.mxu0 0.0
      %4053 = vmatprep.subr.mxu0 0.0
      %4054 = vmatpush1.msra.mxu0 0.0
      %4055 = vmatprep.mubr.f32.mxu0 0.0
      %4056 = vmatmul.mubr.f32.gmra.mrb[0].mxu0 %v3989
      %v4057 = vpop.f32.mrb[0].mxu0
      %v4058 = vadd.f32 0.0, %v4057
      %v4059 = vpop.f32.mrb[0].mxu0
      %4060 = vdwg.mxu0
      %s4061 = scalar_lea.vmem %s620, 512
      %v4062 = vld [vmem:[%s4061] sm:$0xff]
      %v4063 = vld [vmem:[%s4061 + $0x8] sm:$0xff]
      %v4064 = vld [vmem:[%s4061 + $0x10] sm:$0xff]
      %v4065 = vld [vmem:[%s4061 + $0x18] sm:$0xff]
      %v4066 = vld [vmem:[%s4061 + $0x20] sm:$0xff]
      %v4067 = vld [vmem:[%s4061 + $0x28] sm:$0xff]
      %v4068 = vld [vmem:[%s4061 + $0x30] sm:$0xff]
      %v4069 = vld [vmem:[%s4061 + $0x38] sm:$0xff]
      %v4071 = vsel %vm2891, %v4058, 0
      %4073 = vmatprep.subr.mxu0 0.0
      %4074 = vmatpush1.msra.mxu0 %v4062
      %4075 = vmatprep.subr.mxu0 0.0
      %4076 = vmatpush1.msra.mxu0 %v4063
      %4077 = vmatprep.subr.mxu0 0.0
      %4078 = vmatpush1.msra.mxu0 %v4064
      %4079 = vmatprep.subr.mxu0 0.0
      %4080 = vmatpush1.msra.mxu0 %v4065
      %4081 = vmatprep.subr.mxu0 0.0
      %4082 = vmatpush1.msra.mxu0 %v4066
      %4083 = vmatprep.subr.mxu0 0.0
      %4084 = vmatpush1.msra.mxu0 %v4067
      %4085 = vmatprep.subr.mxu0 0.0
      %4086 = vmatpush1.msra.mxu0 %v4068
      %4087 = vmatprep.subr.mxu0 0.0
      %4088 = vmatpush1.msra.mxu0 %v4069
      %4089 = vmatprep.subr.mxu0 0.0
      %4090 = vmatpush1.msra.mxu0 0.0
      %4091 = vmatprep.subr.mxu0 0.0
      %4092 = vmatpush1.msra.mxu0 0.0
      %4093 = vmatprep.subr.mxu0 0.0
      %4094 = vmatpush1.msra.mxu0 0.0
      %4095 = vmatprep.subr.mxu0 0.0
      %4096 = vmatpush1.msra.mxu0 0.0
      %4097 = vmatprep.subr.mxu0 0.0
      %4098 = vmatpush1.msra.mxu0 0.0
      %4099 = vmatprep.subr.mxu0 0.0
      %4100 = vmatpush1.msra.mxu0 0.0
      %4101 = vmatprep.subr.mxu0 0.0
      %4102 = vmatpush1.msra.mxu0 0.0
      %4103 = vmatprep.subr.mxu0 0.0
      %4104 = vmatpush1.msra.mxu0 0.0
      %4105 = vmatprep.subr.mxu0 0.0
      %4106 = vmatpush1.msra.mxu0 0.0
      %4107 = vmatprep.subr.mxu0 0.0
      %4108 = vmatpush1.msra.mxu0 0.0
      %4109 = vmatprep.subr.mxu0 0.0
      %4110 = vmatpush1.msra.mxu0 0.0
      %4111 = vmatprep.subr.mxu0 0.0
      %4112 = vmatpush1.msra.mxu0 0.0
      %4113 = vmatprep.subr.mxu0 0.0
      %4114 = vmatpush1.msra.mxu0 0.0
      %4115 = vmatprep.subr.mxu0 0.0
      %4116 = vmatpush1.msra.mxu0 0.0
      %4117 = vmatprep.subr.mxu0 0.0
      %4118 = vmatpush1.msra.mxu0 0.0
      %4119 = vmatprep.subr.mxu0 0.0
      %4120 = vmatpush1.msra.mxu0 0.0
      %4121 = vmatprep.subr.mxu0 0.0
      %4122 = vmatpush1.msra.mxu0 0.0
      %4123 = vmatprep.subr.mxu0 0.0
      %4124 = vmatpush1.msra.mxu0 0.0
      %4125 = vmatprep.subr.mxu0 0.0
      %4126 = vmatpush1.msra.mxu0 0.0
      %4127 = vmatprep.subr.mxu0 0.0
      %4128 = vmatpush1.msra.mxu0 0.0
      %4129 = vmatprep.subr.mxu0 0.0
      %4130 = vmatpush1.msra.mxu0 0.0
      %4131 = vmatprep.subr.mxu0 0.0
      %4132 = vmatpush1.msra.mxu0 0.0
      %4133 = vmatprep.subr.mxu0 0.0
      %4134 = vmatpush1.msra.mxu0 0.0
      %4135 = vmatprep.subr.mxu0 0.0
      %4136 = vmatpush1.msra.mxu0 0.0
      %4137 = vmatprep.mubr.f32.mxu0 0.0
      %4138 = vmatmul.mubr.f32.gmra.mrb[0].mxu0 %v4071
      %v4139 = vpop.f32.mrb[0].mxu0
      %v4140 = vadd.f32 0.0, %v4139
      %v4141 = vpop.f32.mrb[0].mxu0
      %4142 = vdwg.mxu0
      %v4143 = vadd.f32 %v3985, %v4140
      %v4144 = vld [vmem:[%s623] sm:$0x1]
      %v4146 = vlaneseq
      %v4147 = vshrl.u32 %v4146, 7
      %v4148 = vsub.s32 0, %v4147
      %v4149 = vrot.slane %v4144, %v4148
      %v4151 = vadd.f32 %v4143, %v4149
      %v4152 = vmul.f32 %v4151, 0.5
      %v4153 = vmul.f32 %v4151, 0.70710677
      %v4154 = verf.f32.pop %v4153
      %v4155 = vadd.f32 %v4154, 1.0
      %v4156 = vmul.f32 %v4152, %v4155
      %v4157 = vld [vmem:[%s3] sm:$0x3]
      %vm4158 = vcmask 64512
      %v4160 = vsel %vm4158, %v4157, 0
      %4162 = vmatprep.subr.mxu0 0.0
      %4163 = vmatpush1.msra.mxu0 %v4156
      %4164 = vmatprep.subr.mxu0 0.0
      %4165 = vmatpush1.msra.mxu0 0.0
      %4166 = vmatprep.subr.mxu0 0.0
      %4167 = vmatpush1.msra.mxu0 0.0
      %4168 = vmatprep.subr.mxu0 0.0
      %4169 = vmatpush1.msra.mxu0 0.0
      %4170 = vmatprep.subr.mxu0 0.0
      %4171 = vmatpush1.msra.mxu0 0.0
      %4172 = vmatprep.subr.mxu0 0.0
      %4173 = vmatpush1.msra.mxu0 0.0
      %4174 = vmatprep.subr.mxu0 0.0
      %4175 = vmatpush1.msra.mxu0 0.0
      %4176 = vmatprep.subr.mxu0 0.0
      %4177 = vmatpush1.msra.mxu0 0.0
      %4178 = vmatprep.subr.mxu0 0.0
      %4179 = vmatpush1.msra.mxu0 0.0
      %4180 = vmatprep.subr.mxu0 0.0
      %4181 = vmatpush1.msra.mxu0 0.0
      %4182 = vmatprep.subr.mxu0 0.0
      %4183 = vmatpush1.msra.mxu0 0.0
      %4184 = vmatprep.subr.mxu0 0.0
      %4185 = vmatpush1.msra.mxu0 0.0
      %4186 = vmatprep.subr.mxu0 0.0
      %4187 = vmatpush1.msra.mxu0 0.0
      %4188 = vmatprep.subr.mxu0 0.0
      %4189 = vmatpush1.msra.mxu0 0.0
      %4190 = vmatprep.subr.mxu0 0.0
      %4191 = vmatpush1.msra.mxu0 0.0
      %4192 = vmatprep.subr.mxu0 0.0
      %4193 = vmatpush1.msra.mxu0 0.0
      %4194 = vmatprep.subr.mxu0 0.0
      %4195 = vmatpush1.msra.mxu0 0.0
      %4196 = vmatprep.subr.mxu0 0.0
      %4197 = vmatpush1.msra.mxu0 0.0
      %4198 = vmatprep.subr.mxu0 0.0
      %4199 = vmatpush1.msra.mxu0 0.0
      %4200 = vmatprep.subr.mxu0 0.0
      %4201 = vmatpush1.msra.mxu0 0.0
      %4202 = vmatprep.subr.mxu0 0.0
      %4203 = vmatpush1.msra.mxu0 0.0
      %4204 = vmatprep.subr.mxu0 0.0
      %4205 = vmatpush1.msra.mxu0 0.0
      %4206 = vmatprep.subr.mxu0 0.0
      %4207 = vmatpush1.msra.mxu0 0.0
      %4208 = vmatprep.subr.mxu0 0.0
      %4209 = vmatpush1.msra.mxu0 0.0
      %4210 = vmatprep.subr.mxu0 0.0
      %4211 = vmatpush1.msra.mxu0 0.0
      %4212 = vmatprep.subr.mxu0 0.0
      %4213 = vmatpush1.msra.mxu0 0.0
      %4214 = vmatprep.subr.mxu0 0.0
      %4215 = vmatpush1.msra.mxu0 0.0
      %4216 = vmatprep.subr.mxu0 0.0
      %4217 = vmatpush1.msra.mxu0 0.0
      %4218 = vmatprep.subr.mxu0 0.0
      %4219 = vmatpush1.msra.mxu0 0.0
      %4220 = vmatprep.subr.mxu0 0.0
      %4221 = vmatpush1.msra.mxu0 0.0
      %4222 = vmatprep.subr.mxu0 0.0
      %4223 = vmatpush1.msra.mxu0 0.0
      %4224 = vmatprep.subr.mxu0 0.0
      %4225 = vmatpush1.msra.mxu0 0.0
      %4226 = vmatprep.mubr.f32.mxu0 0.0
      %4227 = vmatmul.mubr.f32.gmra.mrb[0].mxu0 %v4160
      %v4228 = vpop.f32.mrb[0].mxu0
      %v4229 = vadd.f32 0.0, %v4228
      %v4230 = vpop.f32.mrb[0].mxu0
      %4231 = vdwg.mxu0
      %v4232 = vld [vmem:[%s628] sm:$0xff]
      %v4233 = vld [vmem:[%s628 + $0x8] sm:$0xff]
      %v4234 = vld [vmem:[%s628 + $0x10] sm:$0xff]
      %v4235 = vld [vmem:[%s628 + $0x18] sm:$0xff]
      %v4236 = vld [vmem:[%s628 + $0x20] sm:$0xff]
      %v4237 = vld [vmem:[%s628 + $0x28] sm:$0xff]
      %v4238 = vld [vmem:[%s628 + $0x30] sm:$0xff]
      %v4239 = vld [vmem:[%s628 + $0x38] sm:$0xff]
      %v4240 = vld [vmem:[%s628 + $0x40] sm:$0xff]
      %v4241 = vld [vmem:[%s628 + $0x48] sm:$0xff]
      %v4242 = vld [vmem:[%s628 + $0x50] sm:$0xff]
      %v4243 = vld [vmem:[%s628 + $0x58] sm:$0xff]
      %v4244 = vld [vmem:[%s628 + $0x60] sm:$0xff]
      %v4245 = vld [vmem:[%s628 + $0x68] sm:$0xff]
      %v4246 = vld [vmem:[%s628 + $0x70] sm:$0xff]
      %v4247 = vld [vmem:[%s628 + $0x78] sm:$0xff]
      %s4248 = scalar_lea.vmem %s3, 2
      %v4249 = vld [vmem:[%s4248] sm:$0x3]
      %v4251 = vsel %vm4158, %v4249, 0
      %4253 = vmatprep.subr.mxu0 0.0
      %4254 = vmatpush1.msra.mxu0 %v4156
      %4255 = vmatprep.subr.mxu0 0.0
      %4256 = vmatpush1.msra.mxu0 0.0
      %4257 = vmatprep.subr.mxu0 0.0
      %4258 = vmatpush1.msra.mxu0 0.0
      %4259 = vmatprep.subr.mxu0 0.0
      %4260 = vmatpush1.msra.mxu0 0.0
      %4261 = vmatprep.subr.mxu0 0.0
      %4262 = vmatpush1.msra.mxu0 0.0
      %4263 = vmatprep.subr.mxu0 0.0
      %4264 = vmatpush1.msra.mxu0 0.0
      %4265 = vmatprep.subr.mxu0 0.0
      %4266 = vmatpush1.msra.mxu0 0.0
      %4267 = vmatprep.subr.mxu0 0.0
      %4268 = vmatpush1.msra.mxu0 0.0
      %4269 = vmatprep.subr.mxu0 0.0
      %4270 = vmatpush1.msra.mxu0 0.0
      %4271 = vmatprep.subr.mxu0 0.0
      %4272 = vmatpush1.msra.mxu0 0.0
      %4273 = vmatprep.subr.mxu0 0.0
      %4274 = vmatpush1.msra.mxu0 0.0
      %4275 = vmatprep.subr.mxu0 0.0
      %4276 = vmatpush1.msra.mxu0 0.0
      %4277 = vmatprep.subr.mxu0 0.0
      %4278 = vmatpush1.msra.mxu0 0.0
      %4279 = vmatprep.subr.mxu0 0.0
      %4280 = vmatpush1.msra.mxu0 0.0
      %4281 = vmatprep.subr.mxu0 0.0
      %4282 = vmatpush1.msra.mxu0 0.0
      %4283 = vmatprep.subr.mxu0 0.0
      %4284 = vmatpush1.msra.mxu0 0.0
      %4285 = vmatprep.subr.mxu0 0.0
      %4286 = vmatpush1.msra.mxu0 0.0
      %4287 = vmatprep.subr.mxu0 0.0
      %4288 = vmatpush1.msra.mxu0 0.0
      %4289 = vmatprep.subr.mxu0 0.0
      %4290 = vmatpush1.msra.mxu0 0.0
      %4291 = vmatprep.subr.mxu0 0.0
      %4292 = vmatpush1.msra.mxu0 0.0
      %4293 = vmatprep.subr.mxu0 0.0
      %4294 = vmatpush1.msra.mxu0 0.0
      %4295 = vmatprep.subr.mxu0 0.0
      %4296 = vmatpush1.msra.mxu0 0.0
      %4297 = vmatprep.subr.mxu0 0.0
      %4298 = vmatpush1.msra.mxu0 0.0
      %4299 = vmatprep.subr.mxu0 0.0
      %4300 = vmatpush1.msra.mxu0 0.0
      %4301 = vmatprep.subr.mxu0 0.0
      %4302 = vmatpush1.msra.mxu0 0.0
      %4303 = vmatprep.subr.mxu0 0.0
      %4304 = vmatpush1.msra.mxu0 0.0
      %4305 = vmatprep.subr.mxu0 0.0
      %4306 = vmatpush1.msra.mxu0 0.0
      %4307 = vmatprep.subr.mxu0 0.0
      %4308 = vmatpush1.msra.mxu0 0.0
      %4309 = vmatprep.subr.mxu0 0.0
      %4310 = vmatpush1.msra.mxu0 0.0
      %4311 = vmatprep.subr.mxu0 0.0
      %4312 = vmatpush1.msra.mxu0 0.0
      %4313 = vmatprep.subr.mxu0 0.0
      %4314 = vmatpush1.msra.mxu0 0.0
      %4315 = vmatprep.subr.mxu0 0.0
      %4316 = vmatpush1.msra.mxu0 0.0
      %4317 = vmatprep.mubr.f32.mxu0 0.0
      %4318 = vmatmul.mubr.f32.gmra.mrb[0].mxu0 %v4251
      %v4319 = vpop.f32.mrb[0].mxu0
      %v4320 = vadd.f32 0.0, %v4319
      %v4321 = vpop.f32.mrb[0].mxu0
      %4322 = vdwg.mxu0
      %s4323 = scalar_lea.vmem %s628, 128
      %v4324 = vld [vmem:[%s4323] sm:$0xff]
      %v4325 = vld [vmem:[%s4323 + $0x8] sm:$0xff]
      %v4326 = vld [vmem:[%s4323 + $0x10] sm:$0xff]
      %v4327 = vld [vmem:[%s4323 + $0x18] sm:$0xff]
      %v4328 = vld [vmem:[%s4323 + $0x20] sm:$0xff]
      %v4329 = vld [vmem:[%s4323 + $0x28] sm:$0xff]
      %v4330 = vld [vmem:[%s4323 + $0x30] sm:$0xff]
      %v4331 = vld [vmem:[%s4323 + $0x38] sm:$0xff]
      %v4332 = vld [vmem:[%s4323 + $0x40] sm:$0xff]
      %v4333 = vld [vmem:[%s4323 + $0x48] sm:$0xff]
      %v4334 = vld [vmem:[%s4323 + $0x50] sm:$0xff]
      %v4335 = vld [vmem:[%s4323 + $0x58] sm:$0xff]
      %v4336 = vld [vmem:[%s4323 + $0x60] sm:$0xff]
      %v4337 = vld [vmem:[%s4323 + $0x68] sm:$0xff]
      %v4338 = vld [vmem:[%s4323 + $0x70] sm:$0xff]
      %v4339 = vld [vmem:[%s4323 + $0x78] sm:$0xff]
      %4340 = vmatprep.subr.mxu0 0.0
      %4341 = vmatpush1.msra.mxu0 %v4324
      %4342 = vmatprep.subr.mxu0 0.0
      %4343 = vmatpush1.msra.mxu0 %v4325
      %4344 = vmatprep.subr.mxu0 0.0
      %4345 = vmatpush1.msra.mxu0 %v4326
      %4346 = vmatprep.subr.mxu0 0.0
      %4347 = vmatpush1.msra.mxu0 %v4327
      %4348 = vmatprep.subr.mxu0 0.0
      %4349 = vmatpush1.msra.mxu0 %v4328
      %4350 = vmatprep.subr.mxu0 0.0
      %4351 = vmatpush1.msra.mxu0 %v4329
      %4352 = vmatprep.subr.mxu0 0.0
      %4353 = vmatpush1.msra.mxu0 %v4330
      %4354 = vmatprep.subr.mxu0 0.0
      %4355 = vmatpush1.msra.mxu0 %v4331
      %4356 = vmatprep.subr.mxu0 0.0
      %4357 = vmatpush1.msra.mxu0 %v4332
      %4358 = vmatprep.subr.mxu0 0.0
      %4359 = vmatpush1.msra.mxu0 %v4333
      %4360 = vmatprep.subr.mxu0 0.0
      %4361 = vmatpush1.msra.mxu0 %v4334
      %4362 = vmatprep.subr.mxu0 0.0
      %4363 = vmatpush1.msra.mxu0 %v4335
      %4364 = vmatprep.subr.mxu0 0.0
      %4365 = vmatpush1.msra.mxu0 %v4336
      %4366 = vmatprep.subr.mxu0 0.0
      %4367 = vmatpush1.msra.mxu0 %v4337
      %4368 = vmatprep.subr.mxu0 0.0
      %4369 = vmatpush1.msra.mxu0 %v4338
      %4370 = vmatprep.subr.mxu0 0.0
      %4371 = vmatpush1.msra.mxu0 %v4339
      %4372 = vmatprep.subr.mxu0 0.0
      %4373 = vmatpush1.msra.mxu0 0.0
      %4374 = vmatprep.subr.mxu0 0.0
      %4375 = vmatpush1.msra.mxu0 0.0
      %4376 = vmatprep.subr.mxu0 0.0
      %4377 = vmatpush1.msra.mxu0 0.0
      %4378 = vmatprep.subr.mxu0 0.0
      %4379 = vmatpush1.msra.mxu0 0.0
      %4380 = vmatprep.subr.mxu0 0.0
      %4381 = vmatpush1.msra.mxu0 0.0
      %4382 = vmatprep.subr.mxu0 0.0
      %4383 = vmatpush1.msra.mxu0 0.0
      %4384 = vmatprep.subr.mxu0 0.0
      %4385 = vmatpush1.msra.mxu0 0.0
      %4386 = vmatprep.subr.mxu0 0.0
      %4387 = vmatpush1.msra.mxu0 0.0
      %4388 = vmatprep.subr.mxu0 0.0
      %4389 = vmatpush1.msra.mxu0 0.0
      %4390 = vmatprep.subr.mxu0 0.0
      %4391 = vmatpush1.msra.mxu0 0.0
      %4392 = vmatprep.subr.mxu0 0.0
      %4393 = vmatpush1.msra.mxu0 0.0
      %4394 = vmatprep.subr.mxu0 0.0
      %4395 = vmatpush1.msra.mxu0 0.0
      %4396 = vmatprep.subr.mxu0 0.0
      %4397 = vmatpush1.msra.mxu0 0.0
      %4398 = vmatprep.subr.mxu0 0.0
      %4399 = vmatpush1.msra.mxu0 0.0
      %4400 = vmatprep.subr.mxu0 0.0
      %4401 = vmatpush1.msra.mxu0 0.0
      %4402 = vmatprep.subr.mxu0 0.0
      %4403 = vmatpush1.msra.mxu0 0.0
      %4404 = vmatprep.mubr.f32.mxu0 0.0
      %4405 = vmatmul.mubr.f32.gmra.mrb[0].mxu0 %v4320
      %v4406 = vpop.f32.mrb[0].mxu0
      %v4407 = vadd.f32 0.0, %v4406
      %v4408 = vpop.f32.mrb[0].mxu0
      %4409 = vdwg.mxu0
      %4410 = vmatprep.subr.mxu0 0.0
      %4411 = vmatpush1.msra.mxu0 %v4232
      %4412 = vmatprep.subr.mxu0 0.0
      %4413 = vmatpush1.msra.mxu0 %v4233
      %4414 = vmatprep.subr.mxu0 0.0
      %4415 = vmatpush1.msra.mxu0 %v4234
      %4416 = vmatprep.subr.mxu0 0.0
      %4417 = vmatpush1.msra.mxu0 %v4235
      %4418 = vmatprep.subr.mxu0 0.0
      %4419 = vmatpush1.msra.mxu0 %v4236
      %4420 = vmatprep.subr.mxu0 0.0
      %4421 = vmatpush1.msra.mxu0 %v4237
      %4422 = vmatprep.subr.mxu0 0.0
      %4423 = vmatpush1.msra.mxu0 %v4238
      %4424 = vmatprep.subr.mxu0 0.0
      %4425 = vmatpush1.msra.mxu0 %v4239
      %4426 = vmatprep.subr.mxu0 0.0
      %4427 = vmatpush1.msra.mxu0 %v4240
      %4428 = vmatprep.subr.mxu0 0.0
      %4429 = vmatpush1.msra.mxu0 %v4241
      %4430 = vmatprep.subr.mxu0 0.0
      %4431 = vmatpush1.msra.mxu0 %v4242
      %4432 = vmatprep.subr.mxu0 0.0
      %4433 = vmatpush1.msra.mxu0 %v4243
      %4434 = vmatprep.subr.mxu0 0.0
      %4435 = vmatpush1.msra.mxu0 %v4244
      %4436 = vmatprep.subr.mxu0 0.0
      %4437 = vmatpush1.msra.mxu0 %v4245
      %4438 = vmatprep.subr.mxu0 0.0
      %4439 = vmatpush1.msra.mxu0 %v4246
      %4440 = vmatprep.subr.mxu0 0.0
      %4441 = vmatpush1.msra.mxu0 %v4247
      %4442 = vmatprep.subr.mxu0 0.0
      %4443 = vmatpush1.msra.mxu0 0.0
      %4444 = vmatprep.subr.mxu0 0.0
      %4445 = vmatpush1.msra.mxu0 0.0
      %4446 = vmatprep.subr.mxu0 0.0
      %4447 = vmatpush1.msra.mxu0 0.0
      %4448 = vmatprep.subr.mxu0 0.0
      %4449 = vmatpush1.msra.mxu0 0.0
      %4450 = vmatprep.subr.mxu0 0.0
      %4451 = vmatpush1.msra.mxu0 0.0
      %4452 = vmatprep.subr.mxu0 0.0
      %4453 = vmatpush1.msra.mxu0 0.0
      %4454 = vmatprep.subr.mxu0 0.0
      %4455 = vmatpush1.msra.mxu0 0.0
      %4456 = vmatprep.subr.mxu0 0.0
      %4457 = vmatpush1.msra.mxu0 0.0
      %4458 = vmatprep.subr.mxu0 0.0
      %4459 = vmatpush1.msra.mxu0 0.0
      %4460 = vmatprep.subr.mxu0 0.0
      %4461 = vmatpush1.msra.mxu0 0.0
      %4462 = vmatprep.subr.mxu0 0.0
      %4463 = vmatpush1.msra.mxu0 0.0
      %4464 = vmatprep.subr.mxu0 0.0
      %4465 = vmatpush1.msra.mxu0 0.0
      %4466 = vmatprep.subr.mxu0 0.0
      %4467 = vmatpush1.msra.mxu0 0.0
      %4468 = vmatprep.subr.mxu0 0.0
      %4469 = vmatpush1.msra.mxu0 0.0
      %4470 = vmatprep.subr.mxu0 0.0
      %4471 = vmatpush1.msra.mxu0 0.0
      %4472 = vmatprep.subr.mxu0 0.0
      %4473 = vmatpush1.msra.mxu0 0.0
      %4474 = vmatprep.mubr.f32.mxu0 0.0
      %4475 = vmatmul.mubr.f32.gmra.mrb[0].mxu0 %v4229
      %v4476 = vpop.f32.mrb[0].mxu0
      %v4477 = vadd.f32 %v4407, %v4476
      %v4478 = vpop.f32.mrb[0].mxu0
      %4479 = vdwg.mxu0
      %s4480 = scalar_lea.vmem %s3, 4
      %v4481 = vld [vmem:[%s4480] sm:$0x3]
      %v4483 = vsel %vm4158, %v4481, 0
      %4485 = vmatprep.subr.mxu0 0.0
      %4486 = vmatpush1.msra.mxu0 %v4156
      %4487 = vmatprep.subr.mxu0 0.0
      %4488 = vmatpush1.msra.mxu0 0.0
      %4489 = vmatprep.subr.mxu0 0.0
      %4490 = vmatpush1.msra.mxu0 0.0
      %4491 = vmatprep.subr.mxu0 0.0
      %4492 = vmatpush1.msra.mxu0 0.0
      %4493 = vmatprep.subr.mxu0 0.0
      %4494 = vmatpush1.msra.mxu0 0.0
      %4495 = vmatprep.subr.mxu0 0.0
      %4496 = vmatpush1.msra.mxu0 0.0
      %4497 = vmatprep.subr.mxu0 0.0
      %4498 = vmatpush1.msra.mxu0 0.0
      %4499 = vmatprep.subr.mxu0 0.0
      %4500 = vmatpush1.msra.mxu0 0.0
      %4501 = vmatprep.subr.mxu0 0.0
      %4502 = vmatpush1.msra.mxu0 0.0
      %4503 = vmatprep.subr.mxu0 0.0
      %4504 = vmatpush1.msra.mxu0 0.0
      %4505 = vmatprep.subr.mxu0 0.0
      %4506 = vmatpush1.msra.mxu0 0.0
      %4507 = vmatprep.subr.mxu0 0.0
      %4508 = vmatpush1.msra.mxu0 0.0
      %4509 = vmatprep.subr.mxu0 0.0
      %4510 = vmatpush1.msra.mxu0 0.0
      %4511 = vmatprep.subr.mxu0 0.0
      %4512 = vmatpush1.msra.mxu0 0.0
      %4513 = vmatprep.subr.mxu0 0.0
      %4514 = vmatpush1.msra.mxu0 0.0
      %4515 = vmatprep.subr.mxu0 0.0
      %4516 = vmatpush1.msra.mxu0 0.0
      %4517 = vmatprep.subr.mxu0 0.0
      %4518 = vmatpush1.msra.mxu0 0.0
      %4519 = vmatprep.subr.mxu0 0.0
      %4520 = vmatpush1.msra.mxu0 0.0
      %4521 = vmatprep.subr.mxu0 0.0
      %4522 = vmatpush1.msra.mxu0 0.0
      %4523 = vmatprep.subr.mxu0 0.0
      %4524 = vmatpush1.msra.mxu0 0.0
      %4525 = vmatprep.subr.mxu0 0.0
      %4526 = vmatpush1.msra.mxu0 0.0
      %4527 = vmatprep.subr.mxu0 0.0
      %4528 = vmatpush1.msra.mxu0 0.0
      %4529 = vmatprep.subr.mxu0 0.0
      %4530 = vmatpush1.msra.mxu0 0.0
      %4531 = vmatprep.subr.mxu0 0.0
      %4532 = vmatpush1.msra.mxu0 0.0
      %4533 = vmatprep.subr.mxu0 0.0
      %4534 = vmatpush1.msra.mxu0 0.0
      %4535 = vmatprep.subr.mxu0 0.0
      %4536 = vmatpush1.msra.mxu0 0.0
      %4537 = vmatprep.subr.mxu0 0.0
      %4538 = vmatpush1.msra.mxu0 0.0
      %4539 = vmatprep.subr.mxu0 0.0
      %4540 = vmatpush1.msra.mxu0 0.0
      %4541 = vmatprep.subr.mxu0 0.0
      %4542 = vmatpush1.msra.mxu0 0.0
      %4543 = vmatprep.subr.mxu0 0.0
      %4544 = vmatpush1.msra.mxu0 0.0
      %4545 = vmatprep.subr.mxu0 0.0
      %4546 = vmatpush1.msra.mxu0 0.0
      %4547 = vmatprep.subr.mxu0 0.0
      %4548 = vmatpush1.msra.mxu0 0.0
      %4549 = vmatprep.mubr.f32.mxu0 0.0
      %4550 = vmatmul.mubr.f32.gmra.mrb[0].mxu0 %v4483
      %v4551 = vpop.f32.mrb[0].mxu0
      %v4552 = vadd.f32 0.0, %v4551
      %v4553 = vpop.f32.mrb[0].mxu0
      %4554 = vdwg.mxu0
      %s4555 = scalar_lea.vmem %s628, 256
      %v4556 = vld [vmem:[%s4555] sm:$0xff]
      %v4557 = vld [vmem:[%s4555 + $0x8] sm:$0xff]
      %v4558 = vld [vmem:[%s4555 + $0x10] sm:$0xff]
      %v4559 = vld [vmem:[%s4555 + $0x18] sm:$0xff]
      %v4560 = vld [vmem:[%s4555 + $0x20] sm:$0xff]
      %v4561 = vld [vmem:[%s4555 + $0x28] sm:$0xff]
      %v4562 = vld [vmem:[%s4555 + $0x30] sm:$0xff]
      %v4563 = vld [vmem:[%s4555 + $0x38] sm:$0xff]
      %v4564 = vld [vmem:[%s4555 + $0x40] sm:$0xff]
      %v4565 = vld [vmem:[%s4555 + $0x48] sm:$0xff]
      %v4566 = vld [vmem:[%s4555 + $0x50] sm:$0xff]
      %v4567 = vld [vmem:[%s4555 + $0x58] sm:$0xff]
      %v4568 = vld [vmem:[%s4555 + $0x60] sm:$0xff]
      %v4569 = vld [vmem:[%s4555 + $0x68] sm:$0xff]
      %v4570 = vld [vmem:[%s4555 + $0x70] sm:$0xff]
      %v4571 = vld [vmem:[%s4555 + $0x78] sm:$0xff]
      %4572 = vmatprep.subr.mxu0 0.0
      %4573 = vmatpush1.msra.mxu0 %v4556
      %4574 = vmatprep.subr.mxu0 0.0
      %4575 = vmatpush1.msra.mxu0 %v4557
      %4576 = vmatprep.subr.mxu0 0.0
      %4577 = vmatpush1.msra.mxu0 %v4558
      %4578 = vmatprep.subr.mxu0 0.0
      %4579 = vmatpush1.msra.mxu0 %v4559
      %4580 = vmatprep.subr.mxu0 0.0
      %4581 = vmatpush1.msra.mxu0 %v4560
      %4582 = vmatprep.subr.mxu0 0.0
      %4583 = vmatpush1.msra.mxu0 %v4561
      %4584 = vmatprep.subr.mxu0 0.0
      %4585 = vmatpush1.msra.mxu0 %v4562
      %4586 = vmatprep.subr.mxu0 0.0
      %4587 = vmatpush1.msra.mxu0 %v4563
      %4588 = vmatprep.subr.mxu0 0.0
      %4589 = vmatpush1.msra.mxu0 %v4564
      %4590 = vmatprep.subr.mxu0 0.0
      %4591 = vmatpush1.msra.mxu0 %v4565
      %4592 = vmatprep.subr.mxu0 0.0
      %4593 = vmatpush1.msra.mxu0 %v4566
      %4594 = vmatprep.subr.mxu0 0.0
      %4595 = vmatpush1.msra.mxu0 %v4567
      %4596 = vmatprep.subr.mxu0 0.0
      %4597 = vmatpush1.msra.mxu0 %v4568
      %4598 = vmatprep.subr.mxu0 0.0
      %4599 = vmatpush1.msra.mxu0 %v4569
      %4600 = vmatprep.subr.mxu0 0.0
      %4601 = vmatpush1.msra.mxu0 %v4570
      %4602 = vmatprep.subr.mxu0 0.0
      %4603 = vmatpush1.msra.mxu0 %v4571
      %4604 = vmatprep.subr.mxu0 0.0
      %4605 = vmatpush1.msra.mxu0 0.0
      %4606 = vmatprep.subr.mxu0 0.0
      %4607 = vmatpush1.msra.mxu0 0.0
      %4608 = vmatprep.subr.mxu0 0.0
      %4609 = vmatpush1.msra.mxu0 0.0
      %4610 = vmatprep.subr.mxu0 0.0
      %4611 = vmatpush1.msra.mxu0 0.0
      %4612 = vmatprep.subr.mxu0 0.0
      %4613 = vmatpush1.msra.mxu0 0.0
      %4614 = vmatprep.subr.mxu0 0.0
      %4615 = vmatpush1.msra.mxu0 0.0
      %4616 = vmatprep.subr.mxu0 0.0
      %4617 = vmatpush1.msra.mxu0 0.0
      %4618 = vmatprep.subr.mxu0 0.0
      %4619 = vmatpush1.msra.mxu0 0.0
      %4620 = vmatprep.subr.mxu0 0.0
      %4621 = vmatpush1.msra.mxu0 0.0
      %4622 = vmatprep.subr.mxu0 0.0
      %4623 = vmatpush1.msra.mxu0 0.0
      %4624 = vmatprep.subr.mxu0 0.0
      %4625 = vmatpush1.msra.mxu0 0.0
      %4626 = vmatprep.subr.mxu0 0.0
      %4627 = vmatpush1.msra.mxu0 0.0
      %4628 = vmatprep.subr.mxu0 0.0
      %4629 = vmatpush1.msra.mxu0 0.0
      %4630 = vmatprep.subr.mxu0 0.0
      %4631 = vmatpush1.msra.mxu0 0.0
      %4632 = vmatprep.subr.mxu0 0.0
      %4633 = vmatpush1.msra.mxu0 0.0
      %4634 = vmatprep.subr.mxu0 0.0
      %4635 = vmatpush1.msra.mxu0 0.0
      %4636 = vmatprep.mubr.f32.mxu0 0.0
      %4637 = vmatmul.mubr.f32.gmra.mrb[0].mxu0 %v4552
      %v4638 = vpop.f32.mrb[0].mxu0
      %v4639 = vadd.f32 0.0, %v4638
      %v4640 = vpop.f32.mrb[0].mxu0
      %4641 = vdwg.mxu0
      %v4642 = vadd.f32 %v4477, %v4639
      %s4643 = scalar_lea.vmem %s3, 6
      %v4644 = vld [vmem:[%s4643] sm:$0x3]
      %v4646 = vsel %vm4158, %v4644, 0
      %4648 = vmatprep.subr.mxu0 0.0
      %4649 = vmatpush1.msra.mxu0 %v4156
      %4650 = vmatprep.subr.mxu0 0.0
      %4651 = vmatpush1.msra.mxu0 0.0
      %4652 = vmatprep.subr.mxu0 0.0
      %4653 = vmatpush1.msra.mxu0 0.0
      %4654 = vmatprep.subr.mxu0 0.0
      %4655 = vmatpush1.msra.mxu0 0.0
      %4656 = vmatprep.subr.mxu0 0.0
      %4657 = vmatpush1.msra.mxu0 0.0
      %4658 = vmatprep.subr.mxu0 0.0
      %4659 = vmatpush1.msra.mxu0 0.0
      %4660 = vmatprep.subr.mxu0 0.0
      %4661 = vmatpush1.msra.mxu0 0.0
      %4662 = vmatprep.subr.mxu0 0.0
      %4663 = vmatpush1.msra.mxu0 0.0
      %4664 = vmatprep.subr.mxu0 0.0
      %4665 = vmatpush1.msra.mxu0 0.0
      %4666 = vmatprep.subr.mxu0 0.0
      %4667 = vmatpush1.msra.mxu0 0.0
      %4668 = vmatprep.subr.mxu0 0.0
      %4669 = vmatpush1.msra.mxu0 0.0
      %4670 = vmatprep.subr.mxu0 0.0
      %4671 = vmatpush1.msra.mxu0 0.0
      %4672 = vmatprep.subr.mxu0 0.0
      %4673 = vmatpush1.msra.mxu0 0.0
      %4674 = vmatprep.subr.mxu0 0.0
      %4675 = vmatpush1.msra.mxu0 0.0
      %4676 = vmatprep.subr.mxu0 0.0
      %4677 = vmatpush1.msra.mxu0 0.0
      %4678 = vmatprep.subr.mxu0 0.0
      %4679 = vmatpush1.msra.mxu0 0.0
      %4680 = vmatprep.subr.mxu0 0.0
      %4681 = vmatpush1.msra.mxu0 0.0
      %4682 = vmatprep.subr.mxu0 0.0
      %4683 = vmatpush1.msra.mxu0 0.0
      %4684 = vmatprep.subr.mxu0 0.0
      %4685 = vmatpush1.msra.mxu0 0.0
      %4686 = vmatprep.subr.mxu0 0.0
      %4687 = vmatpush1.msra.mxu0 0.0
      %4688 = vmatprep.subr.mxu0 0.0
      %4689 = vmatpush1.msra.mxu0 0.0
      %4690 = vmatprep.subr.mxu0 0.0
      %4691 = vmatpush1.msra.mxu0 0.0
      %4692 = vmatprep.subr.mxu0 0.0
      %4693 = vmatpush1.msra.mxu0 0.0
      %4694 = vmatprep.subr.mxu0 0.0
      %4695 = vmatpush1.msra.mxu0 0.0
      %4696 = vmatprep.subr.mxu0 0.0
      %4697 = vmatpush1.msra.mxu0 0.0
      %4698 = vmatprep.subr.mxu0 0.0
      %4699 = vmatpush1.msra.mxu0 0.0
      %4700 = vmatprep.subr.mxu0 0.0
      %4701 = vmatpush1.msra.mxu0 0.0
      %4702 = vmatprep.subr.mxu0 0.0
      %4703 = vmatpush1.msra.mxu0 0.0
      %4704 = vmatprep.subr.mxu0 0.0
      %4705 = vmatpush1.msra.mxu0 0.0
      %4706 = vmatprep.subr.mxu0 0.0
      %4707 = vmatpush1.msra.mxu0 0.0
      %4708 = vmatprep.subr.mxu0 0.0
      %4709 = vmatpush1.msra.mxu0 0.0
      %4710 = vmatprep.subr.mxu0 0.0
      %4711 = vmatpush1.msra.mxu0 0.0
      %4712 = vmatprep.mubr.f32.mxu0 0.0
      %4713 = vmatmul.mubr.f32.gmra.mrb[0].mxu0 %v4646
      %v4714 = vpop.f32.mrb[0].mxu0
      %v4715 = vadd.f32 0.0, %v4714
      %v4716 = vpop.f32.mrb[0].mxu0
      %4717 = vdwg.mxu0
      %s4718 = scalar_lea.vmem %s628, 384
      %v4719 = vld [vmem:[%s4718] sm:$0xff]
      %v4720 = vld [vmem:[%s4718 + $0x8] sm:$0xff]
      %v4721 = vld [vmem:[%s4718 + $0x10] sm:$0xff]
      %v4722 = vld [vmem:[%s4718 + $0x18] sm:$0xff]
      %v4723 = vld [vmem:[%s4718 + $0x20] sm:$0xff]
      %v4724 = vld [vmem:[%s4718 + $0x28] sm:$0xff]
      %v4725 = vld [vmem:[%s4718 + $0x30] sm:$0xff]
      %v4726 = vld [vmem:[%s4718 + $0x38] sm:$0xff]
      %v4727 = vld [vmem:[%s4718 + $0x40] sm:$0xff]
      %v4728 = vld [vmem:[%s4718 + $0x48] sm:$0xff]
      %v4729 = vld [vmem:[%s4718 + $0x50] sm:$0xff]
      %v4730 = vld [vmem:[%s4718 + $0x58] sm:$0xff]
      %v4731 = vld [vmem:[%s4718 + $0x60] sm:$0xff]
      %v4732 = vld [vmem:[%s4718 + $0x68] sm:$0xff]
      %v4733 = vld [vmem:[%s4718 + $0x70] sm:$0xff]
      %v4734 = vld [vmem:[%s4718 + $0x78] sm:$0xff]
      %4735 = vmatprep.subr.mxu0 0.0
      %4736 = vmatpush1.msra.mxu0 %v4719
      %4737 = vmatprep.subr.mxu0 0.0
      %4738 = vmatpush1.msra.mxu0 %v4720
      %4739 = vmatprep.subr.mxu0 0.0
      %4740 = vmatpush1.msra.mxu0 %v4721
      %4741 = vmatprep.subr.mxu0 0.0
      %4742 = vmatpush1.msra.mxu0 %v4722
      %4743 = vmatprep.subr.mxu0 0.0
      %4744 = vmatpush1.msra.mxu0 %v4723
      %4745 = vmatprep.subr.mxu0 0.0
      %4746 = vmatpush1.msra.mxu0 %v4724
      %4747 = vmatprep.subr.mxu0 0.0
      %4748 = vmatpush1.msra.mxu0 %v4725
      %4749 = vmatprep.subr.mxu0 0.0
      %4750 = vmatpush1.msra.mxu0 %v4726
      %4751 = vmatprep.subr.mxu0 0.0
      %4752 = vmatpush1.msra.mxu0 %v4727
      %4753 = vmatprep.subr.mxu0 0.0
      %4754 = vmatpush1.msra.mxu0 %v4728
      %4755 = vmatprep.subr.mxu0 0.0
      %4756 = vmatpush1.msra.mxu0 %v4729
      %4757 = vmatprep.subr.mxu0 0.0
      %4758 = vmatpush1.msra.mxu0 %v4730
      %4759 = vmatprep.subr.mxu0 0.0
      %4760 = vmatpush1.msra.mxu0 %v4731
      %4761 = vmatprep.subr.mxu0 0.0
      %4762 = vmatpush1.msra.mxu0 %v4732
      %4763 = vmatprep.subr.mxu0 0.0
      %4764 = vmatpush1.msra.mxu0 %v4733
      %4765 = vmatprep.subr.mxu0 0.0
      %4766 = vmatpush1.msra.mxu0 %v4734
      %4767 = vmatprep.subr.mxu0 0.0
      %4768 = vmatpush1.msra.mxu0 0.0
      %4769 = vmatprep.subr.mxu0 0.0
      %4770 = vmatpush1.msra.mxu0 0.0
      %4771 = vmatprep.subr.mxu0 0.0
      %4772 = vmatpush1.msra.mxu0 0.0
      %4773 = vmatprep.subr.mxu0 0.0
      %4774 = vmatpush1.msra.mxu0 0.0
      %4775 = vmatprep.subr.mxu0 0.0
      %4776 = vmatpush1.msra.mxu0 0.0
      %4777 = vmatprep.subr.mxu0 0.0
      %4778 = vmatpush1.msra.mxu0 0.0
      %4779 = vmatprep.subr.mxu0 0.0
      %4780 = vmatpush1.msra.mxu0 0.0
      %4781 = vmatprep.subr.mxu0 0.0
      %4782 = vmatpush1.msra.mxu0 0.0
      %4783 = vmatprep.subr.mxu0 0.0
      %4784 = vmatpush1.msra.mxu0 0.0
      %4785 = vmatprep.subr.mxu0 0.0
      %4786 = vmatpush1.msra.mxu0 0.0
      %4787 = vmatprep.subr.mxu0 0.0
      %4788 = vmatpush1.msra.mxu0 0.0
      %4789 = vmatprep.subr.mxu0 0.0
      %4790 = vmatpush1.msra.mxu0 0.0
      %4791 = vmatprep.subr.mxu0 0.0
      %4792 = vmatpush1.msra.mxu0 0.0
      %4793 = vmatprep.subr.mxu0 0.0
      %4794 = vmatpush1.msra.mxu0 0.0
      %4795 = vmatprep.subr.mxu0 0.0
      %4796 = vmatpush1.msra.mxu0 0.0
      %4797 = vmatprep.subr.mxu0 0.0
      %4798 = vmatpush1.msra.mxu0 0.0
      %4799 = vmatprep.mubr.f32.mxu0 0.0
      %4800 = vmatmul.mubr.f32.gmra.mrb[0].mxu0 %v4715
      %v4801 = vpop.f32.mrb[0].mxu0
      %v4802 = vadd.f32 0.0, %v4801
      %v4803 = vpop.f32.mrb[0].mxu0
      %4804 = vdwg.mxu0
      %v4805 = vadd.f32 %v4642, %v4802
      %v4806 = vld [vmem:[%s631] sm:$0x1]
      %v4808 = vlaneseq
      %v4809 = vshrl.u32 %v4808, 7
      %v4810 = vsub.s32 0, %v4809
      %v4811 = vrot.slane %v4806, %v4810
      %v4813 = vadd.f32 %v4805, %v4811
      %p4814 = scmp.eq.s32.totalorder %s27, 0
      // Predicated region
      $region85: #{vicreg_forward.1} parent=83 // pred_check
        %p4815 = pneg %p4814
      $region86: #{vicreg_forward.1} parent=83 // pred_check_branch
        %4817 = sbr.rel (%p4815) target = $region88
      $region87: #{vicreg_forward.1} parent=83 // pred_region
        %v4818 = vmul.f32 %v4813, 0.5
        %v4819 = vmul.f32 %v4813, 0.70710677
        %v4820 = verf.f32.pop %v4819
        %v4821 = vadd.f32 %v4820, 1.0
        %v4822 = vmul.f32 %v4818, %v4821
        %v4823 = vld [vmem:[%s12] sm:$0xff]
        %v4824 = vld [vmem:[%s12 + $0x8] sm:$0xff]
        %v4825 = vld [vmem:[%s12 + $0x10] sm:$0xff]
        %v4826 = vld [vmem:[%s12 + $0x18] sm:$0xff]
        %v4827 = vld [vmem:[%s12 + $0x20] sm:$0xff]
        %v4828 = vld [vmem:[%s12 + $0x28] sm:$0xff]
        %v4829 = vld [vmem:[%s12 + $0x30] sm:$0xff]
        %v4830 = vld [vmem:[%s12 + $0x38] sm:$0xff]
        %v4831 = vld [vmem:[%s13] sm:$0x1]
        %v4833 = vlaneseq
        %v4834 = vshrl.u32 %v4833, 7
        %v4835 = vsub.s32 0, %v4834
        %v4836 = vrot.slane %v4831, %v4835
        %v4839 = vsel %vm2891, %v4822, 0
        %4841 = vmatprep.subr.mxu0 0.0
        %4842 = vmatpush1.msra.mxu0 %v4823
        %4843 = vmatprep.subr.mxu0 0.0
        %4844 = vmatpush1.msra.mxu0 %v4824
        %4845 = vmatprep.subr.mxu0 0.0
        %4846 = vmatpush1.msra.mxu0 %v4825
        %4847 = vmatprep.subr.mxu0 0.0
        %4848 = vmatpush1.msra.mxu0 %v4826
        %4849 = vmatprep.subr.mxu0 0.0
        %4850 = vmatpush1.msra.mxu0 %v4827
        %4851 = vmatprep.subr.mxu0 0.0
        %4852 = vmatpush1.msra.mxu0 %v4828
        %4853 = vmatprep.subr.mxu0 0.0
        %4854 = vmatpush1.msra.mxu0 %v4829
        %4855 = vmatprep.subr.mxu0 0.0
        %4856 = vmatpush1.msra.mxu0 %v4830
        %4857 = vmatprep.subr.mxu0 0.0
        %4858 = vmatpush1.msra.mxu0 0.0
        %4859 = vmatprep.subr.mxu0 0.0
        %4860 = vmatpush1.msra.mxu0 0.0
        %4861 = vmatprep.subr.mxu0 0.0
        %4862 = vmatpush1.msra.mxu0 0.0
        %4863 = vmatprep.subr.mxu0 0.0
        %4864 = vmatpush1.msra.mxu0 0.0
        %4865 = vmatprep.subr.mxu0 0.0
        %4866 = vmatpush1.msra.mxu0 0.0
        %4867 = vmatprep.subr.mxu0 0.0
        %4868 = vmatpush1.msra.mxu0 0.0
        %4869 = vmatprep.subr.mxu0 0.0
        %4870 = vmatpush1.msra.mxu0 0.0
        %4871 = vmatprep.subr.mxu0 0.0
        %4872 = vmatpush1.msra.mxu0 0.0
        %4873 = vmatprep.subr.mxu0 0.0
        %4874 = vmatpush1.msra.mxu0 0.0
        %4875 = vmatprep.subr.mxu0 0.0
        %4876 = vmatpush1.msra.mxu0 0.0
        %4877 = vmatprep.subr.mxu0 0.0
        %4878 = vmatpush1.msra.mxu0 0.0
        %4879 = vmatprep.subr.mxu0 0.0
        %4880 = vmatpush1.msra.mxu0 0.0
        %4881 = vmatprep.subr.mxu0 0.0
        %4882 = vmatpush1.msra.mxu0 0.0
        %4883 = vmatprep.subr.mxu0 0.0
        %4884 = vmatpush1.msra.mxu0 0.0
        %4885 = vmatprep.subr.mxu0 0.0
        %4886 = vmatpush1.msra.mxu0 0.0
        %4887 = vmatprep.subr.mxu0 0.0
        %4888 = vmatpush1.msra.mxu0 0.0
        %4889 = vmatprep.subr.mxu0 0.0
        %4890 = vmatpush1.msra.mxu0 0.0
        %4891 = vmatprep.subr.mxu0 0.0
        %4892 = vmatpush1.msra.mxu0 0.0
        %4893 = vmatprep.subr.mxu0 0.0
        %4894 = vmatpush1.msra.mxu0 0.0
        %4895 = vmatprep.subr.mxu0 0.0
        %4896 = vmatpush1.msra.mxu0 0.0
        %4897 = vmatprep.subr.mxu0 0.0
        %4898 = vmatpush1.msra.mxu0 0.0
        %4899 = vmatprep.subr.mxu0 0.0
        %4900 = vmatpush1.msra.mxu0 0.0
        %4901 = vmatprep.subr.mxu0 0.0
        %4902 = vmatpush1.msra.mxu0 0.0
        %4903 = vmatprep.subr.mxu0 0.0
        %4904 = vmatpush1.msra.mxu0 0.0
        %4905 = vmatprep.mubr.f32.mxu0 0.0
        %4906 = vmatmul.mubr.f32.gmra.mrb[0].mxu0 %v4839
        %v4907 = vpop.f32.mrb[0].mxu0
        %v4908 = vadd.f32 %v4836, %v4907
        %v4909 = vpop.f32.mrb[0].mxu0
        %4910 = vdwg.mxu0
        %v4911 = vmul.f32 %v4908, 0.5
        %v4912 = vmul.f32 %v4908, 0.70710677
        %v4913 = verf.f32.pop %v4912
        %v4914 = vadd.f32 %v4913, 1.0
        %v4915 = vmul.f32 %v4911, %v4914
        %v4916 = vld [vmem:[%s14] sm:$0xff]
        %v4917 = vld [vmem:[%s14 + $0x8] sm:$0xff]
        %v4918 = vld [vmem:[%s14 + $0x10] sm:$0xff]
        %v4919 = vld [vmem:[%s14 + $0x18] sm:$0xff]
        %v4920 = vld [vmem:[%s14 + $0x20] sm:$0xff]
        %v4921 = vld [vmem:[%s14 + $0x28] sm:$0xff]
        %v4922 = vld [vmem:[%s14 + $0x30] sm:$0xff]
        %v4923 = vld [vmem:[%s14 + $0x38] sm:$0xff]
        %v4924 = vld [vmem:[%s15] sm:$0x1]
        %v4926 = vlaneseq
        %v4927 = vshrl.u32 %v4926, 7
        %v4928 = vsub.s32 0, %v4927
        %v4929 = vrot.slane %v4924, %v4928
        %v4932 = vsel %vm2891, %v4915, 0
        %4934 = vmatprep.subr.mxu0 0.0
        %4935 = vmatpush1.msra.mxu0 %v4916
        %4936 = vmatprep.subr.mxu0 0.0
        %4937 = vmatpush1.msra.mxu0 %v4917
        %4938 = vmatprep.subr.mxu0 0.0
        %4939 = vmatpush1.msra.mxu0 %v4918
        %4940 = vmatprep.subr.mxu0 0.0
        %4941 = vmatpush1.msra.mxu0 %v4919
        %4942 = vmatprep.subr.mxu0 0.0
        %4943 = vmatpush1.msra.mxu0 %v4920
        %4944 = vmatprep.subr.mxu0 0.0
        %4945 = vmatpush1.msra.mxu0 %v4921
        %4946 = vmatprep.subr.mxu0 0.0
        %4947 = vmatpush1.msra.mxu0 %v4922
        %4948 = vmatprep.subr.mxu0 0.0
        %4949 = vmatpush1.msra.mxu0 %v4923
        %4950 = vmatprep.subr.mxu0 0.0
        %4951 = vmatpush1.msra.mxu0 0.0
        %4952 = vmatprep.subr.mxu0 0.0
        %4953 = vmatpush1.msra.mxu0 0.0
        %4954 = vmatprep.subr.mxu0 0.0
        %4955 = vmatpush1.msra.mxu0 0.0
        %4956 = vmatprep.subr.mxu0 0.0
        %4957 = vmatpush1.msra.mxu0 0.0
        %4958 = vmatprep.subr.mxu0 0.0
        %4959 = vmatpush1.msra.mxu0 0.0
        %4960 = vmatprep.subr.mxu0 0.0
        %4961 = vmatpush1.msra.mxu0 0.0
        %4962 = vmatprep.subr.mxu0 0.0
        %4963 = vmatpush1.msra.mxu0 0.0
        %4964 = vmatprep.subr.mxu0 0.0
        %4965 = vmatpush1.msra.mxu0 0.0
        %4966 = vmatprep.subr.mxu0 0.0
        %4967 = vmatpush1.msra.mxu0 0.0
        %4968 = vmatprep.subr.mxu0 0.0
        %4969 = vmatpush1.msra.mxu0 0.0
        %4970 = vmatprep.subr.mxu0 0.0
        %4971 = vmatpush1.msra.mxu0 0.0
        %4972 = vmatprep.subr.mxu0 0.0
        %4973 = vmatpush1.msra.mxu0 0.0
        %4974 = vmatprep.subr.mxu0 0.0
        %4975 = vmatpush1.msra.mxu0 0.0
        %4976 = vmatprep.subr.mxu0 0.0
        %4977 = vmatpush1.msra.mxu0 0.0
        %4978 = vmatprep.subr.mxu0 0.0
        %4979 = vmatpush1.msra.mxu0 0.0
        %4980 = vmatprep.subr.mxu0 0.0
        %4981 = vmatpush1.msra.mxu0 0.0
        %4982 = vmatprep.subr.mxu0 0.0
        %4983 = vmatpush1.msra.mxu0 0.0
        %4984 = vmatprep.subr.mxu0 0.0
        %4985 = vmatpush1.msra.mxu0 0.0
        %4986 = vmatprep.subr.mxu0 0.0
        %4987 = vmatpush1.msra.mxu0 0.0
        %4988 = vmatprep.subr.mxu0 0.0
        %4989 = vmatpush1.msra.mxu0 0.0
        %4990 = vmatprep.subr.mxu0 0.0
        %4991 = vmatpush1.msra.mxu0 0.0
        %4992 = vmatprep.subr.mxu0 0.0
        %4993 = vmatpush1.msra.mxu0 0.0
        %4994 = vmatprep.subr.mxu0 0.0
        %4995 = vmatpush1.msra.mxu0 0.0
        %4996 = vmatprep.subr.mxu0 0.0
        %4997 = vmatpush1.msra.mxu0 0.0
        %4998 = vmatprep.mubr.f32.mxu0 0.0
        %4999 = vmatmul.mubr.f32.gmra.mrb[0].mxu0 %v4932
        %v5000 = vpop.f32.mrb[0].mxu0
        %v5001 = vadd.f32 %v4929, %v5000
        %v5002 = vpop.f32.mrb[0].mxu0
        %5003 = vdwg.mxu0
        %vm5004 = vcmask 517120
        %5005 = vst.msk [vmem:[%s635] sm:$0x3] %vm5004, %v5001
      $region88: #{vicreg_forward.1} parent=83 // pred_fallthru
        _
      %p5006 = scmp.ne.s32.totalorder %s27, 0
      // Predicated region
      $region89: #{vicreg_forward.1} parent=83 // pred_check
        %p5007 = pneg %p5006
      $region90: #{vicreg_forward.1} parent=83 // pred_check_branch
        %5009 = sbr.rel (%p5007) target = $region92
      $region91: #{vicreg_forward.1} parent=83 // pred_region
        %vm5010 = vcmask 517120
        %5011 = vst.msk [vmem:[%s635] sm:$0x3] %vm5010, %v4813
      $region92: #{vicreg_forward.1} parent=83 // pred_fallthru
        _
      %p5012 = scmp.lt.s32.totalorder %s27, 1
      %s5013 = scalar_select %p5012, %s27, 1
      %s5014 = smul.addr %s5013, 2
      %s5015 = scalar_lea.vmem %s16, %s5014
      // Predicated region
      $region93: #{vicreg_forward.1} parent=83 // pred_check
        %p5016 = pneg %p421
      $region94: #{vicreg_forward.1} parent=83 // pred_check_branch
        %5018 = sbr.rel (%p5016) target = $region96
      $region95: #{vicreg_forward.1} parent=83 // pred_region
        _
      $region96: #{vicreg_forward.1} parent=83 // pred_fallthru
        _
    $region84: #{vicreg_forward.1} parent=5 // pred_fallthru
      _
    %p5019 = scmp.le.s32.totalorder 2, %s22
    // Predicated region
    $region97: #{vicreg_forward.1} parent=5 // pred_check
      %p5020 = pneg %p5019
    $region98: #{vicreg_forward.1} parent=5 // pred_check_branch
      %5022 = sbr.rel (%p5020) target = $region100
    $region99: #{vicreg_forward.1} parent=5 // pred_region
      %s5023 = ssub.s32 %s22, 2
      // Predicated region
      $region101: #{vicreg_forward.1} parent=99 // pred_check
        %p5024 = pneg %p427
      $region102: #{vicreg_forward.1} parent=99 // pred_check_branch
        %5026 = sbr.rel (%p5024) target = $region104
      $region103: #{vicreg_forward.1} parent=99 // pred_region
        %p5027 = scmp.lt.s32.totalorder %s28, 1
        %s5028 = scalar_select %p5027, %s28, 1
        %s5029 = smul.addr %s5028, 2
        %s5030 = scalar_lea.vmem %s16, %s5029
      $region104: #{vicreg_forward.1} parent=99 // pred_fallthru
        _
    $region100: #{vicreg_forward.1} parent=5 // pred_fallthru
      _
  $region6: #{vicreg_forward.1} parent=0 // loop_footer
    %s26 = sadd.s32 1, %s22
  $region7: #{vicreg_forward.1} parent=0 // loop_footer_branch
    %21 = sbr.rel target = $region3
  $region8: #{vicreg_forward.1} parent=0 // loop_exit
    _

</llo_original>
